<compile_context>
chip_gen: v6e
topology: v6e:2x2x1
jax: 0.10.0
libtpu: 0.0.40
codegen_flags: <defaults>
</compile_context>

<pallas_src>
import functools
import math

import jax
import jax.numpy as jnp
from jax.experimental import pallas as pl
from jax.experimental.pallas import tpu as pltpu

# ---------------- config (small, consistent with the module) ----------------
MAX_TOKEN_LEN = 4          # args.max_token_len
EMBED_DIM = 32             # args.embedding_dim
HEADS = 4                  # args.heads  -> d_k = 8
VOCAB = 128                # synthetic tokenizer vocab
ALPHA = 0.1                # args.alpha
BATCH = 2                  # args.batch_size

# synthetic tokenizer ids (tokenizer.convert_tokens_to_ids stand-ins)
CLS_ID, SEP_ID, MASK_ID, AND_ID = 1, 2, 3, 4
LABEL_IDS = (5, 6, 7)      # args.nargs label tokens


# ----------------------------- Pallas kernels --------------------------------
def fused_dual_mha_kernel(cand_ref, ctx_ref, mask_ref, gm_ref,
                          wq_ref, bq_ref, wkv_ref, bkv_ref, o_ref,
                          *, heads, d_k, d_model):
    """Fused attn1 + attn2 for ONE batch row, all 5 candidates at once.

    cand_ref: (1, 5*4*mtl, D)   candidate (query) embeddings, candidates concatenated
    ctx_ref : (1, Lk, D)        shared context (key/value) embeddings (one copy per batch)
    mask_ref: (1, 1, Lk)        shared key mask (0/1 floats)
    gm_ref  : (G, 5*4*mtl)      token-group averaging matrix (fuses the token-mean)
    wq_ref  : (D, 2D)  [Wq1 | Wq2]          bq_ref : (1, 2D)
    wkv_ref : (D, 4D)  [Wk1 | Wv1 | Wk2 | Wv2]   bkv_ref: (1, 4D)
    o_ref   : (1, G, 2D)        [token-group mean of attn1 | of attn2]
    """
    cand = cand_ref[0]                 # (Lq, D)   Lq = 5*4*mtl
    ctx = ctx_ref[0]                   # (Lk, D)
    m = mask_ref[0]                    # (1, Lk)
    gm = gm_ref[...]                   # (G, Lq)
    is_masked = (m == 0.0)             # hoisted out of the per-head loop
    scale = 1.0 / math.sqrt(d_k)

    # Q for both attention modules and all 5 candidates in ONE lane-dense matmul.
    q_all = jnp.dot(cand, wq_ref[...], preferred_element_type=jnp.float32) + bq_ref[...]
    # K/V for both attention modules in ONE lane-dense matmul, shared by all candidates.
    kv_all = jnp.dot(ctx, wkv_ref[...], preferred_element_type=jnp.float32) + bkv_ref[...]

    module_outs = []
    for mod in range(2):               # attn1, attn2 (static unroll)
        q = q_all[:, mod * d_model:(mod + 1) * d_model]                      # (Lq, D)
        k = kv_all[:, (2 * mod) * d_model:(2 * mod + 1) * d_model]           # (Lk, D)
        v = kv_all[:, (2 * mod + 1) * d_model:(2 * mod + 2) * d_model]       # (Lk, D)

        head_outs = []
        for h in range(heads):         # static unroll, heads is small
            sl = slice(h * d_k, (h + 1) * d_k)
            s = jnp.dot(q[:, sl], k[:, sl].T,
                        preferred_element_type=jnp.float32) * scale          # (Lq, Lk)
            s = jnp.where(is_masked, -1e9, s)                                # masked_fill
            s = s - jnp.max(s, axis=-1, keepdims=True)
            p = jnp.exp(s)
            p = p / jnp.sum(p, axis=-1, keepdims=True)                       # softmax
            head_outs.append(jnp.dot(p, v[:, sl], preferred_element_type=jnp.float32))
        info = jnp.concatenate(head_outs, axis=-1)                           # (Lq, D)
        # fused token-mean: (G, Lq) @ (Lq, D) -> (G, D)  (4x less output writeback)
        module_outs.append(jnp.dot(gm, info, preferred_element_type=jnp.float32))

    o_ref[0] = jnp.concatenate(module_outs, axis=-1).astype(o_ref.dtype)     # (G, 2D)


def fused_dual_mha(cand, ctx, mask, gmean, wq, bq, wkv, bkv, *, heads):
    """cand: (B, 5*4*mtl, D); ctx: (B, Lk, D); mask: (B, 1, Lk); gmean: (G, 5*4*mtl)."""
    B, Lq, D = cand.shape
    Lk = ctx.shape[1]
    G = gmean.shape[0]
    d_k = D // heads
    kern = functools.partial(fused_dual_mha_kernel, heads=heads, d_k=d_k, d_model=D)
    return pl.pallas_call(
        kern,
        out_shape=jax.ShapeDtypeStruct((B, G, 2 * D), jnp.float32),
        grid=(B,),
        in_specs=[
            pl.BlockSpec((1, Lq, D), lambda b: (b, 0, 0)),
            pl.BlockSpec((1, Lk, D), lambda b: (b, 0, 0)),
            pl.BlockSpec((1, 1, Lk), lambda b: (b, 0, 0)),
            pl.BlockSpec((G, Lq), lambda b: (0, 0)),
            pl.BlockSpec((D, 2 * D), lambda b: (0, 0)),
            pl.BlockSpec((1, 2 * D), lambda b: (0, 0)),
            pl.BlockSpec((D, 4 * D), lambda b: (0, 0)),
            pl.BlockSpec((1, 4 * D), lambda b: (0, 0)),
        ],
        out_specs=pl.BlockSpec((1, G, 2 * D), lambda b: (b, 0, 0)),
        compiler_params=pltpu.CompilerParams(dimension_semantics=("parallel",)),
    )(cand, ctx, mask, gmean, wq, bq, wkv, bkv)


def mlm_kl_kernel(x_ref, w_ref, b_ref, yes_ref, o_ref):
    """Fused [MASK]-position MLM projection + log_softmax + KLDiv(log_target=True) + sum.

    x_ref: (B5, D) mask-position embeddings; w_ref: (D, V); b_ref/yes_ref: (1, V).
    Output: (B5, 1) = -sum_v KL(log_softmax(x@W+b), log_softmax(yes)).
    """
    logits = jnp.dot(x_ref[...], w_ref[...],
                     preferred_element_type=jnp.float32) + b_ref[...]          # (B5, V)
    ml = logits - jnp.max(logits, axis=-1, keepdims=True)
    ml_lp = ml - jnp.log(jnp.sum(jnp.exp(ml), axis=-1, keepdims=True))
    ye = yes_ref[...]
    ye = ye - jnp.max(ye, axis=-1, keepdims=True)
    ye_lp = ye - jnp.log(jnp.sum(jnp.exp(ye), axis=-1, keepdims=True))         # (1, V)
    kl = jnp.exp(ye_lp) * (ye_lp - ml_lp)          # KLDivLoss(log_target=True), broadcast
    o_ref[...] = -jnp.sum(kl, axis=-1, keepdims=True)


def mlm_kl_score(x, w, b, yes_row):
    M, K = x.shape
    V = w.shape[1]
    return pl.pallas_call(
        mlm_kl_kernel,
        out_shape=jax.ShapeDtypeStruct((M, 1), jnp.float32),
        grid=(1,),
        in_specs=[pl.BlockSpec((M, K), lambda i: (0, 0)),
                  pl.BlockSpec((K, V), lambda i: (0, 0)),
                  pl.BlockSpec((1, V), lambda i: (0, 0)),
                  pl.BlockSpec((1, V), lambda i: (0, 0))],
        out_specs=pl.BlockSpec((M, 1), lambda i: (0, 0)),
    )(x, w, b.reshape(1, V), yes_row)


# --------------------------- parameter construction --------------------------
def init_params(key):
    D, V = EMBED_DIM, VOCAB
    ks = jax.random.split(key, 20)
    s = 0.02

    def lin(k):
        kw, kb = jax.random.split(k)
        # Linear stored as (in, out) so kernels compute x @ W + b.
        return (jax.random.normal(kw, (D, D), jnp.float32) * s,
                jax.random.normal(kb, (D,), jnp.float32) * s)

    def mha(k1, k2, k3):
        wq, bq = lin(k1)
        wk, bk = lin(k2)
        wv, bv = lin(k3)
        return (wq, wk, wv), (bq.reshape(1, D), bk.reshape(1, D), bv.reshape(1, D))

    word_emb = jax.random.normal(ks[0], (V, D), jnp.float32) * s
    (wq1, wk1, wv1), (bq1, bk1, bv1) = mha(ks[1], ks[2], ks[3])
    (wq2, wk2, wv2), (bq2, bk2, bv2) = mha(ks[4], ks[5], ks[6])
    # Concatenated projection weights so BOTH attention modules' Q (and K/V) are
    # computed with a single lane-dense matmul each inside the kernel.
    wq_cat = jnp.concatenate([wq1, wq2], axis=1)                    # (D, 2D)
    bq_cat = jnp.concatenate([bq1, bq2], axis=1)                    # (1, 2D)
    wkv_cat = jnp.concatenate([wk1, wv1, wk2, wv2], axis=1)         # (D, 4D)
    bkv_cat = jnp.concatenate([bk1, bv1, bk2, bv2], axis=1)         # (1, 4D)

    mean_w, mean_b = lin(ks[7])
    logvar_w, logvar_b = lin(ks[8])
    mlm_w = word_emb.T                                              # tied-embedding decoder (D, V)
    mlm_b = jax.random.normal(ks[9], (V,), jnp.float32) * s
    return dict(word_emb=word_emb,
                wq_cat=wq_cat, bq_cat=bq_cat,
                wkv_cat=wkv_cat, bkv_cat=bkv_cat,
                mean_w=mean_w, mean_b=mean_b,
                logvar_w=logvar_w, logvar_b=logvar_b,
                mlm_w=mlm_w, mlm_b=mlm_b)


# -------------------------------- forward ------------------------------------
def model_forward(params, inputs, token_masks, noise_key):
    """inputs / token_masks: (B, 52*max_token_len).  Returns (B, 5) scores."""
    B = inputs.shape[0]
    mtl = MAX_TOKEN_LEN
    D = EMBED_DIM

    # svop = False branch
    inputs = inputs.reshape(B, 13, 4 * mtl)
    token_masks = token_masks.reshape(B, 13, 4 * mtl)

    ev1 = 4 * mtl + 1
    ctx_len = 8 * ev1                                       # 136

    and_ids = jnp.full((B * 8, 1), AND_ID, jnp.int32)
    and_msk = jnp.ones((B * 8, 1), jnp.float32)
    contexts_inputs_ = jnp.concatenate(
        [inputs[:, :8, :].reshape(B * 8, 4 * mtl), and_ids], axis=1).reshape(B, ctx_len)
    contexts_masks_ = jnp.concatenate(
        [token_masks[:, :8, :].reshape(B * 8, 4 * mtl), and_msk], axis=1).reshape(B, ctx_len)

    candidate_inputs = inputs[:, 8:, :].reshape(B * 5, 4 * mtl)
    candidate_masks = token_masks[:, 8:, :]                  # only feeds the (omitted) encoder mask
    del candidate_masks

    Wemb = params['word_emb']
    # Context embeddings / masks gathered ONCE per batch row (no 5x candidate broadcast);
    # the MHA kernel's BlockSpec reuses them for all 5 candidates of that batch.
    context_embs = Wemb[contexts_inputs_]                    # (B, ctx_len, D)
    candidate_embs = Wemb[candidate_inputs]                  # (B*5, 4*mtl, D)
    cand_q = candidate_embs.reshape(B, 5 * 4 * mtl, D)       # (B, 80, D)
    ctx_mask = contexts_masks_.reshape(B, 1, ctx_len).astype(jnp.float32)

    # Token-group averaging matrix (mean over mtl consecutive tokens), fused into the kernel.
    gmean = jnp.kron(jnp.eye(5 * 4, dtype=jnp.float32),
                     jnp.full((1, mtl), 1.0 / mtl, jnp.float32))    # (20, 80)

    fused = fused_dual_mha(cand_q, context_embs, ctx_mask, gmean,
                           params['wq_cat'], params['bq_cat'],
                           params['wkv_cat'], params['bkv_cat'],
                           heads=HEADS)                      # (B, 20, 2D)

    mean = fused[:, :, :D].reshape(B * 5, 4, D)
    logvar_ = fused[:, :, D:].reshape(B * 5, 4, D)
    logvar = jnp.exp(logvar_ * 0.5)
    k1, k2 = jax.random.split(noise_key)
    prompt_embs = mean + logvar * jax.random.normal(k1, mean.shape, jnp.float32)
    # TODO(synk): prompt_embs + context/candidate embeddings feed the pretrained
    # BertForMaskedLM encoder in the reference; that encoder cannot be reproduced
    # in-script and is replaced by a tied-embedding per-token MLM head below.
    del prompt_embs

    # With a per-token MLM head, logits[:, -(1 + 4*mtl + 1), :] (the [MASK] slot of the
    # concatenated sequence) depends only on the [MASK] embedding, so only that position
    # is projected (~159x less MLM-head work than projecting every token).
    mask_pos_embs = jnp.broadcast_to(Wemb[MASK_ID][None, :], (B * 5, D))
    # self.dropout -> identity (eval mode)

    label_token_embs = Wemb[jnp.array(LABEL_IDS, jnp.int32)]                 # (n_labels, D)
    mean_h = jax.nn.relu(label_token_embs @ params['mean_w'] + params['mean_b'])
    logvar_h = jax.nn.relu(label_token_embs @ params['logvar_w'] + params['logvar_b'])
    # TODO(synk): self.model.cls (BERT MLM transform head) replaced by tied-embedding decoder.
    label_means = mean_h @ params['mlm_w'] + params['mlm_b']                 # (n_labels, V)
    label_logvars = jnp.exp((logvar_h @ params['mlm_w'] + params['mlm_b']) * 0.5)
    weight = jnp.exp(-ALPHA * label_logvars)
    new_label_means = jnp.sum(label_means * weight, axis=0)                  # (V,)
    new_label_logvars = jnp.sum(label_logvars * weight, axis=0)              # (V,)
    target_token_emb = new_label_means + new_label_logvars * jax.random.normal(
        k2, new_label_means.shape, jnp.float32)

    # Fused: [MASK]-position projection + log_softmax + KLDiv(log_target=True) + vocab sum.
    final = mlm_kl_score(mask_pos_embs, params['mlm_w'], params['mlm_b'],
                         target_token_emb.reshape(1, VOCAB))                 # (B5, 1)
    return final.reshape(B, 5)


# ----------------------------------- main -------------------------------------
if __name__ == "__main__":
    key = jax.random.PRNGKey(0)
    k_in, k_mask, k_param, k_noise = jax.random.split(key, 4)

    B = BATCH
    L = 52 * MAX_TOKEN_LEN
    inputs = jax.random.randint(k_in, (B, L), 0, VOCAB, dtype=jnp.int32)
    token_masks = (jax.random.uniform(k_mask, (B, L)) > 0.15).astype(jnp.float32)

    params = init_params(k_param)
    out = model_forward(params, inputs, token_masks, k_noise)
    out = jax.block_until_ready(out)
    assert out.shape == (B, 5) and out.dtype == jnp.float32
    assert bool(jnp.all(jnp.isfinite(out)))
    print("KERNEL_OK")
</pallas_src>

<mosaic_0001>
module attributes {stable_mosaic.version = 11 : i64} {
  func.func @fused_dual_mha_kernel(%arg0: i32, %arg1: memref<1x80x32xf32, #tpu.memory_space<vmem>>, %arg2: memref<1x136x32xf32, #tpu.memory_space<vmem>>, %arg3: memref<1x1x136xf32, #tpu.memory_space<vmem>>, %arg4: memref<20x80xf32, #tpu.memory_space<vmem>>, %arg5: memref<32x64xf32, #tpu.memory_space<vmem>>, %arg6: memref<1x64xf32, #tpu.memory_space<vmem>>, %arg7: memref<32x128xf32, #tpu.memory_space<vmem>>, %arg8: memref<1x128xf32, #tpu.memory_space<vmem>>, %arg9: memref<1x20x64xf32, #tpu.memory_space<vmem>>) attributes {dimension_semantics = [#tpu.dimension_semantics<parallel>], iteration_bounds = array<i64: 2>, scalar_prefetch = 0 : i64, scratch_operands = 0 : i64, tpu.core_type = #tpu.core_type<tc>, window_params = [{transform_indices = @transform_0, window_bounds = array<i64: 1, 80, 32>}, {transform_indices = @transform_1, window_bounds = array<i64: 1, 136, 32>}, {transform_indices = @transform_2, window_bounds = array<i64: 1, 1, 136>}, {pipeline_mode = #tpu.pipeline_mode<synchronous>, transform_indices = @transform_3, window_bounds = array<i64: 20, 80>}, {pipeline_mode = #tpu.pipeline_mode<synchronous>, transform_indices = @transform_4, window_bounds = array<i64: 32, 64>}, {pipeline_mode = #tpu.pipeline_mode<synchronous>, transform_indices = @transform_5, window_bounds = array<i64: 1, 64>}, {pipeline_mode = #tpu.pipeline_mode<synchronous>, transform_indices = @transform_6, window_bounds = array<i64: 32, 128>}, {pipeline_mode = #tpu.pipeline_mode<synchronous>, transform_indices = @transform_7, window_bounds = array<i64: 1, 128>}, {transform_indices = @transform_8, window_bounds = array<i64: 1, 20, 64>}]} {
    %c0 = arith.constant 0 : index
    %c0_0 = arith.constant 0 : index
    %c0_1 = arith.constant 0 : index
    %0 = vector.load %arg1[%c0, %c0_0, %c0_1] : memref<1x80x32xf32, #tpu.memory_space<vmem>>, vector<1x80x32xf32>
    %1 = vector.shape_cast %0 : vector<1x80x32xf32> to vector<80x32xf32>
    %c0_2 = arith.constant 0 : index
    %c0_3 = arith.constant 0 : index
    %c0_4 = arith.constant 0 : index
    %2 = vector.load %arg2[%c0_2, %c0_3, %c0_4] : memref<1x136x32xf32, #tpu.memory_space<vmem>>, vector<1x136x32xf32>
    %3 = vector.shape_cast %2 : vector<1x136x32xf32> to vector<136x32xf32>
    %c0_5 = arith.constant 0 : index
    %c0_6 = arith.constant 0 : index
    %c0_7 = arith.constant 0 : index
    %4 = vector.load %arg3[%c0_5, %c0_6, %c0_7] : memref<1x1x136xf32, #tpu.memory_space<vmem>>, vector<1x1x136xf32>
    %5 = vector.shape_cast %4 : vector<1x1x136xf32> to vector<1x136xf32>
    %c0_8 = arith.constant 0 : index
    %c0_9 = arith.constant 0 : index
    %6 = vector.load %arg4[%c0_8, %c0_9] : memref<20x80xf32, #tpu.memory_space<vmem>>, vector<20x80xf32>
    %cst = arith.constant 0.000000e+00 : f32
    %7 = vector.broadcast %cst : f32 to vector<1x136xf32>
    %8 = arith.cmpf oeq, %5, %7 : vector<1x136xf32>
    %c0_10 = arith.constant 0 : index
    %c0_11 = arith.constant 0 : index
    %9 = vector.load %arg5[%c0_10, %c0_11] : memref<32x64xf32, #tpu.memory_space<vmem>>, vector<32x64xf32>
    %cst_12 = arith.constant dense<0.000000e+00> : vector<80x64xf32>
    %10 = tpu.matmul %1, %9, %cst_12 {dimension_numbers = #tpu.dot_dimension_numbers<[1], [0], [0], [1], [0, 0, 1, 1], [], []>} : vector<80x32xf32>, vector<32x64xf32>, vector<80x64xf32> -> vector<80x64xf32>
    %c0_13 = arith.constant 0 : index
    %c0_14 = arith.constant 0 : index
    %11 = vector.load %arg6[%c0_13, %c0_14] : memref<1x64xf32, #tpu.memory_space<vmem>>, vector<1x64xf32>
    %12 = vector.broadcast %11 : vector<1x64xf32> to vector<80x64xf32>
    %13 = arith.addf %10, %12 : vector<80x64xf32>
    %c0_15 = arith.constant 0 : index
    %c0_16 = arith.constant 0 : index
    %14 = vector.load %arg7[%c0_15, %c0_16] : memref<32x128xf32, #tpu.memory_space<vmem>>, vector<32x128xf32>
    %cst_17 = arith.constant dense<0.000000e+00> : vector<136x128xf32>
    %15 = tpu.matmul %3, %14, %cst_17 {dimension_numbers = #tpu.dot_dimension_numbers<[1], [0], [0], [1], [0, 0, 1, 1], [], []>} : vector<136x32xf32>, vector<32x128xf32>, vector<136x128xf32> -> vector<136x128xf32>
    %c0_18 = arith.constant 0 : index
    %c0_19 = arith.constant 0 : index
    %16 = vector.load %arg8[%c0_18, %c0_19] : memref<1x128xf32, #tpu.memory_space<vmem>>, vector<1x128xf32>
    %17 = vector.broadcast %16 : vector<1x128xf32> to vector<136x128xf32>
    %18 = arith.addf %15, %17 : vector<136x128xf32>
    %19 = vector.extract_strided_slice %13 {offsets = [0, 0], sizes = [80, 32], strides = [1, 1]} : vector<80x64xf32> to vector<80x32xf32>
    %20 = vector.extract_strided_slice %18 {offsets = [0, 0], sizes = [136, 32], strides = [1, 1]} : vector<136x128xf32> to vector<136x32xf32>
    %21 = vector.extract_strided_slice %18 {offsets = [0, 32], sizes = [136, 32], strides = [1, 1]} : vector<136x128xf32> to vector<136x32xf32>
    %22 = vector.extract_strided_slice %19 {offsets = [0, 0], sizes = [80, 8], strides = [1, 1]} : vector<80x32xf32> to vector<80x8xf32>
    %23 = vector.extract_strided_slice %20 {offsets = [0, 0], sizes = [136, 8], strides = [1, 1]} : vector<136x32xf32> to vector<136x8xf32>
    %24 = tpu.transpose %23, [1, 0] : vector<136x8xf32> -> vector<8x136xf32>
    %cst_20 = arith.constant dense<0.000000e+00> : vector<80x136xf32>
    %25 = tpu.matmul %22, %24, %cst_20 {dimension_numbers = #tpu.dot_dimension_numbers<[1], [0], [0], [1], [0, 0, 1, 1], [], []>} : vector<80x8xf32>, vector<8x136xf32>, vector<80x136xf32> -> vector<80x136xf32>
    %cst_21 = arith.constant 0.353553385 : f32
    %26 = vector.broadcast %cst_21 : f32 to vector<80x136xf32>
    %27 = arith.mulf %25, %26 : vector<80x136xf32>
    %cst_22 = arith.constant -1.000000e+09 : f32
    %28 = vector.shape_cast %8 : vector<1x136xi1> to vector<1x136xi1>
    %29 = vector.broadcast %28 : vector<1x136xi1> to vector<80x136xi1>
    %30 = vector.broadcast %cst_22 : f32 to vector<80x136xf32>
    %31 = arith.select %29, %30, %27 : vector<80x136xi1>, vector<80x136xf32>
    %cst_23 = arith.constant dense<0xFF800000> : vector<80xf32>
    %32 = vector.multi_reduction <maximumf>, %31, %cst_23 [1] : vector<80x136xf32> to vector<80xf32>
    %33 = vector.shape_cast %32 : vector<80xf32> to vector<80x1xf32>
    %34 = vector.broadcast %33 : vector<80x1xf32> to vector<80x136xf32>
    %35 = arith.subf %31, %34 : vector<80x136xf32>
    %36 = math.exp %35 : vector<80x136xf32>
    %cst_24 = arith.constant dense<0.000000e+00> : vector<80xf32>
    %37 = vector.multi_reduction <add>, %36, %cst_24 [1] : vector<80x136xf32> to vector<80xf32>
    %38 = vector.shape_cast %37 : vector<80xf32> to vector<80x1xf32>
    %39 = vector.broadcast %38 : vector<80x1xf32> to vector<80x136xf32>
    %40 = arith.divf %36, %39 : vector<80x136xf32>
    %41 = vector.extract_strided_slice %21 {offsets = [0, 0], sizes = [136, 8], strides = [1, 1]} : vector<136x32xf32> to vector<136x8xf32>
    %cst_25 = arith.constant dense<0.000000e+00> : vector<80x8xf32>
    %42 = tpu.matmul %40, %41, %cst_25 {dimension_numbers = #tpu.dot_dimension_numbers<[1], [0], [0], [1], [0, 0, 1, 1], [], []>} : vector<80x136xf32>, vector<136x8xf32>, vector<80x8xf32> -> vector<80x8xf32>
    %43 = vector.extract_strided_slice %19 {offsets = [0, 8], sizes = [80, 8], strides = [1, 1]} : vector<80x32xf32> to vector<80x8xf32>
    %44 = vector.extract_strided_slice %20 {offsets = [0, 8], sizes = [136, 8], strides = [1, 1]} : vector<136x32xf32> to vector<136x8xf32>
    %45 = tpu.transpose %44, [1, 0] : vector<136x8xf32> -> vector<8x136xf32>
    %cst_26 = arith.constant dense<0.000000e+00> : vector<80x136xf32>
    %46 = tpu.matmul %43, %45, %cst_26 {dimension_numbers = #tpu.dot_dimension_numbers<[1], [0], [0], [1], [0, 0, 1, 1], [], []>} : vector<80x8xf32>, vector<8x136xf32>, vector<80x136xf32> -> vector<80x136xf32>
    %cst_27 = arith.constant 0.353553385 : f32
    %47 = vector.broadcast %cst_27 : f32 to vector<80x136xf32>
    %48 = arith.mulf %46, %47 : vector<80x136xf32>
    %cst_28 = arith.constant -1.000000e+09 : f32
    %49 = vector.shape_cast %8 : vector<1x136xi1> to vector<1x136xi1>
    %50 = vector.broadcast %49 : vector<1x136xi1> to vector<80x136xi1>
    %51 = vector.broadcast %cst_28 : f32 to vector<80x136xf32>
    %52 = arith.select %50, %51, %48 : vector<80x136xi1>, vector<80x136xf32>
    %cst_29 = arith.constant dense<0xFF800000> : vector<80xf32>
    %53 = vector.multi_reduction <maximumf>, %52, %cst_29 [1] : vector<80x136xf32> to vector<80xf32>
    %54 = vector.shape_cast %53 : vector<80xf32> to vector<80x1xf32>
    %55 = vector.broadcast %54 : vector<80x1xf32> to vector<80x136xf32>
    %56 = arith.subf %52, %55 : vector<80x136xf32>
    %57 = math.exp %56 : vector<80x136xf32>
    %cst_30 = arith.constant dense<0.000000e+00> : vector<80xf32>
    %58 = vector.multi_reduction <add>, %57, %cst_30 [1] : vector<80x136xf32> to vector<80xf32>
    %59 = vector.shape_cast %58 : vector<80xf32> to vector<80x1xf32>
    %60 = vector.broadcast %59 : vector<80x1xf32> to vector<80x136xf32>
    %61 = arith.divf %57, %60 : vector<80x136xf32>
    %62 = vector.extract_strided_slice %21 {offsets = [0, 8], sizes = [136, 8], strides = [1, 1]} : vector<136x32xf32> to vector<136x8xf32>
    %cst_31 = arith.constant dense<0.000000e+00> : vector<80x8xf32>
    %63 = tpu.matmul %61, %62, %cst_31 {dimension_numbers = #tpu.dot_dimension_numbers<[1], [0], [0], [1], [0, 0, 1, 1], [], []>} : vector<80x136xf32>, vector<136x8xf32>, vector<80x8xf32> -> vector<80x8xf32>
    %64 = vector.extract_strided_slice %19 {offsets = [0, 16], sizes = [80, 8], strides = [1, 1]} : vector<80x32xf32> to vector<80x8xf32>
    %65 = vector.extract_strided_slice %20 {offsets = [0, 16], sizes = [136, 8], strides = [1, 1]} : vector<136x32xf32> to vector<136x8xf32>
    %66 = tpu.transpose %65, [1, 0] : vector<136x8xf32> -> vector<8x136xf32>
    %cst_32 = arith.constant dense<0.000000e+00> : vector<80x136xf32>
    %67 = tpu.matmul %64, %66, %cst_32 {dimension_numbers = #tpu.dot_dimension_numbers<[1], [0], [0], [1], [0, 0, 1, 1], [], []>} : vector<80x8xf32>, vector<8x136xf32>, vector<80x136xf32> -> vector<80x136xf32>
    %cst_33 = arith.constant 0.353553385 : f32
    %68 = vector.broadcast %cst_33 : f32 to vector<80x136xf32>
    %69 = arith.mulf %67, %68 : vector<80x136xf32>
    %cst_34 = arith.constant -1.000000e+09 : f32
    %70 = vector.shape_cast %8 : vector<1x136xi1> to vector<1x136xi1>
    %71 = vector.broadcast %70 : vector<1x136xi1> to vector<80x136xi1>
    %72 = vector.broadcast %cst_34 : f32 to vector<80x136xf32>
    %73 = arith.select %71, %72, %69 : vector<80x136xi1>, vector<80x136xf32>
    %cst_35 = arith.constant dense<0xFF800000> : vector<80xf32>
    %74 = vector.multi_reduction <maximumf>, %73, %cst_35 [1] : vector<80x136xf32> to vector<80xf32>
    %75 = vector.shape_cast %74 : vector<80xf32> to vector<80x1xf32>
    %76 = vector.broadcast %75 : vector<80x1xf32> to vector<80x136xf32>
    %77 = arith.subf %73, %76 : vector<80x136xf32>
    %78 = math.exp %77 : vector<80x136xf32>
    %cst_36 = arith.constant dense<0.000000e+00> : vector<80xf32>
    %79 = vector.multi_reduction <add>, %78, %cst_36 [1] : vector<80x136xf32> to vector<80xf32>
    %80 = vector.shape_cast %79 : vector<80xf32> to vector<80x1xf32>
    %81 = vector.broadcast %80 : vector<80x1xf32> to vector<80x136xf32>
    %82 = arith.divf %78, %81 : vector<80x136xf32>
    %83 = vector.extract_strided_slice %21 {offsets = [0, 16], sizes = [136, 8], strides = [1, 1]} : vector<136x32xf32> to vector<136x8xf32>
    %cst_37 = arith.constant dense<0.000000e+00> : vector<80x8xf32>
    %84 = tpu.matmul %82, %83, %cst_37 {dimension_numbers = #tpu.dot_dimension_numbers<[1], [0], [0], [1], [0, 0, 1, 1], [], []>} : vector<80x136xf32>, vector<136x8xf32>, vector<80x8xf32> -> vector<80x8xf32>
    %85 = vector.extract_strided_slice %19 {offsets = [0, 24], sizes = [80, 8], strides = [1, 1]} : vector<80x32xf32> to vector<80x8xf32>
    %86 = vector.extract_strided_slice %20 {offsets = [0, 24], sizes = [136, 8], strides = [1, 1]} : vector<136x32xf32> to vector<136x8xf32>
    %87 = tpu.transpose %86, [1, 0] : vector<136x8xf32> -> vector<8x136xf32>
    %cst_38 = arith.constant dense<0.000000e+00> : vector<80x136xf32>
    %88 = tpu.matmul %85, %87, %cst_38 {dimension_numbers = #tpu.dot_dimension_numbers<[1], [0], [0], [1], [0, 0, 1, 1], [], []>} : vector<80x8xf32>, vector<8x136xf32>, vector<80x136xf32> -> vector<80x136xf32>
    %cst_39 = arith.constant 0.353553385 : f32
    %89 = vector.broadcast %cst_39 : f32 to vector<80x136xf32>
    %90 = arith.mulf %88, %89 : vector<80x136xf32>
    %cst_40 = arith.constant -1.000000e+09 : f32
    %91 = vector.shape_cast %8 : vector<1x136xi1> to vector<1x136xi1>
    %92 = vector.broadcast %91 : vector<1x136xi1> to vector<80x136xi1>
    %93 = vector.broadcast %cst_40 : f32 to vector<80x136xf32>
    %94 = arith.select %92, %93, %90 : vector<80x136xi1>, vector<80x136xf32>
    %cst_41 = arith.constant dense<0xFF800000> : vector<80xf32>
    %95 = vector.multi_reduction <maximumf>, %94, %cst_41 [1] : vector<80x136xf32> to vector<80xf32>
    %96 = vector.shape_cast %95 : vector<80xf32> to vector<80x1xf32>
    %97 = vector.broadcast %96 : vector<80x1xf32> to vector<80x136xf32>
    %98 = arith.subf %94, %97 : vector<80x136xf32>
    %99 = math.exp %98 : vector<80x136xf32>
    %cst_42 = arith.constant dense<0.000000e+00> : vector<80xf32>
    %100 = vector.multi_reduction <add>, %99, %cst_42 [1] : vector<80x136xf32> to vector<80xf32>
    %101 = vector.shape_cast %100 : vector<80xf32> to vector<80x1xf32>
    %102 = vector.broadcast %101 : vector<80x1xf32> to vector<80x136xf32>
    %103 = arith.divf %99, %102 : vector<80x136xf32>
    %104 = vector.extract_strided_slice %21 {offsets = [0, 24], sizes = [136, 8], strides = [1, 1]} : vector<136x32xf32> to vector<136x8xf32>
    %cst_43 = arith.constant dense<0.000000e+00> : vector<80x8xf32>
    %105 = tpu.matmul %103, %104, %cst_43 {dimension_numbers = #tpu.dot_dimension_numbers<[1], [0], [0], [1], [0, 0, 1, 1], [], []>} : vector<80x136xf32>, vector<136x8xf32>, vector<80x8xf32> -> vector<80x8xf32>
    %106 = tpu.concatenate %42, %63, %84, %105 in 1 : vector<80x8xf32>, vector<80x8xf32>, vector<80x8xf32>, vector<80x8xf32> -> vector<80x32xf32>
    %cst_44 = arith.constant dense<0.000000e+00> : vector<20x32xf32>
    %107 = tpu.matmul %6, %106, %cst_44 {dimension_numbers = #tpu.dot_dimension_numbers<[1], [0], [0], [1], [0, 0, 1, 1], [], []>} : vector<20x80xf32>, vector<80x32xf32>, vector<20x32xf32> -> vector<20x32xf32>
    %108 = vector.extract_strided_slice %13 {offsets = [0, 32], sizes = [80, 32], strides = [1, 1]} : vector<80x64xf32> to vector<80x32xf32>
    %109 = vector.extract_strided_slice %18 {offsets = [0, 64], sizes = [136, 32], strides = [1, 1]} : vector<136x128xf32> to vector<136x32xf32>
    %110 = vector.extract_strided_slice %18 {offsets = [0, 96], sizes = [136, 32], strides = [1, 1]} : vector<136x128xf32> to vector<136x32xf32>
    %111 = vector.extract_strided_slice %108 {offsets = [0, 0], sizes = [80, 8], strides = [1, 1]} : vector<80x32xf32> to vector<80x8xf32>
    %112 = vector.extract_strided_slice %109 {offsets = [0, 0], sizes = [136, 8], strides = [1, 1]} : vector<136x32xf32> to vector<136x8xf32>
    %113 = tpu.transpose %112, [1, 0] : vector<136x8xf32> -> vector<8x136xf32>
    %cst_45 = arith.constant dense<0.000000e+00> : vector<80x136xf32>
    %114 = tpu.matmul %111, %113, %cst_45 {dimension_numbers = #tpu.dot_dimension_numbers<[1], [0], [0], [1], [0, 0, 1, 1], [], []>} : vector<80x8xf32>, vector<8x136xf32>, vector<80x136xf32> -> vector<80x136xf32>
    %cst_46 = arith.constant 0.353553385 : f32
    %115 = vector.broadcast %cst_46 : f32 to vector<80x136xf32>
    %116 = arith.mulf %114, %115 : vector<80x136xf32>
    %cst_47 = arith.constant -1.000000e+09 : f32
    %117 = vector.shape_cast %8 : vector<1x136xi1> to vector<1x136xi1>
    %118 = vector.broadcast %117 : vector<1x136xi1> to vector<80x136xi1>
    %119 = vector.broadcast %cst_47 : f32 to vector<80x136xf32>
    %120 = arith.select %118, %119, %116 : vector<80x136xi1>, vector<80x136xf32>
    %cst_48 = arith.constant dense<0xFF800000> : vector<80xf32>
    %121 = vector.multi_reduction <maximumf>, %120, %cst_48 [1] : vector<80x136xf32> to vector<80xf32>
    %122 = vector.shape_cast %121 : vector<80xf32> to vector<80x1xf32>
    %123 = vector.broadcast %122 : vector<80x1xf32> to vector<80x136xf32>
    %124 = arith.subf %120, %123 : vector<80x136xf32>
    %125 = math.exp %124 : vector<80x136xf32>
    %cst_49 = arith.constant dense<0.000000e+00> : vector<80xf32>
    %126 = vector.multi_reduction <add>, %125, %cst_49 [1] : vector<80x136xf32> to vector<80xf32>
    %127 = vector.shape_cast %126 : vector<80xf32> to vector<80x1xf32>
    %128 = vector.broadcast %127 : vector<80x1xf32> to vector<80x136xf32>
    %129 = arith.divf %125, %128 : vector<80x136xf32>
    %130 = vector.extract_strided_slice %110 {offsets = [0, 0], sizes = [136, 8], strides = [1, 1]} : vector<136x32xf32> to vector<136x8xf32>
    %cst_50 = arith.constant dense<0.000000e+00> : vector<80x8xf32>
    %131 = tpu.matmul %129, %130, %cst_50 {dimension_numbers = #tpu.dot_dimension_numbers<[1], [0], [0], [1], [0, 0, 1, 1], [], []>} : vector<80x136xf32>, vector<136x8xf32>, vector<80x8xf32> -> vector<80x8xf32>
    %132 = vector.extract_strided_slice %108 {offsets = [0, 8], sizes = [80, 8], strides = [1, 1]} : vector<80x32xf32> to vector<80x8xf32>
    %133 = vector.extract_strided_slice %109 {offsets = [0, 8], sizes = [136, 8], strides = [1, 1]} : vector<136x32xf32> to vector<136x8xf32>
    %134 = tpu.transpose %133, [1, 0] : vector<136x8xf32> -> vector<8x136xf32>
    %cst_51 = arith.constant dense<0.000000e+00> : vector<80x136xf32>
    %135 = tpu.matmul %132, %134, %cst_51 {dimension_numbers = #tpu.dot_dimension_numbers<[1], [0], [0], [1], [0, 0, 1, 1], [], []>} : vector<80x8xf32>, vector<8x136xf32>, vector<80x136xf32> -> vector<80x136xf32>
    %cst_52 = arith.constant 0.353553385 : f32
    %136 = vector.broadcast %cst_52 : f32 to vector<80x136xf32>
    %137 = arith.mulf %135, %136 : vector<80x136xf32>
    %cst_53 = arith.constant -1.000000e+09 : f32
    %138 = vector.shape_cast %8 : vector<1x136xi1> to vector<1x136xi1>
    %139 = vector.broadcast %138 : vector<1x136xi1> to vector<80x136xi1>
    %140 = vector.broadcast %cst_53 : f32 to vector<80x136xf32>
    %141 = arith.select %139, %140, %137 : vector<80x136xi1>, vector<80x136xf32>
    %cst_54 = arith.constant dense<0xFF800000> : vector<80xf32>
    %142 = vector.multi_reduction <maximumf>, %141, %cst_54 [1] : vector<80x136xf32> to vector<80xf32>
    %143 = vector.shape_cast %142 : vector<80xf32> to vector<80x1xf32>
    %144 = vector.broadcast %143 : vector<80x1xf32> to vector<80x136xf32>
    %145 = arith.subf %141, %144 : vector<80x136xf32>
    %146 = math.exp %145 : vector<80x136xf32>
    %cst_55 = arith.constant dense<0.000000e+00> : vector<80xf32>
    %147 = vector.multi_reduction <add>, %146, %cst_55 [1] : vector<80x136xf32> to vector<80xf32>
    %148 = vector.shape_cast %147 : vector<80xf32> to vector<80x1xf32>
    %149 = vector.broadcast %148 : vector<80x1xf32> to vector<80x136xf32>
    %150 = arith.divf %146, %149 : vector<80x136xf32>
    %151 = vector.extract_strided_slice %110 {offsets = [0, 8], sizes = [136, 8], strides = [1, 1]} : vector<136x32xf32> to vector<136x8xf32>
    %cst_56 = arith.constant dense<0.000000e+00> : vector<80x8xf32>
    %152 = tpu.matmul %150, %151, %cst_56 {dimension_numbers = #tpu.dot_dimension_numbers<[1], [0], [0], [1], [0, 0, 1, 1], [], []>} : vector<80x136xf32>, vector<136x8xf32>, vector<80x8xf32> -> vector<80x8xf32>
    %153 = vector.extract_strided_slice %108 {offsets = [0, 16], sizes = [80, 8], strides = [1, 1]} : vector<80x32xf32> to vector<80x8xf32>
    %154 = vector.extract_strided_slice %109 {offsets = [0, 16], sizes = [136, 8], strides = [1, 1]} : vector<136x32xf32> to vector<136x8xf32>
    %155 = tpu.transpose %154, [1, 0] : vector<136x8xf32> -> vector<8x136xf32>
    %cst_57 = arith.constant dense<0.000000e+00> : vector<80x136xf32>
    %156 = tpu.matmul %153, %155, %cst_57 {dimension_numbers = #tpu.dot_dimension_numbers<[1], [0], [0], [1], [0, 0, 1, 1], [], []>} : vector<80x8xf32>, vector<8x136xf32>, vector<80x136xf32> -> vector<80x136xf32>
    %cst_58 = arith.constant 0.353553385 : f32
    %157 = vector.broadcast %cst_58 : f32 to vector<80x136xf32>
    %158 = arith.mulf %156, %157 : vector<80x136xf32>
    %cst_59 = arith.constant -1.000000e+09 : f32
    %159 = vector.shape_cast %8 : vector<1x136xi1> to vector<1x136xi1>
    %160 = vector.broadcast %159 : vector<1x136xi1> to vector<80x136xi1>
    %161 = vector.broadcast %cst_59 : f32 to vector<80x136xf32>
    %162 = arith.select %160, %161, %158 : vector<80x136xi1>, vector<80x136xf32>
    %cst_60 = arith.constant dense<0xFF800000> : vector<80xf32>
    %163 = vector.multi_reduction <maximumf>, %162, %cst_60 [1] : vector<80x136xf32> to vector<80xf32>
    %164 = vector.shape_cast %163 : vector<80xf32> to vector<80x1xf32>
    %165 = vector.broadcast %164 : vector<80x1xf32> to vector<80x136xf32>
    %166 = arith.subf %162, %165 : vector<80x136xf32>
    %167 = math.exp %166 : vector<80x136xf32>
    %cst_61 = arith.constant dense<0.000000e+00> : vector<80xf32>
    %168 = vector.multi_reduction <add>, %167, %cst_61 [1] : vector<80x136xf32> to vector<80xf32>
    %169 = vector.shape_cast %168 : vector<80xf32> to vector<80x1xf32>
    %170 = vector.broadcast %169 : vector<80x1xf32> to vector<80x136xf32>
    %171 = arith.divf %167, %170 : vector<80x136xf32>
    %172 = vector.extract_strided_slice %110 {offsets = [0, 16], sizes = [136, 8], strides = [1, 1]} : vector<136x32xf32> to vector<136x8xf32>
    %cst_62 = arith.constant dense<0.000000e+00> : vector<80x8xf32>
    %173 = tpu.matmul %171, %172, %cst_62 {dimension_numbers = #tpu.dot_dimension_numbers<[1], [0], [0], [1], [0, 0, 1, 1], [], []>} : vector<80x136xf32>, vector<136x8xf32>, vector<80x8xf32> -> vector<80x8xf32>
    %174 = vector.extract_strided_slice %108 {offsets = [0, 24], sizes = [80, 8], strides = [1, 1]} : vector<80x32xf32> to vector<80x8xf32>
    %175 = vector.extract_strided_slice %109 {offsets = [0, 24], sizes = [136, 8], strides = [1, 1]} : vector<136x32xf32> to vector<136x8xf32>
    %176 = tpu.transpose %175, [1, 0] : vector<136x8xf32> -> vector<8x136xf32>
    %cst_63 = arith.constant dense<0.000000e+00> : vector<80x136xf32>
    %177 = tpu.matmul %174, %176, %cst_63 {dimension_numbers = #tpu.dot_dimension_numbers<[1], [0], [0], [1], [0, 0, 1, 1], [], []>} : vector<80x8xf32>, vector<8x136xf32>, vector<80x136xf32> -> vector<80x136xf32>
    %cst_64 = arith.constant 0.353553385 : f32
    %178 = vector.broadcast %cst_64 : f32 to vector<80x136xf32>
    %179 = arith.mulf %177, %178 : vector<80x136xf32>
    %cst_65 = arith.constant -1.000000e+09 : f32
    %180 = vector.shape_cast %8 : vector<1x136xi1> to vector<1x136xi1>
    %181 = vector.broadcast %180 : vector<1x136xi1> to vector<80x136xi1>
    %182 = vector.broadcast %cst_65 : f32 to vector<80x136xf32>
    %183 = arith.select %181, %182, %179 : vector<80x136xi1>, vector<80x136xf32>
    %cst_66 = arith.constant dense<0xFF800000> : vector<80xf32>
    %184 = vector.multi_reduction <maximumf>, %183, %cst_66 [1] : vector<80x136xf32> to vector<80xf32>
    %185 = vector.shape_cast %184 : vector<80xf32> to vector<80x1xf32>
    %186 = vector.broadcast %185 : vector<80x1xf32> to vector<80x136xf32>
    %187 = arith.subf %183, %186 : vector<80x136xf32>
    %188 = math.exp %187 : vector<80x136xf32>
    %cst_67 = arith.constant dense<0.000000e+00> : vector<80xf32>
    %189 = vector.multi_reduction <add>, %188, %cst_67 [1] : vector<80x136xf32> to vector<80xf32>
    %190 = vector.shape_cast %189 : vector<80xf32> to vector<80x1xf32>
    %191 = vector.broadcast %190 : vector<80x1xf32> to vector<80x136xf32>
    %192 = arith.divf %188, %191 : vector<80x136xf32>
    %193 = vector.extract_strided_slice %110 {offsets = [0, 24], sizes = [136, 8], strides = [1, 1]} : vector<136x32xf32> to vector<136x8xf32>
    %cst_68 = arith.constant dense<0.000000e+00> : vector<80x8xf32>
    %194 = tpu.matmul %192, %193, %cst_68 {dimension_numbers = #tpu.dot_dimension_numbers<[1], [0], [0], [1], [0, 0, 1, 1], [], []>} : vector<80x136xf32>, vector<136x8xf32>, vector<80x8xf32> -> vector<80x8xf32>
    %195 = tpu.concatenate %131, %152, %173, %194 in 1 : vector<80x8xf32>, vector<80x8xf32>, vector<80x8xf32>, vector<80x8xf32> -> vector<80x32xf32>
    %cst_69 = arith.constant dense<0.000000e+00> : vector<20x32xf32>
    %196 = tpu.matmul %6, %195, %cst_69 {dimension_numbers = #tpu.dot_dimension_numbers<[1], [0], [0], [1], [0, 0, 1, 1], [], []>} : vector<20x80xf32>, vector<80x32xf32>, vector<20x32xf32> -> vector<20x32xf32>
    %197 = tpu.concatenate %107, %196 in 1 : vector<20x32xf32>, vector<20x32xf32> -> vector<20x64xf32>
    %c0_70 = arith.constant 0 : index
    %c0_71 = arith.constant 0 : index
    %c0_72 = arith.constant 0 : index
    %198 = vector.load %arg9[%c0_70, %c0_71, %c0_72] : memref<1x20x64xf32, #tpu.memory_space<vmem>>, vector<1x20x64xf32>
    %199 = vector.shape_cast %198 : vector<1x20x64xf32> to vector<20x64xf32>
    %200 = vector.shape_cast %197 : vector<20x64xf32> to vector<1x20x64xf32>
    tpu.vector_store %arg9[%c0_70, %c0_71, %c0_72], %200 {strides = array<i32>} : memref<1x20x64xf32, #tpu.memory_space<vmem>>, vector<1x20x64xf32>,
    return
  }
  func.func @transform_0(%arg0: i32) -> (i32, i32, i32) {
    %c0_i32 = arith.constant 0 : i32
    %c0_i32_0 = arith.constant 0 : i32
    %c0_i32_1 = arith.constant 0 : i32
    return %arg0, %c0_i32, %c0_i32_0 : i32, i32, i32
  }
  func.func @transform_1(%arg0: i32) -> (i32, i32, i32) {
    %c0_i32 = arith.constant 0 : i32
    %c0_i32_0 = arith.constant 0 : i32
    %c0_i32_1 = arith.constant 0 : i32
    return %arg0, %c0_i32, %c0_i32_0 : i32, i32, i32
  }
  func.func @transform_2(%arg0: i32) -> (i32, i32, i32) {
    %c0_i32 = arith.constant 0 : i32
    %c0_i32_0 = arith.constant 0 : i32
    %c0_i32_1 = arith.constant 0 : i32
    return %arg0, %c0_i32, %c0_i32_0 : i32, i32, i32
  }
  func.func @transform_3(%arg0: i32) -> (i32, i32) {
    %c0_i32 = arith.constant 0 : i32
    %c0_i32_0 = arith.constant 0 : i32
    %c0_i32_1 = arith.constant 0 : i32
    return %c0_i32, %c0_i32_0 : i32, i32
  }
  func.func @transform_4(%arg0: i32) -> (i32, i32) {
    %c0_i32 = arith.constant 0 : i32
    %c0_i32_0 = arith.constant 0 : i32
    %c0_i32_1 = arith.constant 0 : i32
    return %c0_i32, %c0_i32_0 : i32, i32
  }
  func.func @transform_5(%arg0: i32) -> (i32, i32) {
    %c0_i32 = arith.constant 0 : i32
    %c0_i32_0 = arith.constant 0 : i32
    %c0_i32_1 = arith.constant 0 : i32
    return %c0_i32, %c0_i32_0 : i32, i32
  }
  func.func @transform_6(%arg0: i32) -> (i32, i32) {
    %c0_i32 = arith.constant 0 : i32
    %c0_i32_0 = arith.constant 0 : i32
    %c0_i32_1 = arith.constant 0 : i32
    return %c0_i32, %c0_i32_0 : i32, i32
  }
  func.func @transform_7(%arg0: i32) -> (i32, i32) {
    %c0_i32 = arith.constant 0 : i32
    %c0_i32_0 = arith.constant 0 : i32
    %c0_i32_1 = arith.constant 0 : i32
    return %c0_i32, %c0_i32_0 : i32, i32
  }
  func.func @transform_8(%arg0: i32) -> (i32, i32, i32) {
    %c0_i32 = arith.constant 0 : i32
    %c0_i32_0 = arith.constant 0 : i32
    %c0_i32_1 = arith.constant 0 : i32
    return %arg0, %c0_i32, %c0_i32_0 : i32, i32, i32
  }
}

</mosaic_0001>

<llo_original>
// kernel: tpu_custom_call.1
$region0: #{tpu_custom_call.1}
  #allocation0 [shape = 'u32[]', space=smem, size = 0x4, offset = 0x4, fixed_abs, tag = 'smem constant byte address 0x4 - core index']
  #allocation1 [shape = 'u32[144,128]{1,0:T(1,128)}', space=vmem, size = 0x12000, scoped, tag = 'internal scratch']
  %s0 = inlined_call_operand.vmem [shape: f32[2,80,32], index: 0, kind: input, shape index: {}]
  %s1 = inlined_call_operand.vmem [shape: f32[2,136,32], index: 1, kind: input, shape index: {}]
  %s2 = inlined_call_operand.vmem [shape: f32[2,1,136], index: 2, kind: input, shape index: {}]
  %s3 = inlined_call_operand.vmem [shape: f32[20,80], index: 3, kind: input, shape index: {}]
  %s4 = inlined_call_operand.vmem [shape: f32[32,64], index: 4, kind: input, shape index: {}]
  %s5 = inlined_call_operand.vmem [shape: f32[1,64], index: 5, kind: input, shape index: {}]
  %s6 = inlined_call_operand.vmem [shape: f32[32,128], index: 6, kind: input, shape index: {}]
  %s7 = inlined_call_operand.vmem [shape: f32[1,128], index: 7, kind: input, shape index: {}]
  %s8 = inlined_call_operand.vmem [shape: f32[2,20,64], index: 8, kind: output, shape index: {}]
  %s9 = sld [smem:[#allocation0]]
  $region65: #{tpu_custom_call.1} parent=0
    _
  %s11 = ssub.s32 1, %s9
  %s12 = scalar_select 0, %s11, %s9
  loop: start=0, step=1, limit=4
  $region2: #{tpu_custom_call.1} parent=0 // loop_pre_header
    _
  $region3: #{tpu_custom_call.1} parent=0 // loop_header
    %s14 = sphi 0, %s18
    %p15 = scmp.ge.s32.totalorder %s14, 4
    %s24 = sphi 0, %s26
    %s27 = sphi 0, %s24
    %s28 = sphi 0, %s27
    %s44 = sphi 0, %s28
    %s50 = sphi 0, %s52
    %s53 = sphi 0, %s50
    %s54 = sphi 0, %s53
    %s70 = sphi 0, %s54
    %s76 = sphi 0, %s78
    %s79 = sphi 0, %s76
    %s80 = sphi 0, %s79
    %s96 = sphi 0, %s80
    %s100 = sphi 0, %s100
    %s102 = sphi 0, %s100
    %s103 = sphi 0, %s102
    %s117 = sphi 0, %s103
    %s121 = sphi 0, %s121
    %s123 = sphi 0, %s121
    %s124 = sphi 0, %s123
    %s138 = sphi 0, %s124
    %s142 = sphi 0, %s142
    %s144 = sphi 0, %s142
    %s145 = sphi 0, %s144
    %s159 = sphi 0, %s145
    %s163 = sphi 0, %s163
    %s165 = sphi 0, %s163
    %s166 = sphi 0, %s165
    %s180 = sphi 0, %s166
    %s184 = sphi 0, %s184
    %s186 = sphi 0, %s184
    %s187 = sphi 0, %s186
    %s201 = sphi 0, %s187
    %s207 = sphi 0, %s209
    %s210 = sphi 0, %s207
    %s211 = sphi 0, %s210
    %s227 = sphi 0, %s211
  $region4: #{tpu_custom_call.1} parent=0 // loop_header_branch
    %17 = sbr.rel (%p15) target = $region8
  $region5: #{tpu_custom_call.1} parent=0 // loop_body
    %s19 = ssub.s32 %s14, 1
    %s20 = ssub.s32 %s14, 2
    %s21 = sadd.s32 %s14, 1
    %s22 = ssub.s32 %s14, %s21
    %p23 = scmp.eq.s32.totalorder %s22, 0
    %s25 = sadd.s32 %s24, 1
    %s26 = scalar_select %p23, %s24, %s25
    %p29 = pneg %p23
    %p30 = scmp.eq.s32.totalorder %s14, 1
    %p31 = por %p29, %p30
    %p32 = scmp.ne.s32.totalorder %s24, %s27
    %p33 = scmp.eq.s32.totalorder %s14, 0
    %p34 = por %p32, %p33
    %p35 = scmp.ne.s32.totalorder %s24, %s27
    %p36 = scmp.eq.s32.totalorder %s19, 1
    %p37 = por %p35, %p36
    %p38 = scmp.ne.s32.totalorder %s27, %s28
    %p39 = scmp.eq.s32.totalorder %s19, 0
    %p40 = por %p38, %p39
    %p41 = scmp.ne.s32.totalorder %s27, %s28
    %p42 = scmp.eq.s32.totalorder %s20, 1
    %p43 = por %p41, %p42
    %p45 = scmp.ne.s32.totalorder %s28, %s44
    %p46 = scmp.eq.s32.totalorder %s20, 0
    %p47 = por %p45, %p46
    %s48 = ssub.s32 %s14, %s21
    %p49 = scmp.eq.s32.totalorder %s48, 0
    %s51 = sadd.s32 %s50, 1
    %s52 = scalar_select %p49, %s50, %s51
    %p55 = pneg %p49
    %p56 = scmp.eq.s32.totalorder %s14, 1
    %p57 = por %p55, %p56
    %p58 = scmp.ne.s32.totalorder %s50, %s53
    %p59 = scmp.eq.s32.totalorder %s14, 0
    %p60 = por %p58, %p59
    %p61 = scmp.ne.s32.totalorder %s50, %s53
    %p62 = scmp.eq.s32.totalorder %s19, 1
    %p63 = por %p61, %p62
    %p64 = scmp.ne.s32.totalorder %s53, %s54
    %p65 = scmp.eq.s32.totalorder %s19, 0
    %p66 = por %p64, %p65
    %p67 = scmp.ne.s32.totalorder %s53, %s54
    %p68 = scmp.eq.s32.totalorder %s20, 1
    %p69 = por %p67, %p68
    %p71 = scmp.ne.s32.totalorder %s54, %s70
    %p72 = scmp.eq.s32.totalorder %s20, 0
    %p73 = por %p71, %p72
    %s74 = ssub.s32 %s14, %s21
    %p75 = scmp.eq.s32.totalorder %s74, 0
    %s77 = sadd.s32 %s76, 1
    %s78 = scalar_select %p75, %s76, %s77
    %p81 = pneg %p75
    %p82 = scmp.eq.s32.totalorder %s14, 1
    %p83 = por %p81, %p82
    %p84 = scmp.ne.s32.totalorder %s76, %s79
    %p85 = scmp.eq.s32.totalorder %s14, 0
    %p86 = por %p84, %p85
    %p87 = scmp.ne.s32.totalorder %s76, %s79
    %p88 = scmp.eq.s32.totalorder %s19, 1
    %p89 = por %p87, %p88
    %p90 = scmp.ne.s32.totalorder %s79, %s80
    %p91 = scmp.eq.s32.totalorder %s19, 0
    %p92 = por %p90, %p91
    %p93 = scmp.ne.s32.totalorder %s79, %s80
    %p94 = scmp.eq.s32.totalorder %s20, 1
    %p95 = por %p93, %p94
    %p97 = scmp.ne.s32.totalorder %s80, %s96
    %p98 = scmp.eq.s32.totalorder %s20, 0
    %p99 = por %p97, %p98
    %s101 = sadd.s32 %s100, 1
    %p104 = scmp.eq.s32.totalorder %s14, 1
    %p105 = scmp.ne.s32.totalorder %s100, %s102
    %p106 = scmp.eq.s32.totalorder %s14, 0
    %p107 = por %p105, %p106
    %p108 = scmp.ne.s32.totalorder %s100, %s102
    %p109 = scmp.eq.s32.totalorder %s19, 1
    %p110 = por %p108, %p109
    %p111 = scmp.ne.s32.totalorder %s102, %s103
    %p112 = scmp.eq.s32.totalorder %s19, 0
    %p113 = por %p111, %p112
    %p114 = scmp.ne.s32.totalorder %s102, %s103
    %p115 = scmp.eq.s32.totalorder %s20, 1
    %p116 = por %p114, %p115
    %p118 = scmp.ne.s32.totalorder %s103, %s117
    %p119 = scmp.eq.s32.totalorder %s20, 0
    %p120 = por %p118, %p119
    %s122 = sadd.s32 %s121, 1
    %p125 = scmp.eq.s32.totalorder %s14, 1
    %p126 = scmp.ne.s32.totalorder %s121, %s123
    %p127 = scmp.eq.s32.totalorder %s14, 0
    %p128 = por %p126, %p127
    %p129 = scmp.ne.s32.totalorder %s121, %s123
    %p130 = scmp.eq.s32.totalorder %s19, 1
    %p131 = por %p129, %p130
    %p132 = scmp.ne.s32.totalorder %s123, %s124
    %p133 = scmp.eq.s32.totalorder %s19, 0
    %p134 = por %p132, %p133
    %p135 = scmp.ne.s32.totalorder %s123, %s124
    %p136 = scmp.eq.s32.totalorder %s20, 1
    %p137 = por %p135, %p136
    %p139 = scmp.ne.s32.totalorder %s124, %s138
    %p140 = scmp.eq.s32.totalorder %s20, 0
    %p141 = por %p139, %p140
    %s143 = sadd.s32 %s142, 1
    %p146 = scmp.eq.s32.totalorder %s14, 1
    %p147 = scmp.ne.s32.totalorder %s142, %s144
    %p148 = scmp.eq.s32.totalorder %s14, 0
    %p149 = por %p147, %p148
    %p150 = scmp.ne.s32.totalorder %s142, %s144
    %p151 = scmp.eq.s32.totalorder %s19, 1
    %p152 = por %p150, %p151
    %p153 = scmp.ne.s32.totalorder %s144, %s145
    %p154 = scmp.eq.s32.totalorder %s19, 0
    %p155 = por %p153, %p154
    %p156 = scmp.ne.s32.totalorder %s144, %s145
    %p157 = scmp.eq.s32.totalorder %s20, 1
    %p158 = por %p156, %p157
    %p160 = scmp.ne.s32.totalorder %s145, %s159
    %p161 = scmp.eq.s32.totalorder %s20, 0
    %p162 = por %p160, %p161
    %s164 = sadd.s32 %s163, 1
    %p167 = scmp.eq.s32.totalorder %s14, 1
    %p168 = scmp.ne.s32.totalorder %s163, %s165
    %p169 = scmp.eq.s32.totalorder %s14, 0
    %p170 = por %p168, %p169
    %p171 = scmp.ne.s32.totalorder %s163, %s165
    %p172 = scmp.eq.s32.totalorder %s19, 1
    %p173 = por %p171, %p172
    %p174 = scmp.ne.s32.totalorder %s165, %s166
    %p175 = scmp.eq.s32.totalorder %s19, 0
    %p176 = por %p174, %p175
    %p177 = scmp.ne.s32.totalorder %s165, %s166
    %p178 = scmp.eq.s32.totalorder %s20, 1
    %p179 = por %p177, %p178
    %p181 = scmp.ne.s32.totalorder %s166, %s180
    %p182 = scmp.eq.s32.totalorder %s20, 0
    %p183 = por %p181, %p182
    %s185 = sadd.s32 %s184, 1
    %p188 = scmp.eq.s32.totalorder %s14, 1
    %p189 = scmp.ne.s32.totalorder %s184, %s186
    %p190 = scmp.eq.s32.totalorder %s14, 0
    %p191 = por %p189, %p190
    %p192 = scmp.ne.s32.totalorder %s184, %s186
    %p193 = scmp.eq.s32.totalorder %s19, 1
    %p194 = por %p192, %p193
    %p195 = scmp.ne.s32.totalorder %s186, %s187
    %p196 = scmp.eq.s32.totalorder %s19, 0
    %p197 = por %p195, %p196
    %p198 = scmp.ne.s32.totalorder %s186, %s187
    %p199 = scmp.eq.s32.totalorder %s20, 1
    %p200 = por %p198, %p199
    %p202 = scmp.ne.s32.totalorder %s187, %s201
    %p203 = scmp.eq.s32.totalorder %s20, 0
    %p204 = por %p202, %p203
    %s205 = ssub.s32 %s14, %s21
    %p206 = scmp.eq.s32.totalorder %s205, 0
    %s208 = sadd.s32 %s207, 1
    %s209 = scalar_select %p206, %s207, %s208
    %p212 = pneg %p206
    %p213 = scmp.eq.s32.totalorder %s14, 1
    %p214 = por %p212, %p213
    %p215 = scmp.ne.s32.totalorder %s207, %s210
    %p216 = scmp.eq.s32.totalorder %s14, 0
    %p217 = por %p215, %p216
    %p218 = scmp.ne.s32.totalorder %s207, %s210
    %p219 = scmp.eq.s32.totalorder %s19, 1
    %p220 = por %p218, %p219
    %p221 = scmp.ne.s32.totalorder %s210, %s211
    %p222 = scmp.eq.s32.totalorder %s19, 0
    %p223 = por %p221, %p222
    %p224 = scmp.ne.s32.totalorder %s210, %s211
    %p225 = scmp.eq.s32.totalorder %s20, 1
    %p226 = por %p224, %p225
    %p228 = scmp.ne.s32.totalorder %s211, %s227
    %p229 = scmp.eq.s32.totalorder %s20, 0
    %p230 = por %p228, %p229
    %p231 = scmp.le.s32.totalorder 1, %s14
    %p232 = scmp.lt.s32.totalorder %s14, 3
    %p233 = pnand %p231, %p232
    %p234 = pneg %p233
    // Predicated region
    $region9: #{tpu_custom_call.1} parent=5 // pred_check
      _
    $region10: #{tpu_custom_call.1} parent=5 // pred_check_branch
      %236 = sbr.rel (%p233) target = $region12
    $region11: #{tpu_custom_call.1} parent=5 // pred_region
      %s237 = ssub.s32 %s14, 1
      // Predicated region
      $region13: #{tpu_custom_call.1} parent=11 // pred_check
        %p238 = pneg %p113
      $region14: #{tpu_custom_call.1} parent=11 // pred_check_branch
        %240 = sbr.rel (%p238) target = $region16
      $region15: #{tpu_custom_call.1} parent=11 // pred_region
        _
      $region16: #{tpu_custom_call.1} parent=11 // pred_fallthru
        _
      // Predicated region
      $region17: #{tpu_custom_call.1} parent=11 // pred_check
        %p241 = pneg %p134
      $region18: #{tpu_custom_call.1} parent=11 // pred_check_branch
        %243 = sbr.rel (%p241) target = $region20
      $region19: #{tpu_custom_call.1} parent=11 // pred_region
        _
      $region20: #{tpu_custom_call.1} parent=11 // pred_fallthru
        _
      // Predicated region
      $region21: #{tpu_custom_call.1} parent=11 // pred_check
        %p244 = pneg %p155
      $region22: #{tpu_custom_call.1} parent=11 // pred_check_branch
        %246 = sbr.rel (%p244) target = $region24
      $region23: #{tpu_custom_call.1} parent=11 // pred_region
        _
      $region24: #{tpu_custom_call.1} parent=11 // pred_fallthru
        _
      // Predicated region
      $region25: #{tpu_custom_call.1} parent=11 // pred_check
        %p247 = pneg %p176
      $region26: #{tpu_custom_call.1} parent=11 // pred_check_branch
        %249 = sbr.rel (%p247) target = $region28
      $region27: #{tpu_custom_call.1} parent=11 // pred_region
        _
      $region28: #{tpu_custom_call.1} parent=11 // pred_fallthru
        _
      // Predicated region
      $region29: #{tpu_custom_call.1} parent=11 // pred_check
        %p250 = pneg %p197
      $region30: #{tpu_custom_call.1} parent=11 // pred_check_branch
        %252 = sbr.rel (%p250) target = $region32
      $region31: #{tpu_custom_call.1} parent=11 // pred_region
        _
      $region32: #{tpu_custom_call.1} parent=11 // pred_fallthru
        _
    $region12: #{tpu_custom_call.1} parent=5 // pred_fallthru
      _
    %p253 = scmp.lt.s32.totalorder %s14, 2
    // Predicated region
    $region33: #{tpu_custom_call.1} parent=5 // pred_check
      %p254 = pneg %p253
    $region34: #{tpu_custom_call.1} parent=5 // pred_check_branch
      %256 = sbr.rel (%p254) target = $region36
    $region35: #{tpu_custom_call.1} parent=5 // pred_region
      // Predicated region
      $region37: #{tpu_custom_call.1} parent=35 // pred_check
        %p257 = pneg %p34
      $region38: #{tpu_custom_call.1} parent=35 // pred_check_branch
        %259 = sbr.rel (%p257) target = $region40
      $region39: #{tpu_custom_call.1} parent=35 // pred_region
        %p260 = scmp.lt.s32.totalorder %s14, 1
        %s261 = scalar_select %p260, %s14, 1
        %s262 = smul.addr %s261, 10
        %s263 = smul.addr %s262, 8
        %s264 = scalar_lea.vmem %s0, %s263
      $region40: #{tpu_custom_call.1} parent=35 // pred_fallthru
        _
      // Predicated region
      $region41: #{tpu_custom_call.1} parent=35 // pred_check
        %p265 = pneg %p60
      $region42: #{tpu_custom_call.1} parent=35 // pred_check_branch
        %267 = sbr.rel (%p265) target = $region44
      $region43: #{tpu_custom_call.1} parent=35 // pred_region
        %p268 = scmp.lt.s32.totalorder %s14, 1
        %s269 = scalar_select %p268, %s14, 1
        %s270 = smul.addr %s269, 17
        %s271 = smul.addr %s270, 8
        %s272 = scalar_lea.vmem %s1, %s271
      $region44: #{tpu_custom_call.1} parent=35 // pred_fallthru
        _
      // Predicated region
      $region45: #{tpu_custom_call.1} parent=35 // pred_check
        %p273 = pneg %p86
      $region46: #{tpu_custom_call.1} parent=35 // pred_check_branch
        %275 = sbr.rel (%p273) target = $region48
      $region47: #{tpu_custom_call.1} parent=35 // pred_region
        %p276 = scmp.lt.s32.totalorder %s14, 1
        %s277 = scalar_select %p276, %s14, 1
        %s278 = smul.addr %s277, 2
        %s279 = scalar_lea.vmem %s2, %s278
      $region48: #{tpu_custom_call.1} parent=35 // pred_fallthru
        _
    $region36: #{tpu_custom_call.1} parent=5 // pred_fallthru
      _
    %p280 = scmp.le.s32.totalorder 1, %s14
    %p281 = scmp.lt.s32.totalorder %s14, 3
    %p282 = pnand %p280, %p281
    %p283 = pneg %p282
    // Predicated region
    $region49: #{tpu_custom_call.1} parent=5 // pred_check
      _
    $region50: #{tpu_custom_call.1} parent=5 // pred_check_branch
      %285 = sbr.rel (%p282) target = $region52
    $region51: #{tpu_custom_call.1} parent=5 // pred_region
      %s286 = ssub.s32 %s14, 1
      %p287 = scmp.lt.s32.totalorder %s19, 1
      %s288 = scalar_select %p287, %s19, 1
      %s289 = smul.addr %s288, 10
      %s290 = smul.addr %s289, 8
      %s291 = scalar_lea.vmem %s0, %s290
      %p292 = pneg %p40
      %p293 = pneg %p37
      %p294 = scmp.lt.s32.totalorder %s19, 1
      %s295 = scalar_select %p294, %s19, 1
      %s296 = smul.addr %s295, 17
      %s297 = smul.addr %s296, 8
      %s298 = scalar_lea.vmem %s1, %s297
      %p299 = pneg %p66
      %p300 = pneg %p63
      %p301 = scmp.lt.s32.totalorder %s19, 1
      %s302 = scalar_select %p301, %s19, 1
      %s303 = smul.addr %s302, 2
      %s304 = scalar_lea.vmem %s2, %s303
      %p305 = pneg %p92
      %p306 = pneg %p89
      %p307 = pneg %p113
      %p308 = pneg %p110
      %p309 = pneg %p134
      %p310 = pneg %p131
      %p311 = pneg %p155
      %p312 = pneg %p152
      %p313 = pneg %p176
      %p314 = pneg %p173
      %p315 = pneg %p197
      %p316 = pneg %p194
      %p317 = pneg %p223
      %p318 = pneg %p220
      %p319 = scmp.lt.s32.totalorder %s19, 1
      %s320 = scalar_select %p319, %s19, 1
      %s321 = smul.addr %s320, 3
      %s322 = smul.addr %s321, 8
      %s323 = scalar_lea.vmem %s8, %s322
      %p324 = scmp.lt.s32.totalorder %s19, 1
      %s325 = scalar_select %p324, %s19, 1
      %s326 = smul.addr %s325, 10
      %s327 = smul.addr %s326, 8
      %s328 = scalar_lea.vmem %s0, %s327
      %p329 = scmp.lt.s32.totalorder %s19, 1
      %s330 = scalar_select %p329, %s19, 1
      %s331 = smul.addr %s330, 17
      %s332 = smul.addr %s331, 8
      %s333 = scalar_lea.vmem %s1, %s332
      %p334 = scmp.lt.s32.totalorder %s19, 1
      %s335 = scalar_select %p334, %s19, 1
      %s336 = smul.addr %s335, 2
      %s337 = scalar_lea.vmem %s2, %s336
      %p338 = scmp.lt.s32.totalorder %s19, 1
      %s339 = scalar_select %p338, %s19, 1
      %s340 = smul.addr %s339, 3
      %s341 = smul.addr %s340, 8
      %s342 = scalar_lea.vmem %s8, %s341
      %v343 = vld [vmem:[%s328] sm:$0xff]
      %v344 = vld [vmem:[%s328 + $0x8] sm:$0xff]
      %v345 = vld [vmem:[%s328 + $0x10] sm:$0xff]
      %v346 = vld [vmem:[%s328 + $0x18] sm:$0xff]
      %v347 = vld [vmem:[%s328 + $0x20] sm:$0xff]
      %v348 = vld [vmem:[%s328 + $0x28] sm:$0xff]
      %v349 = vld [vmem:[%s328 + $0x30] sm:$0xff]
      %v350 = vld [vmem:[%s328 + $0x38] sm:$0xff]
      %v351 = vld [vmem:[%s328 + $0x40] sm:$0xff]
      %v352 = vld [vmem:[%s328 + $0x48] sm:$0xff]
      %v353 = vld [vmem:[%s333] sm:$0xff]
      %v354 = vld [vmem:[%s333 + $0x8] sm:$0xff]
      %v355 = vld [vmem:[%s333 + $0x10] sm:$0xff]
      %v356 = vld [vmem:[%s333 + $0x18] sm:$0xff]
      %v357 = vld [vmem:[%s333 + $0x20] sm:$0xff]
      %v358 = vld [vmem:[%s333 + $0x28] sm:$0xff]
      %v359 = vld [vmem:[%s333 + $0x30] sm:$0xff]
      %v360 = vld [vmem:[%s333 + $0x38] sm:$0xff]
      %v361 = vld [vmem:[%s333 + $0x40] sm:$0xff]
      %v362 = vld [vmem:[%s333 + $0x48] sm:$0xff]
      %v363 = vld [vmem:[%s333 + $0x50] sm:$0xff]
      %v364 = vld [vmem:[%s333 + $0x58] sm:$0xff]
      %v365 = vld [vmem:[%s333 + $0x60] sm:$0xff]
      %v366 = vld [vmem:[%s333 + $0x68] sm:$0xff]
      %v367 = vld [vmem:[%s333 + $0x70] sm:$0xff]
      %v368 = vld [vmem:[%s333 + $0x78] sm:$0xff]
      %v369 = vld [vmem:[%s333 + $0x80] sm:$0xff]
      %v370 = vld [vmem:[%s337] sm:$0x3]
      %v371 = vld [vmem:[%s3] sm:$0xff]
      %v372 = vld [vmem:[%s3 + $0x8] sm:$0xff]
      %v373 = vld [vmem:[%s3 + $0x10] sm:$0xf]
      %vm374 = vcmp.eq.f32.partialorder %v370, 0.0
      %v375 = vld [vmem:[%s4] sm:$0xff]
      %v376 = vld [vmem:[%s4 + $0x8] sm:$0xff]
      %v377 = vld [vmem:[%s4 + $0x10] sm:$0xff]
      %v378 = vld [vmem:[%s4 + $0x18] sm:$0xff]
      %v379 = vld [vmem:[%s5] sm:$0x1]
      %v381 = vlaneseq
      %v382 = vshrl.u32 %v381, 7
      %v383 = vsub.s32 0, %v382
      %v384 = vrot.slane %v379, %v383
      %vm386 = vcmask 261120
      %v388 = vsel %vm386, %v343, 0
      %v391 = vsel %vm386, %v344, 0
      %v394 = vsel %vm386, %v345, 0
      %v397 = vsel %vm386, %v346, 0
      %v400 = vsel %vm386, %v347, 0
      %v403 = vsel %vm386, %v348, 0
      %v406 = vsel %vm386, %v349, 0
      %v409 = vsel %vm386, %v350, 0
      %v412 = vsel %vm386, %v351, 0
      %v415 = vsel %vm386, %v352, 0
      %417 = vmatprep.subr.mxu0 0.0
      %418 = vmatpush1.msra.mxu0 0.0
      %419 = vmatprep.subr.mxu0 0.0
      %420 = vmatpush1.msra.mxu0 0.0
      %421 = vmatprep.subr.mxu0 0.0
      %422 = vmatpush1.msra.mxu0 0.0
      %423 = vmatprep.subr.mxu0 0.0
      %424 = vmatpush1.msra.mxu0 0.0
      %425 = vmatprep.subr.mxu0 0.0
      %426 = vmatpush1.msra.mxu0 0.0
      %427 = vmatprep.subr.mxu0 0.0
      %428 = vmatpush1.msra.mxu0 0.0
      %429 = vmatprep.subr.mxu0 0.0
      %430 = vmatpush1.msra.mxu0 0.0
      %431 = vmatprep.subr.mxu0 0.0
      %432 = vmatpush1.msra.mxu0 0.0
      %433 = vmatprep.subr.mxu0 0.0
      %434 = vmatpush1.msra.mxu0 0.0
      %435 = vmatprep.subr.mxu0 0.0
      %436 = vmatpush1.msra.mxu0 0.0
      %437 = vmatprep.subr.mxu0 0.0
      %438 = vmatpush1.msra.mxu0 0.0
      %439 = vmatprep.subr.mxu0 0.0
      %440 = vmatpush1.msra.mxu0 0.0
      %441 = vmatprep.subr.mxu0 0.0
      %442 = vmatpush1.msra.mxu0 %v378
      %443 = vmatprep.subr.mxu0 0.0
      %444 = vmatpush1.msra.mxu0 %v377
      %445 = vmatprep.subr.mxu0 0.0
      %446 = vmatpush1.msra.mxu0 %v376
      %447 = vmatprep.subr.mxu0 0.0
      %448 = vmatpush1.msra.mxu0 %v375
      %449 = vmatprep.subr.mxu0 0.0
      %450 = vmatpush2.msra.mxu0 0.0
      %451 = vmatprep.subr.mxu0 0.0
      %452 = vmatpush2.msra.mxu0 0.0
      %453 = vmatprep.subr.mxu0 0.0
      %454 = vmatpush2.msra.mxu0 0.0
      %455 = vmatprep.subr.mxu0 0.0
      %456 = vmatpush2.msra.mxu0 0.0
      %457 = vmatprep.subr.mxu0 0.0
      %458 = vmatpush2.msra.mxu0 0.0
      %459 = vmatprep.subr.mxu0 0.0
      %460 = vmatpush2.msra.mxu0 0.0
      %461 = vmatprep.subr.mxu0 0.0
      %462 = vmatpush2.msra.mxu0 0.0
      %463 = vmatprep.subr.mxu0 0.0
      %464 = vmatpush2.msra.mxu0 0.0
      %465 = vmatprep.subr.mxu0 0.0
      %466 = vmatpush2.msra.mxu0 0.0
      %467 = vmatprep.subr.mxu0 0.0
      %468 = vmatpush2.msra.mxu0 0.0
      %469 = vmatprep.subr.mxu0 0.0
      %470 = vmatpush2.msra.mxu0 0.0
      %471 = vmatprep.subr.mxu0 0.0
      %472 = vmatpush2.msra.mxu0 0.0
      %473 = vmatprep.subr.mxu0 0.0
      %474 = vmatpush2.msra.mxu0 0.0
      %475 = vmatprep.subr.mxu0 0.0
      %476 = vmatpush2.msra.mxu0 0.0
      %477 = vmatprep.subr.mxu0 0.0
      %478 = vmatpush2.msra.mxu0 0.0
      %479 = vmatprep.subr.mxu0 0.0
      %480 = vmatpush2.msra.mxu0 0.0
      %481 = vmatprep.mubr.f32.mxu0 0.0
      %482 = vmatmul.mubr.f32.gmra.mxu0 %v388
      %v483 = vpop.f32.mrf.mxu0
      %v484 = vadd.f32 %v384, %v483
      %v485 = vpop.f32.mrf.mxu0
      %486 = vmatprep.mubr.f32.mxu0 0.0
      %487 = vmatmul.mubr.f32.gmra.mxu0 %v391
      %v488 = vpop.f32.mrf.mxu0
      %v489 = vadd.f32 %v384, %v488
      %v490 = vpop.f32.mrf.mxu0
      %491 = vmatprep.mubr.f32.mxu0 0.0
      %492 = vmatmul.mubr.f32.gmra.mxu0 %v394
      %v493 = vpop.f32.mrf.mxu0
      %v494 = vadd.f32 %v384, %v493
      %v495 = vpop.f32.mrf.mxu0
      %496 = vmatprep.mubr.f32.mxu0 0.0
      %497 = vmatmul.mubr.f32.gmra.mxu0 %v397
      %v498 = vpop.f32.mrf.mxu0
      %v499 = vadd.f32 %v384, %v498
      %v500 = vpop.f32.mrf.mxu0
      %501 = vmatprep.mubr.f32.mxu0 0.0
      %502 = vmatmul.mubr.f32.gmra.mxu0 %v400
      %v503 = vpop.f32.mrf.mxu0
      %v504 = vadd.f32 %v384, %v503
      %v505 = vpop.f32.mrf.mxu0
      %506 = vmatprep.mubr.f32.mxu0 0.0
      %507 = vmatmul.mubr.f32.gmra.mxu0 %v403
      %v508 = vpop.f32.mrf.mxu0
      %v509 = vadd.f32 %v384, %v508
      %v510 = vpop.f32.mrf.mxu0
      %511 = vmatprep.mubr.f32.mxu0 0.0
      %512 = vmatmul.mubr.f32.gmra.mxu0 %v406
      %v513 = vpop.f32.mrf.mxu0
      %v514 = vadd.f32 %v384, %v513
      %v515 = vpop.f32.mrf.mxu0
      %516 = vmatprep.mubr.f32.mxu0 0.0
      %517 = vmatmul.mubr.f32.gmra.mxu0 %v409
      %v518 = vpop.f32.mrf.mxu0
      %v519 = vadd.f32 %v384, %v518
      %v520 = vpop.f32.mrf.mxu0
      %521 = vmatprep.mubr.f32.mxu0 0.0
      %522 = vmatmul.mubr.f32.gmra.mxu0 %v412
      %v523 = vpop.f32.mrf.mxu0
      %v524 = vadd.f32 %v384, %v523
      %v525 = vpop.f32.mrf.mxu0
      %526 = vmatprep.mubr.f32.mxu0 0.0
      %527 = vmatmul.mubr.f32.gmra.mxu0 %v415
      %v528 = vpop.f32.mrf.mxu0
      %v529 = vadd.f32 %v384, %v528
      %v530 = vpop.f32.mrf.mxu0
      %531 = vdwg.mxu0
      %v532 = vld [vmem:[%s6] sm:$0xff]
      %v533 = vld [vmem:[%s6 + $0x8] sm:$0xff]
      %v534 = vld [vmem:[%s6 + $0x10] sm:$0xff]
      %v535 = vld [vmem:[%s6 + $0x18] sm:$0xff]
      %v536 = vld [vmem:[%s7] sm:$0x1]
      %v538 = vlaneseq
      %v539 = vshrl.u32 %v538, 7
      %v540 = vsub.s32 0, %v539
      %v541 = vrot.slane %v536, %v540
      %v544 = vsel %vm386, %v353, 0
      %v547 = vsel %vm386, %v354, 0
      %v550 = vsel %vm386, %v355, 0
      %v553 = vsel %vm386, %v356, 0
      %v556 = vsel %vm386, %v357, 0
      %v559 = vsel %vm386, %v358, 0
      %v562 = vsel %vm386, %v359, 0
      %v565 = vsel %vm386, %v360, 0
      %v568 = vsel %vm386, %v361, 0
      %v571 = vsel %vm386, %v362, 0
      %v574 = vsel %vm386, %v363, 0
      %v577 = vsel %vm386, %v364, 0
      %v580 = vsel %vm386, %v365, 0
      %v583 = vsel %vm386, %v366, 0
      %v586 = vsel %vm386, %v367, 0
      %v589 = vsel %vm386, %v368, 0
      %v592 = vsel %vm386, %v369, 0
      %594 = vmatprep.subr.mxu0 0.0
      %595 = vmatpush1.msra.mxu0 0.0
      %596 = vmatprep.subr.mxu0 0.0
      %597 = vmatpush1.msra.mxu0 0.0
      %598 = vmatprep.subr.mxu0 0.0
      %599 = vmatpush1.msra.mxu0 0.0
      %600 = vmatprep.subr.mxu0 0.0
      %601 = vmatpush1.msra.mxu0 0.0
      %602 = vmatprep.subr.mxu0 0.0
      %603 = vmatpush1.msra.mxu0 0.0
      %604 = vmatprep.subr.mxu0 0.0
      %605 = vmatpush1.msra.mxu0 0.0
      %606 = vmatprep.subr.mxu0 0.0
      %607 = vmatpush1.msra.mxu0 0.0
      %608 = vmatprep.subr.mxu0 0.0
      %609 = vmatpush1.msra.mxu0 0.0
      %610 = vmatprep.subr.mxu0 0.0
      %611 = vmatpush1.msra.mxu0 0.0
      %612 = vmatprep.subr.mxu0 0.0
      %613 = vmatpush1.msra.mxu0 0.0
      %614 = vmatprep.subr.mxu0 0.0
      %615 = vmatpush1.msra.mxu0 0.0
      %616 = vmatprep.subr.mxu0 0.0
      %617 = vmatpush1.msra.mxu0 0.0
      %618 = vmatprep.subr.mxu0 0.0
      %619 = vmatpush1.msra.mxu0 %v535
      %620 = vmatprep.subr.mxu0 0.0
      %621 = vmatpush1.msra.mxu0 %v534
      %622 = vmatprep.subr.mxu0 0.0
      %623 = vmatpush1.msra.mxu0 %v533
      %624 = vmatprep.subr.mxu0 0.0
      %625 = vmatpush1.msra.mxu0 %v532
      %626 = vmatprep.subr.mxu0 0.0
      %627 = vmatpush2.msra.mxu0 0.0
      %628 = vmatprep.subr.mxu0 0.0
      %629 = vmatpush2.msra.mxu0 0.0
      %630 = vmatprep.subr.mxu0 0.0
      %631 = vmatpush2.msra.mxu0 0.0
      %632 = vmatprep.subr.mxu0 0.0
      %633 = vmatpush2.msra.mxu0 0.0
      %634 = vmatprep.subr.mxu0 0.0
      %635 = vmatpush2.msra.mxu0 0.0
      %636 = vmatprep.subr.mxu0 0.0
      %637 = vmatpush2.msra.mxu0 0.0
      %638 = vmatprep.subr.mxu0 0.0
      %639 = vmatpush2.msra.mxu0 0.0
      %640 = vmatprep.subr.mxu0 0.0
      %641 = vmatpush2.msra.mxu0 0.0
      %642 = vmatprep.subr.mxu0 0.0
      %643 = vmatpush2.msra.mxu0 0.0
      %644 = vmatprep.subr.mxu0 0.0
      %645 = vmatpush2.msra.mxu0 0.0
      %646 = vmatprep.subr.mxu0 0.0
      %647 = vmatpush2.msra.mxu0 0.0
      %648 = vmatprep.subr.mxu0 0.0
      %649 = vmatpush2.msra.mxu0 0.0
      %650 = vmatprep.subr.mxu0 0.0
      %651 = vmatpush2.msra.mxu0 0.0
      %652 = vmatprep.subr.mxu0 0.0
      %653 = vmatpush2.msra.mxu0 0.0
      %654 = vmatprep.subr.mxu0 0.0
      %655 = vmatpush2.msra.mxu0 0.0
      %656 = vmatprep.subr.mxu0 0.0
      %657 = vmatpush2.msra.mxu0 0.0
      %658 = vmatprep.mubr.f32.mxu0 0.0
      %659 = vmatmul.mubr.f32.gmra.mxu0 %v544
      %v660 = vpop.f32.mrf.mxu0
      %v661 = vadd.f32 %v541, %v660
      %v662 = vpop.f32.mrf.mxu0
      %663 = vmatprep.mubr.f32.mxu0 0.0
      %664 = vmatmul.mubr.f32.gmra.mxu0 %v547
      %v665 = vpop.f32.mrf.mxu0
      %v666 = vadd.f32 %v541, %v665
      %v667 = vpop.f32.mrf.mxu0
      %668 = vmatprep.mubr.f32.mxu0 0.0
      %669 = vmatmul.mubr.f32.gmra.mxu0 %v550
      %v670 = vpop.f32.mrf.mxu0
      %v671 = vadd.f32 %v541, %v670
      %v672 = vpop.f32.mrf.mxu0
      %673 = vmatprep.mubr.f32.mxu0 0.0
      %674 = vmatmul.mubr.f32.gmra.mxu0 %v553
      %v675 = vpop.f32.mrf.mxu0
      %v676 = vadd.f32 %v541, %v675
      %v677 = vpop.f32.mrf.mxu0
      %678 = vmatprep.mubr.f32.mxu0 0.0
      %679 = vmatmul.mubr.f32.gmra.mxu0 %v556
      %v680 = vpop.f32.mrf.mxu0
      %v681 = vadd.f32 %v541, %v680
      %v682 = vpop.f32.mrf.mxu0
      %683 = vmatprep.mubr.f32.mxu0 0.0
      %684 = vmatmul.mubr.f32.gmra.mxu0 %v559
      %v685 = vpop.f32.mrf.mxu0
      %v686 = vadd.f32 %v541, %v685
      %v687 = vpop.f32.mrf.mxu0
      %688 = vmatprep.mubr.f32.mxu0 0.0
      %689 = vmatmul.mubr.f32.gmra.mxu0 %v562
      %v690 = vpop.f32.mrf.mxu0
      %v691 = vadd.f32 %v541, %v690
      %v692 = vpop.f32.mrf.mxu0
      %693 = vmatprep.mubr.f32.mxu0 0.0
      %694 = vmatmul.mubr.f32.gmra.mxu0 %v565
      %v695 = vpop.f32.mrf.mxu0
      %v696 = vadd.f32 %v541, %v695
      %v697 = vpop.f32.mrf.mxu0
      %698 = vmatprep.mubr.f32.mxu0 0.0
      %699 = vmatmul.mubr.f32.gmra.mxu0 %v568
      %v700 = vpop.f32.mrf.mxu0
      %v701 = vadd.f32 %v541, %v700
      %v702 = vpop.f32.mrf.mxu0
      %703 = vmatprep.mubr.f32.mxu0 0.0
      %704 = vmatmul.mubr.f32.gmra.mxu0 %v571
      %v705 = vpop.f32.mrf.mxu0
      %v706 = vadd.f32 %v541, %v705
      %v707 = vpop.f32.mrf.mxu0
      %708 = vmatprep.mubr.f32.mxu0 0.0
      %709 = vmatmul.mubr.f32.gmra.mxu0 %v574
      %v710 = vpop.f32.mrf.mxu0
      %v711 = vadd.f32 %v541, %v710
      %v712 = vpop.f32.mrf.mxu0
      %713 = vmatprep.mubr.f32.mxu0 0.0
      %714 = vmatmul.mubr.f32.gmra.mxu0 %v577
      %v715 = vpop.f32.mrf.mxu0
      %v716 = vadd.f32 %v541, %v715
      %v717 = vpop.f32.mrf.mxu0
      %718 = vmatprep.mubr.f32.mxu0 0.0
      %719 = vmatmul.mubr.f32.gmra.mxu0 %v580
      %v720 = vpop.f32.mrf.mxu0
      %v721 = vadd.f32 %v541, %v720
      %v722 = vpop.f32.mrf.mxu0
      %723 = vmatprep.mubr.f32.mxu0 0.0
      %724 = vmatmul.mubr.f32.gmra.mxu0 %v583
      %v725 = vpop.f32.mrf.mxu0
      %v726 = vadd.f32 %v541, %v725
      %v727 = vpop.f32.mrf.mxu0
      %728 = vmatprep.mubr.f32.mxu0 0.0
      %729 = vmatmul.mubr.f32.gmra.mxu0 %v586
      %v730 = vpop.f32.mrf.mxu0
      %v731 = vadd.f32 %v541, %v730
      %v732 = vpop.f32.mrf.mxu0
      %733 = vmatprep.mubr.f32.mxu0 0.0
      %734 = vmatmul.mubr.f32.gmra.mxu0 %v589
      %v735 = vpop.f32.mrf.mxu0
      %v736 = vadd.f32 %v541, %v735
      %v737 = vpop.f32.mrf.mxu0
      %738 = vmatprep.mubr.f32.mxu0 0.0
      %739 = vmatmul.mubr.f32.gmra.mxu0 %v592
      %v740 = vpop.f32.mrf.mxu0
      %v741 = vadd.f32 %v541, %v740
      %v742 = vpop.f32.mrf.mxu0
      %743 = vdwg.mxu0
      %vm744 = vcmask 64512
      %v746 = vsel %vm744, %v484, 0
      %v749 = vsel %vm744, %v489, 0
      %v752 = vsel %vm744, %v494, 0
      %v755 = vsel %vm744, %v499, 0
      %v758 = vsel %vm744, %v504, 0
      %v761 = vsel %vm744, %v509, 0
      %v764 = vsel %vm744, %v514, 0
      %v767 = vsel %vm744, %v519, 0
      %v770 = vsel %vm744, %v524, 0
      %v773 = vsel %vm744, %v529, 0
      %v776 = vsel %vm744, %v661, 0
      %v779 = vsel %vm744, %v666, 0
      %v782 = vsel %vm744, %v671, 0
      %v785 = vsel %vm744, %v676, 0
      %v788 = vsel %vm744, %v681, 0
      %v791 = vsel %vm744, %v686, 0
      %v794 = vsel %vm744, %v691, 0
      %v797 = vsel %vm744, %v696, 0
      %v800 = vsel %vm744, %v701, 0
      %v803 = vsel %vm744, %v706, 0
      %v806 = vsel %vm744, %v711, 0
      %v809 = vsel %vm744, %v716, 0
      %v812 = vsel %vm744, %v721, 0
      %v815 = vsel %vm744, %v726, 0
      %v818 = vsel %vm744, %v731, 0
      %v821 = vsel %vm744, %v736, 0
      %v824 = vsel %vm744, %v741, 0
      %826 = vmatprep.subr.mxu0 0.0
      %827 = vmatpush1.xpose.msra.mxu0 %v821
      %828 = vmatprep.subr.mxu0 0.0
      %829 = vmatpush1.xpose.msra.mxu0 %v818
      %830 = vmatprep.subr.mxu0 0.0
      %831 = vmatpush1.xpose.msra.mxu0 %v815
      %832 = vmatprep.subr.mxu0 0.0
      %833 = vmatpush1.xpose.msra.mxu0 %v812
      %834 = vmatprep.subr.mxu0 0.0
      %835 = vmatpush1.xpose.msra.mxu0 %v809
      %836 = vmatprep.subr.mxu0 0.0
      %837 = vmatpush1.xpose.msra.mxu0 %v806
      %838 = vmatprep.subr.mxu0 0.0
      %839 = vmatpush1.xpose.msra.mxu0 %v803
      %840 = vmatprep.subr.mxu0 0.0
      %841 = vmatpush1.xpose.msra.mxu0 %v800
      %842 = vmatprep.subr.mxu0 0.0
      %843 = vmatpush1.xpose.msra.mxu0 %v797
      %844 = vmatprep.subr.mxu0 0.0
      %845 = vmatpush1.xpose.msra.mxu0 %v794
      %846 = vmatprep.subr.mxu0 0.0
      %847 = vmatpush1.xpose.msra.mxu0 %v791
      %848 = vmatprep.subr.mxu0 0.0
      %849 = vmatpush1.xpose.msra.mxu0 %v788
      %850 = vmatprep.subr.mxu0 0.0
      %851 = vmatpush1.xpose.msra.mxu0 %v785
      %852 = vmatprep.subr.mxu0 0.0
      %853 = vmatpush1.xpose.msra.mxu0 %v782
      %854 = vmatprep.subr.mxu0 0.0
      %855 = vmatpush1.xpose.msra.mxu0 %v779
      %856 = vmatprep.subr.mxu0 0.0
      %857 = vmatpush1.xpose.msra.mxu0 %v776
      %858 = vmatprep.subr.mxu0 0.0
      %859 = vmatpush2.xpose.msra.mxu0 0.0
      %860 = vmatprep.subr.mxu0 0.0
      %861 = vmatpush2.xpose.msra.mxu0 0.0
      %862 = vmatprep.subr.mxu0 0.0
      %863 = vmatpush2.xpose.msra.mxu0 0.0
      %864 = vmatprep.subr.mxu0 0.0
      %865 = vmatpush2.xpose.msra.mxu0 0.0
      %866 = vmatprep.subr.mxu0 0.0
      %867 = vmatpush2.xpose.msra.mxu0 0.0
      %868 = vmatprep.subr.mxu0 0.0
      %869 = vmatpush2.xpose.msra.mxu0 0.0
      %870 = vmatprep.subr.mxu0 0.0
      %871 = vmatpush2.xpose.msra.mxu0 0.0
      %872 = vmatprep.subr.mxu0 0.0
      %873 = vmatpush2.xpose.msra.mxu0 0.0
      %874 = vmatprep.subr.mxu0 0.0
      %875 = vmatpush2.xpose.msra.mxu0 0.0
      %876 = vmatprep.subr.mxu0 0.0
      %877 = vmatpush2.xpose.msra.mxu0 0.0
      %878 = vmatprep.subr.mxu0 0.0
      %879 = vmatpush2.xpose.msra.mxu0 0.0
      %880 = vmatprep.subr.mxu0 0.0
      %881 = vmatpush2.xpose.msra.mxu0 0.0
      %882 = vmatprep.subr.mxu0 0.0
      %883 = vmatpush2.xpose.msra.mxu0 0.0
      %884 = vmatprep.subr.mxu0 0.0
      %885 = vmatpush2.xpose.msra.mxu0 0.0
      %886 = vmatprep.subr.mxu0 0.0
      %887 = vmatpush2.xpose.msra.mxu0 0.0
      %888 = vmatprep.subr.mxu0 0.0
      %889 = vmatpush2.xpose.msra.mxu0 %v824
      %890 = vmatprep.mubr.f32.mxu0 0.0
      %891 = vmatmul.mubr.f32.gmra.mxu0 %v746
      %v892 = vpop.f32.mrf.mxu0
      %v893 = vadd.f32 0.0, %v892
      %v894 = vpop.f32.mrf.mxu0
      %v895 = vadd.f32 0.0, %v894
      %896 = vmatprep.mubr.f32.mxu0 0.0
      %897 = vmatmul.mubr.f32.gmra.mxu0 %v749
      %v898 = vpop.f32.mrf.mxu0
      %v899 = vadd.f32 0.0, %v898
      %v900 = vpop.f32.mrf.mxu0
      %v901 = vadd.f32 0.0, %v900
      %902 = vmatprep.mubr.f32.mxu0 0.0
      %903 = vmatmul.mubr.f32.gmra.mxu0 %v752
      %v904 = vpop.f32.mrf.mxu0
      %v905 = vadd.f32 0.0, %v904
      %v906 = vpop.f32.mrf.mxu0
      %v907 = vadd.f32 0.0, %v906
      %908 = vmatprep.mubr.f32.mxu0 0.0
      %909 = vmatmul.mubr.f32.gmra.mxu0 %v755
      %v910 = vpop.f32.mrf.mxu0
      %v911 = vadd.f32 0.0, %v910
      %v912 = vpop.f32.mrf.mxu0
      %v913 = vadd.f32 0.0, %v912
      %914 = vmatprep.mubr.f32.mxu0 0.0
      %915 = vmatmul.mubr.f32.gmra.mxu0 %v758
      %v916 = vpop.f32.mrf.mxu0
      %v917 = vadd.f32 0.0, %v916
      %v918 = vpop.f32.mrf.mxu0
      %v919 = vadd.f32 0.0, %v918
      %920 = vmatprep.mubr.f32.mxu0 0.0
      %921 = vmatmul.mubr.f32.gmra.mxu0 %v761
      %v922 = vpop.f32.mrf.mxu0
      %v923 = vadd.f32 0.0, %v922
      %v924 = vpop.f32.mrf.mxu0
      %v925 = vadd.f32 0.0, %v924
      %926 = vmatprep.mubr.f32.mxu0 0.0
      %927 = vmatmul.mubr.f32.gmra.mxu0 %v764
      %v928 = vpop.f32.mrf.mxu0
      %v929 = vadd.f32 0.0, %v928
      %v930 = vpop.f32.mrf.mxu0
      %v931 = vadd.f32 0.0, %v930
      %932 = vmatprep.mubr.f32.mxu0 0.0
      %933 = vmatmul.mubr.f32.gmra.mxu0 %v767
      %v934 = vpop.f32.mrf.mxu0
      %v935 = vadd.f32 0.0, %v934
      %v936 = vpop.f32.mrf.mxu0
      %v937 = vadd.f32 0.0, %v936
      %938 = vmatprep.mubr.f32.mxu0 0.0
      %939 = vmatmul.mubr.f32.gmra.mxu0 %v770
      %v940 = vpop.f32.mrf.mxu0
      %v941 = vadd.f32 0.0, %v940
      %v942 = vpop.f32.mrf.mxu0
      %v943 = vadd.f32 0.0, %v942
      %944 = vmatprep.mubr.f32.mxu0 0.0
      %945 = vmatmul.mubr.f32.gmra.mxu0 %v773
      %v946 = vpop.f32.mrf.mxu0
      %v947 = vadd.f32 0.0, %v946
      %v948 = vpop.f32.mrf.mxu0
      %v949 = vadd.f32 0.0, %v948
      %950 = vdwg.mxu0
      %v951 = vmul.f32 %v893, 0.35355338
      %v952 = vmul.f32 %v895, 0.35355338
      %v953 = vmul.f32 %v899, 0.35355338
      %v954 = vmul.f32 %v901, 0.35355338
      %v955 = vmul.f32 %v905, 0.35355338
      %v956 = vmul.f32 %v907, 0.35355338
      %v957 = vmul.f32 %v911, 0.35355338
      %v958 = vmul.f32 %v913, 0.35355338
      %v959 = vmul.f32 %v917, 0.35355338
      %v960 = vmul.f32 %v919, 0.35355338
      %v961 = vmul.f32 %v923, 0.35355338
      %v962 = vmul.f32 %v925, 0.35355338
      %v963 = vmul.f32 %v929, 0.35355338
      %v964 = vmul.f32 %v931, 0.35355338
      %v965 = vmul.f32 %v935, 0.35355338
      %v966 = vmul.f32 %v937, 0.35355338
      %v967 = vmul.f32 %v941, 0.35355338
      %v968 = vmul.f32 %v943, 0.35355338
      %v969 = vmul.f32 %v947, 0.35355338
      %v970 = vmul.f32 %v949, 0.35355338
      %v971 = vsel %vm374, 1, 0
      %v972 = vlaneseq
      %v973 = vshrl.u32 %v972, 7
      %v974 = vsub.s32 0, %v973
      %v975 = vrot.slane %v971, %v974
      %v976 = vlaneseq
      %v977 = vshrl.u32 %v976, 7
      %v978 = vsub.s32 1, %v977
      %v979 = vrot.slane %v971, %v978
      %vm980 = vcmp.eq.s32.totalorder %v975, 1
      %vm981 = vcmp.eq.s32.totalorder %v979, 1
      %v982 = vsel %vm980, -1e+09, %v951
      %v983 = vsel %vm981, -1e+09, %v952
      %v984 = vsel %vm980, -1e+09, %v953
      %v985 = vsel %vm981, -1e+09, %v954
      %v986 = vsel %vm980, -1e+09, %v955
      %v987 = vsel %vm981, -1e+09, %v956
      %v988 = vsel %vm980, -1e+09, %v957
      %v989 = vsel %vm981, -1e+09, %v958
      %v990 = vsel %vm980, -1e+09, %v959
      %v991 = vsel %vm981, -1e+09, %v960
      %v992 = vsel %vm980, -1e+09, %v961
      %v993 = vsel %vm981, -1e+09, %v962
      %v994 = vsel %vm980, -1e+09, %v963
      %v995 = vsel %vm981, -1e+09, %v964
      %v996 = vsel %vm980, -1e+09, %v965
      %v997 = vsel %vm981, -1e+09, %v966
      %v998 = vsel %vm980, -1e+09, %v967
      %v999 = vsel %vm981, -1e+09, %v968
      %v1000 = vsel %vm980, -1e+09, %v969
      %v1001 = vsel %vm981, -1e+09, %v970
      %v1002 = vsel %vm744, %v983, -inf
      %v1003 = vmax.f32 %v982, %v1002
      %1004 = vmax.xlane.f32.xlu0 %v1003
      %v1005 = vpop.xlane.xlu0 %1004
      %v1006 = vsel %vm744, %v985, -inf
      %v1007 = vmax.f32 %v984, %v1006
      %1008 = vmax.xlane.f32.xlu0 %v1007
      %v1009 = vpop.xlane.xlu0 %1008
      %v1010 = vsel %vm744, %v987, -inf
      %v1011 = vmax.f32 %v986, %v1010
      %1012 = vmax.xlane.f32.xlu0 %v1011
      %v1013 = vpop.xlane.xlu0 %1012
      %v1014 = vsel %vm744, %v989, -inf
      %v1015 = vmax.f32 %v988, %v1014
      %1016 = vmax.xlane.f32.xlu0 %v1015
      %v1017 = vpop.xlane.xlu0 %1016
      %v1018 = vsel %vm744, %v991, -inf
      %v1019 = vmax.f32 %v990, %v1018
      %1020 = vmax.xlane.f32.xlu0 %v1019
      %v1021 = vpop.xlane.xlu0 %1020
      %v1022 = vsel %vm744, %v993, -inf
      %v1023 = vmax.f32 %v992, %v1022
      %1024 = vmax.xlane.f32.xlu0 %v1023
      %v1025 = vpop.xlane.xlu0 %1024
      %v1026 = vsel %vm744, %v995, -inf
      %v1027 = vmax.f32 %v994, %v1026
      %1028 = vmax.xlane.f32.xlu0 %v1027
      %v1029 = vpop.xlane.xlu0 %1028
      %v1030 = vsel %vm744, %v997, -inf
      %v1031 = vmax.f32 %v996, %v1030
      %1032 = vmax.xlane.f32.xlu0 %v1031
      %v1033 = vpop.xlane.xlu0 %1032
      %v1034 = vsel %vm744, %v999, -inf
      %v1035 = vmax.f32 %v998, %v1034
      %1036 = vmax.xlane.f32.xlu0 %v1035
      %v1037 = vpop.xlane.xlu0 %1036
      %v1038 = vsel %vm744, %v1001, -inf
      %v1039 = vmax.f32 %v1000, %v1038
      %1040 = vmax.xlane.f32.xlu0 %v1039
      %v1041 = vpop.xlane.xlu0 %1040
      %v1042 = vsub.f32 %v982, %v1005
      %v1043 = vsub.f32 %v983, %v1005
      %v1044 = vsub.f32 %v984, %v1009
      %v1045 = vsub.f32 %v985, %v1009
      %v1046 = vsub.f32 %v986, %v1013
      %v1047 = vsub.f32 %v987, %v1013
      %v1048 = vsub.f32 %v988, %v1017
      %v1049 = vsub.f32 %v989, %v1017
      %v1050 = vsub.f32 %v990, %v1021
      %v1051 = vsub.f32 %v991, %v1021
      %v1052 = vsub.f32 %v992, %v1025
      %v1053 = vsub.f32 %v993, %v1025
      %v1054 = vsub.f32 %v994, %v1029
      %v1055 = vsub.f32 %v995, %v1029
      %v1056 = vsub.f32 %v996, %v1033
      %v1057 = vsub.f32 %v997, %v1033
      %v1058 = vsub.f32 %v998, %v1037
      %v1059 = vsub.f32 %v999, %v1037
      %v1060 = vsub.f32 %v1000, %v1041
      %v1061 = vsub.f32 %v1001, %v1041
      %v1062 = vmul.f32 %v1042, 1.442695
      %v1063 = vpow.pop %v1062
      %v1064 = vmul.f32 %v1043, 1.442695
      %v1065 = vpow.pop %v1064
      %v1066 = vmul.f32 %v1044, 1.442695
      %v1067 = vpow.pop %v1066
      %v1068 = vmul.f32 %v1045, 1.442695
      %v1069 = vpow.pop %v1068
      %v1070 = vmul.f32 %v1046, 1.442695
      %v1071 = vpow.pop %v1070
      %v1072 = vmul.f32 %v1047, 1.442695
      %v1073 = vpow.pop %v1072
      %v1074 = vmul.f32 %v1048, 1.442695
      %v1075 = vpow.pop %v1074
      %v1076 = vmul.f32 %v1049, 1.442695
      %v1077 = vpow.pop %v1076
      %v1078 = vmul.f32 %v1050, 1.442695
      %v1079 = vpow.pop %v1078
      %v1080 = vmul.f32 %v1051, 1.442695
      %v1081 = vpow.pop %v1080
      %v1082 = vmul.f32 %v1052, 1.442695
      %v1083 = vpow.pop %v1082
      %v1084 = vmul.f32 %v1053, 1.442695
      %v1085 = vpow.pop %v1084
      %v1086 = vmul.f32 %v1054, 1.442695
      %v1087 = vpow.pop %v1086
      %v1088 = vmul.f32 %v1055, 1.442695
      %v1089 = vpow.pop %v1088
      %v1090 = vmul.f32 %v1056, 1.442695
      %v1091 = vpow.pop %v1090
      %v1092 = vmul.f32 %v1057, 1.442695
      %v1093 = vpow.pop %v1092
      %v1094 = vmul.f32 %v1058, 1.442695
      %v1095 = vpow.pop %v1094
      %v1096 = vmul.f32 %v1059, 1.442695
      %v1097 = vpow.pop %v1096
      %v1098 = vmul.f32 %v1060, 1.442695
      %v1099 = vpow.pop %v1098
      %v1100 = vmul.f32 %v1061, 1.442695
      %v1101 = vpow.pop %v1100
      %v1102 = vsel %vm744, %v1065, 0.0
      %v1103 = vadd.f32 %v1063, %v1102
      %1104 = vadd.xlane.f32.xlu0 %v1103
      %v1105 = vpop.xlane.xlu0 %1104
      %v1106 = vsel %vm744, %v1069, 0.0
      %v1107 = vadd.f32 %v1067, %v1106
      %1108 = vadd.xlane.f32.xlu0 %v1107
      %v1109 = vpop.xlane.xlu0 %1108
      %v1110 = vsel %vm744, %v1073, 0.0
      %v1111 = vadd.f32 %v1071, %v1110
      %1112 = vadd.xlane.f32.xlu0 %v1111
      %v1113 = vpop.xlane.xlu0 %1112
      %v1114 = vsel %vm744, %v1077, 0.0
      %v1115 = vadd.f32 %v1075, %v1114
      %1116 = vadd.xlane.f32.xlu0 %v1115
      %v1117 = vpop.xlane.xlu0 %1116
      %v1118 = vsel %vm744, %v1081, 0.0
      %v1119 = vadd.f32 %v1079, %v1118
      %1120 = vadd.xlane.f32.xlu0 %v1119
      %v1121 = vpop.xlane.xlu0 %1120
      %v1122 = vsel %vm744, %v1085, 0.0
      %v1123 = vadd.f32 %v1083, %v1122
      %1124 = vadd.xlane.f32.xlu0 %v1123
      %v1125 = vpop.xlane.xlu0 %1124
      %v1126 = vsel %vm744, %v1089, 0.0
      %v1127 = vadd.f32 %v1087, %v1126
      %1128 = vadd.xlane.f32.xlu0 %v1127
      %v1129 = vpop.xlane.xlu0 %1128
      %v1130 = vsel %vm744, %v1093, 0.0
      %v1131 = vadd.f32 %v1091, %v1130
      %1132 = vadd.xlane.f32.xlu0 %v1131
      %v1133 = vpop.xlane.xlu0 %1132
      %v1134 = vsel %vm744, %v1097, 0.0
      %v1135 = vadd.f32 %v1095, %v1134
      %1136 = vadd.xlane.f32.xlu0 %v1135
      %v1137 = vpop.xlane.xlu0 %1136
      %v1138 = vsel %vm744, %v1101, 0.0
      %v1139 = vadd.f32 %v1099, %v1138
      %1140 = vadd.xlane.f32.xlu0 %v1139
      %v1141 = vpop.xlane.xlu0 %1140
      %v1142 = vrcp.pop %v1105
      %v1143 = vmul.f32 %v1063, %v1142
      %v1144 = vmul.f32 %v1065, %v1142
      %v1145 = vrcp.pop %v1109
      %v1146 = vmul.f32 %v1067, %v1145
      %v1147 = vmul.f32 %v1069, %v1145
      %v1148 = vrcp.pop %v1113
      %v1149 = vmul.f32 %v1071, %v1148
      %v1150 = vmul.f32 %v1073, %v1148
      %v1151 = vrcp.pop %v1117
      %v1152 = vmul.f32 %v1075, %v1151
      %v1153 = vmul.f32 %v1077, %v1151
      %v1154 = vrcp.pop %v1121
      %v1155 = vmul.f32 %v1079, %v1154
      %v1156 = vmul.f32 %v1081, %v1154
      %v1157 = vrcp.pop %v1125
      %v1158 = vmul.f32 %v1083, %v1157
      %v1159 = vmul.f32 %v1085, %v1157
      %v1160 = vrcp.pop %v1129
      %v1161 = vmul.f32 %v1087, %v1160
      %v1162 = vmul.f32 %v1089, %v1160
      %v1163 = vrcp.pop %v1133
      %v1164 = vmul.f32 %v1091, %v1163
      %v1165 = vmul.f32 %v1093, %v1163
      %v1166 = vrcp.pop %v1137
      %v1167 = vmul.f32 %v1095, %v1166
      %v1168 = vmul.f32 %v1097, %v1166
      %v1169 = vrcp.pop %v1141
      %v1170 = vmul.f32 %v1099, %v1169
      %v1171 = vmul.f32 %v1101, %v1169
      %1172 = vrot.lane.b32.xlu0 %v661, 96
      %v1173 = vpop.permute.xlu0 %1172
      %1174 = vrot.lane.b32.xlu0 %v666, 96
      %v1175 = vpop.permute.xlu0 %1174
      %1176 = vrot.lane.b32.xlu0 %v671, 96
      %v1177 = vpop.permute.xlu0 %1176
      %1178 = vrot.lane.b32.xlu0 %v676, 96
      %v1179 = vpop.permute.xlu0 %1178
      %1180 = vrot.lane.b32.xlu0 %v681, 96
      %v1181 = vpop.permute.xlu0 %1180
      %1182 = vrot.lane.b32.xlu0 %v686, 96
      %v1183 = vpop.permute.xlu0 %1182
      %1184 = vrot.lane.b32.xlu0 %v691, 96
      %v1185 = vpop.permute.xlu0 %1184
      %1186 = vrot.lane.b32.xlu0 %v696, 96
      %v1187 = vpop.permute.xlu0 %1186
      %1188 = vrot.lane.b32.xlu0 %v701, 96
      %v1189 = vpop.permute.xlu0 %1188
      %1190 = vrot.lane.b32.xlu0 %v706, 96
      %v1191 = vpop.permute.xlu0 %1190
      %1192 = vrot.lane.b32.xlu0 %v711, 96
      %v1193 = vpop.permute.xlu0 %1192
      %1194 = vrot.lane.b32.xlu0 %v716, 96
      %v1195 = vpop.permute.xlu0 %1194
      %1196 = vrot.lane.b32.xlu0 %v721, 96
      %v1197 = vpop.permute.xlu0 %1196
      %1198 = vrot.lane.b32.xlu0 %v726, 96
      %v1199 = vpop.permute.xlu0 %1198
      %1200 = vrot.lane.b32.xlu0 %v731, 96
      %v1201 = vpop.permute.xlu0 %1200
      %1202 = vrot.lane.b32.xlu0 %v736, 96
      %v1203 = vpop.permute.xlu0 %1202
      %1204 = vrot.lane.b32.xlu0 %v741, 96
      %v1205 = vpop.permute.xlu0 %1204
      %v1224 = vsel %vm744, %v1144, 0
      %v1227 = vsel %vm744, %v1147, 0
      %v1230 = vsel %vm744, %v1150, 0
      %v1233 = vsel %vm744, %v1153, 0
      %v1236 = vsel %vm744, %v1156, 0
      %v1239 = vsel %vm744, %v1159, 0
      %v1242 = vsel %vm744, %v1162, 0
      %v1245 = vsel %vm744, %v1165, 0
      %v1248 = vsel %vm744, %v1168, 0
      %v1251 = vsel %vm744, %v1171, 0
      %1253 = vmatprep.subr.mxu0 0.0
      %1254 = vmatpush1.msra.mxu0 %v1203
      %1255 = vmatprep.subr.mxu0 0.0
      %1256 = vmatpush1.msra.mxu0 %v1201
      %1257 = vmatprep.subr.mxu0 0.0
      %1258 = vmatpush1.msra.mxu0 %v1199
      %1259 = vmatprep.subr.mxu0 0.0
      %1260 = vmatpush1.msra.mxu0 %v1197
      %1261 = vmatprep.subr.mxu0 0.0
      %1262 = vmatpush1.msra.mxu0 %v1195
      %1263 = vmatprep.subr.mxu0 0.0
      %1264 = vmatpush1.msra.mxu0 %v1193
      %1265 = vmatprep.subr.mxu0 0.0
      %1266 = vmatpush1.msra.mxu0 %v1191
      %1267 = vmatprep.subr.mxu0 0.0
      %1268 = vmatpush1.msra.mxu0 %v1189
      %1269 = vmatprep.subr.mxu0 0.0
      %1270 = vmatpush1.msra.mxu0 %v1187
      %1271 = vmatprep.subr.mxu0 0.0
      %1272 = vmatpush1.msra.mxu0 %v1185
      %1273 = vmatprep.subr.mxu0 0.0
      %1274 = vmatpush1.msra.mxu0 %v1183
      %1275 = vmatprep.subr.mxu0 0.0
      %1276 = vmatpush1.msra.mxu0 %v1181
      %1277 = vmatprep.subr.mxu0 0.0
      %1278 = vmatpush1.msra.mxu0 %v1179
      %1279 = vmatprep.subr.mxu0 0.0
      %1280 = vmatpush1.msra.mxu0 %v1177
      %1281 = vmatprep.subr.mxu0 0.0
      %1282 = vmatpush1.msra.mxu0 %v1175
      %1283 = vmatprep.subr.mxu0 0.0
      %1284 = vmatpush1.msra.mxu0 %v1173
      %1285 = vmatprep.subr.mxu0 0.0
      %1286 = vmatpush2.msra.mxu0 0.0
      %1287 = vmatprep.subr.mxu0 0.0
      %1288 = vmatpush2.msra.mxu0 0.0
      %1289 = vmatprep.subr.mxu0 0.0
      %1290 = vmatpush2.msra.mxu0 0.0
      %1291 = vmatprep.subr.mxu0 0.0
      %1292 = vmatpush2.msra.mxu0 0.0
      %1293 = vmatprep.subr.mxu0 0.0
      %1294 = vmatpush2.msra.mxu0 0.0
      %1295 = vmatprep.subr.mxu0 0.0
      %1296 = vmatpush2.msra.mxu0 0.0
      %1297 = vmatprep.subr.mxu0 0.0
      %1298 = vmatpush2.msra.mxu0 0.0
      %1299 = vmatprep.subr.mxu0 0.0
      %1300 = vmatpush2.msra.mxu0 0.0
      %1301 = vmatprep.subr.mxu0 0.0
      %1302 = vmatpush2.msra.mxu0 0.0
      %1303 = vmatprep.subr.mxu0 0.0
      %1304 = vmatpush2.msra.mxu0 0.0
      %1305 = vmatprep.subr.mxu0 0.0
      %1306 = vmatpush2.msra.mxu0 0.0
      %1307 = vmatprep.subr.mxu0 0.0
      %1308 = vmatpush2.msra.mxu0 0.0
      %1309 = vmatprep.subr.mxu0 0.0
      %1310 = vmatpush2.msra.mxu0 0.0
      %1311 = vmatprep.subr.mxu0 0.0
      %1312 = vmatpush2.msra.mxu0 0.0
      %1313 = vmatprep.subr.mxu0 0.0
      %1314 = vmatpush2.msra.mxu0 0.0
      %1315 = vmatprep.subr.mxu0 0.0
      %1316 = vmatpush2.msra.mxu0 %v1205
      %1317 = vmatprep.mubr.f32.mxu0 %v1224
      %1318 = vmatmul.mubr.f32.gmra.mxu0 %v1143
      %v1319 = vpop.f32.mrf.mxu0
      %v1320 = vadd.f32 0.0, %v1319
      %v1321 = vpop.f32.mrf.mxu0
      %1322 = vmatprep.mubr.f32.mxu0 %v1227
      %1323 = vmatmul.mubr.f32.gmra.mxu0 %v1146
      %v1324 = vpop.f32.mrf.mxu0
      %v1325 = vadd.f32 0.0, %v1324
      %v1326 = vpop.f32.mrf.mxu0
      %1327 = vmatprep.mubr.f32.mxu0 %v1230
      %1328 = vmatmul.mubr.f32.gmra.mxu0 %v1149
      %v1329 = vpop.f32.mrf.mxu0
      %v1330 = vadd.f32 0.0, %v1329
      %v1331 = vpop.f32.mrf.mxu0
      %1332 = vmatprep.mubr.f32.mxu0 %v1233
      %1333 = vmatmul.mubr.f32.gmra.mxu0 %v1152
      %v1334 = vpop.f32.mrf.mxu0
      %v1335 = vadd.f32 0.0, %v1334
      %v1336 = vpop.f32.mrf.mxu0
      %1337 = vmatprep.mubr.f32.mxu0 %v1236
      %1338 = vmatmul.mubr.f32.gmra.mxu0 %v1155
      %v1339 = vpop.f32.mrf.mxu0
      %v1340 = vadd.f32 0.0, %v1339
      %v1341 = vpop.f32.mrf.mxu0
      %1342 = vmatprep.mubr.f32.mxu0 %v1239
      %1343 = vmatmul.mubr.f32.gmra.mxu0 %v1158
      %v1344 = vpop.f32.mrf.mxu0
      %v1345 = vadd.f32 0.0, %v1344
      %v1346 = vpop.f32.mrf.mxu0
      %1347 = vmatprep.mubr.f32.mxu0 %v1242
      %1348 = vmatmul.mubr.f32.gmra.mxu0 %v1161
      %v1349 = vpop.f32.mrf.mxu0
      %v1350 = vadd.f32 0.0, %v1349
      %v1351 = vpop.f32.mrf.mxu0
      %1352 = vmatprep.mubr.f32.mxu0 %v1245
      %1353 = vmatmul.mubr.f32.gmra.mxu0 %v1164
      %v1354 = vpop.f32.mrf.mxu0
      %v1355 = vadd.f32 0.0, %v1354
      %v1356 = vpop.f32.mrf.mxu0
      %1357 = vmatprep.mubr.f32.mxu0 %v1248
      %1358 = vmatmul.mubr.f32.gmra.mxu0 %v1167
      %v1359 = vpop.f32.mrf.mxu0
      %v1360 = vadd.f32 0.0, %v1359
      %v1361 = vpop.f32.mrf.mxu0
      %1362 = vmatprep.mubr.f32.mxu0 %v1251
      %1363 = vmatmul.mubr.f32.gmra.mxu0 %v1170
      %v1364 = vpop.f32.mrf.mxu0
      %v1365 = vadd.f32 0.0, %v1364
      %v1366 = vpop.f32.mrf.mxu0
      %1367 = vdwg.mxu0
      %1368 = vrot.lane.b32.xlu0 %v484, 120
      %v1369 = vpop.permute.xlu0 %1368
      %1370 = vrot.lane.b32.xlu0 %v489, 120
      %v1371 = vpop.permute.xlu0 %1370
      %1372 = vrot.lane.b32.xlu0 %v494, 120
      %v1373 = vpop.permute.xlu0 %1372
      %1374 = vrot.lane.b32.xlu0 %v499, 120
      %v1375 = vpop.permute.xlu0 %1374
      %1376 = vrot.lane.b32.xlu0 %v504, 120
      %v1377 = vpop.permute.xlu0 %1376
      %1378 = vrot.lane.b32.xlu0 %v509, 120
      %v1379 = vpop.permute.xlu0 %1378
      %1380 = vrot.lane.b32.xlu0 %v514, 120
      %v1381 = vpop.permute.xlu0 %1380
      %1382 = vrot.lane.b32.xlu0 %v519, 120
      %v1383 = vpop.permute.xlu0 %1382
      %1384 = vrot.lane.b32.xlu0 %v524, 120
      %v1385 = vpop.permute.xlu0 %1384
      %1386 = vrot.lane.b32.xlu0 %v529, 120
      %v1387 = vpop.permute.xlu0 %1386
      %1388 = vrot.lane.b32.xlu0 %v661, 120
      %v1389 = vpop.permute.xlu0 %1388
      %1390 = vrot.lane.b32.xlu0 %v666, 120
      %v1391 = vpop.permute.xlu0 %1390
      %1392 = vrot.lane.b32.xlu0 %v671, 120
      %v1393 = vpop.permute.xlu0 %1392
      %1394 = vrot.lane.b32.xlu0 %v676, 120
      %v1395 = vpop.permute.xlu0 %1394
      %1396 = vrot.lane.b32.xlu0 %v681, 120
      %v1397 = vpop.permute.xlu0 %1396
      %1398 = vrot.lane.b32.xlu0 %v686, 120
      %v1399 = vpop.permute.xlu0 %1398
      %1400 = vrot.lane.b32.xlu0 %v691, 120
      %v1401 = vpop.permute.xlu0 %1400
      %1402 = vrot.lane.b32.xlu0 %v696, 120
      %v1403 = vpop.permute.xlu0 %1402
      %1404 = vrot.lane.b32.xlu0 %v701, 120
      %v1405 = vpop.permute.xlu0 %1404
      %1406 = vrot.lane.b32.xlu0 %v706, 120
      %v1407 = vpop.permute.xlu0 %1406
      %1408 = vrot.lane.b32.xlu0 %v711, 120
      %v1409 = vpop.permute.xlu0 %1408
      %1410 = vrot.lane.b32.xlu0 %v716, 120
      %v1411 = vpop.permute.xlu0 %1410
      %1412 = vrot.lane.b32.xlu0 %v721, 120
      %v1413 = vpop.permute.xlu0 %1412
      %1414 = vrot.lane.b32.xlu0 %v726, 120
      %v1415 = vpop.permute.xlu0 %1414
      %1416 = vrot.lane.b32.xlu0 %v731, 120
      %v1417 = vpop.permute.xlu0 %1416
      %1418 = vrot.lane.b32.xlu0 %v736, 120
      %v1419 = vpop.permute.xlu0 %1418
      %1420 = vrot.lane.b32.xlu0 %v741, 120
      %v1421 = vpop.permute.xlu0 %1420
      %v1422 = vsel %vm744, %v1369, 0
      %v1424 = vsel %vm744, %v1371, 0
      %v1426 = vsel %vm744, %v1373, 0
      %v1428 = vsel %vm744, %v1375, 0
      %v1430 = vsel %vm744, %v1377, 0
      %v1432 = vsel %vm744, %v1379, 0
      %v1434 = vsel %vm744, %v1381, 0
      %v1436 = vsel %vm744, %v1383, 0
      %v1438 = vsel %vm744, %v1385, 0
      %v1440 = vsel %vm744, %v1387, 0
      %v1442 = vsel %vm744, %v1389, 0
      %v1444 = vsel %vm744, %v1391, 0
      %v1446 = vsel %vm744, %v1393, 0
      %v1448 = vsel %vm744, %v1395, 0
      %v1450 = vsel %vm744, %v1397, 0
      %v1452 = vsel %vm744, %v1399, 0
      %v1454 = vsel %vm744, %v1401, 0
      %v1456 = vsel %vm744, %v1403, 0
      %v1458 = vsel %vm744, %v1405, 0
      %v1460 = vsel %vm744, %v1407, 0
      %v1462 = vsel %vm744, %v1409, 0
      %v1464 = vsel %vm744, %v1411, 0
      %v1466 = vsel %vm744, %v1413, 0
      %v1468 = vsel %vm744, %v1415, 0
      %v1470 = vsel %vm744, %v1417, 0
      %v1472 = vsel %vm744, %v1419, 0
      %v1474 = vsel %vm744, %v1421, 0
      %1476 = vmatprep.subr.mxu0 0.0
      %1477 = vmatpush1.xpose.msra.mxu0 %v1472
      %1478 = vmatprep.subr.mxu0 0.0
      %1479 = vmatpush1.xpose.msra.mxu0 %v1470
      %1480 = vmatprep.subr.mxu0 0.0
      %1481 = vmatpush1.xpose.msra.mxu0 %v1468
      %1482 = vmatprep.subr.mxu0 0.0
      %1483 = vmatpush1.xpose.msra.mxu0 %v1466
      %1484 = vmatprep.subr.mxu0 0.0
      %1485 = vmatpush1.xpose.msra.mxu0 %v1464
      %1486 = vmatprep.subr.mxu0 0.0
      %1487 = vmatpush1.xpose.msra.mxu0 %v1462
      %1488 = vmatprep.subr.mxu0 0.0
      %1489 = vmatpush1.xpose.msra.mxu0 %v1460
      %1490 = vmatprep.subr.mxu0 0.0
      %1491 = vmatpush1.xpose.msra.mxu0 %v1458
      %1492 = vmatprep.subr.mxu0 0.0
      %1493 = vmatpush1.xpose.msra.mxu0 %v1456
      %1494 = vmatprep.subr.mxu0 0.0
      %1495 = vmatpush1.xpose.msra.mxu0 %v1454
      %1496 = vmatprep.subr.mxu0 0.0
      %1497 = vmatpush1.xpose.msra.mxu0 %v1452
      %1498 = vmatprep.subr.mxu0 0.0
      %1499 = vmatpush1.xpose.msra.mxu0 %v1450
      %1500 = vmatprep.subr.mxu0 0.0
      %1501 = vmatpush1.xpose.msra.mxu0 %v1448
      %1502 = vmatprep.subr.mxu0 0.0
      %1503 = vmatpush1.xpose.msra.mxu0 %v1446
      %1504 = vmatprep.subr.mxu0 0.0
      %1505 = vmatpush1.xpose.msra.mxu0 %v1444
      %1506 = vmatprep.subr.mxu0 0.0
      %1507 = vmatpush1.xpose.msra.mxu0 %v1442
      %1508 = vmatprep.subr.mxu0 0.0
      %1509 = vmatpush2.xpose.msra.mxu0 0.0
      %1510 = vmatprep.subr.mxu0 0.0
      %1511 = vmatpush2.xpose.msra.mxu0 0.0
      %1512 = vmatprep.subr.mxu0 0.0
      %1513 = vmatpush2.xpose.msra.mxu0 0.0
      %1514 = vmatprep.subr.mxu0 0.0
      %1515 = vmatpush2.xpose.msra.mxu0 0.0
      %1516 = vmatprep.subr.mxu0 0.0
      %1517 = vmatpush2.xpose.msra.mxu0 0.0
      %1518 = vmatprep.subr.mxu0 0.0
      %1519 = vmatpush2.xpose.msra.mxu0 0.0
      %1520 = vmatprep.subr.mxu0 0.0
      %1521 = vmatpush2.xpose.msra.mxu0 0.0
      %1522 = vmatprep.subr.mxu0 0.0
      %1523 = vmatpush2.xpose.msra.mxu0 0.0
      %1524 = vmatprep.subr.mxu0 0.0
      %1525 = vmatpush2.xpose.msra.mxu0 0.0
      %1526 = vmatprep.subr.mxu0 0.0
      %1527 = vmatpush2.xpose.msra.mxu0 0.0
      %1528 = vmatprep.subr.mxu0 0.0
      %1529 = vmatpush2.xpose.msra.mxu0 0.0
      %1530 = vmatprep.subr.mxu0 0.0
      %1531 = vmatpush2.xpose.msra.mxu0 0.0
      %1532 = vmatprep.subr.mxu0 0.0
      %1533 = vmatpush2.xpose.msra.mxu0 0.0
      %1534 = vmatprep.subr.mxu0 0.0
      %1535 = vmatpush2.xpose.msra.mxu0 0.0
      %1536 = vmatprep.subr.mxu0 0.0
      %1537 = vmatpush2.xpose.msra.mxu0 0.0
      %1538 = vmatprep.subr.mxu0 0.0
      %1539 = vmatpush2.xpose.msra.mxu0 %v1474
      %1540 = vmatprep.mubr.f32.mxu0 0.0
      %1541 = vmatmul.mubr.f32.gmra.mxu0 %v1422
      %v1542 = vpop.f32.mrf.mxu0
      %v1543 = vadd.f32 0.0, %v1542
      %v1544 = vpop.f32.mrf.mxu0
      %v1545 = vadd.f32 0.0, %v1544
      %1546 = vmatprep.mubr.f32.mxu0 0.0
      %1547 = vmatmul.mubr.f32.gmra.mxu0 %v1424
      %v1548 = vpop.f32.mrf.mxu0
      %v1549 = vadd.f32 0.0, %v1548
      %v1550 = vpop.f32.mrf.mxu0
      %v1551 = vadd.f32 0.0, %v1550
      %1552 = vmatprep.mubr.f32.mxu0 0.0
      %1553 = vmatmul.mubr.f32.gmra.mxu0 %v1426
      %v1554 = vpop.f32.mrf.mxu0
      %v1555 = vadd.f32 0.0, %v1554
      %v1556 = vpop.f32.mrf.mxu0
      %v1557 = vadd.f32 0.0, %v1556
      %1558 = vmatprep.mubr.f32.mxu0 0.0
      %1559 = vmatmul.mubr.f32.gmra.mxu0 %v1428
      %v1560 = vpop.f32.mrf.mxu0
      %v1561 = vadd.f32 0.0, %v1560
      %v1562 = vpop.f32.mrf.mxu0
      %v1563 = vadd.f32 0.0, %v1562
      %1564 = vmatprep.mubr.f32.mxu0 0.0
      %1565 = vmatmul.mubr.f32.gmra.mxu0 %v1430
      %v1566 = vpop.f32.mrf.mxu0
      %v1567 = vadd.f32 0.0, %v1566
      %v1568 = vpop.f32.mrf.mxu0
      %v1569 = vadd.f32 0.0, %v1568
      %1570 = vmatprep.mubr.f32.mxu0 0.0
      %1571 = vmatmul.mubr.f32.gmra.mxu0 %v1432
      %v1572 = vpop.f32.mrf.mxu0
      %v1573 = vadd.f32 0.0, %v1572
      %v1574 = vpop.f32.mrf.mxu0
      %v1575 = vadd.f32 0.0, %v1574
      %1576 = vmatprep.mubr.f32.mxu0 0.0
      %1577 = vmatmul.mubr.f32.gmra.mxu0 %v1434
      %v1578 = vpop.f32.mrf.mxu0
      %v1579 = vadd.f32 0.0, %v1578
      %v1580 = vpop.f32.mrf.mxu0
      %v1581 = vadd.f32 0.0, %v1580
      %1582 = vmatprep.mubr.f32.mxu0 0.0
      %1583 = vmatmul.mubr.f32.gmra.mxu0 %v1436
      %v1584 = vpop.f32.mrf.mxu0
      %v1585 = vadd.f32 0.0, %v1584
      %v1586 = vpop.f32.mrf.mxu0
      %v1587 = vadd.f32 0.0, %v1586
      %1588 = vmatprep.mubr.f32.mxu0 0.0
      %1589 = vmatmul.mubr.f32.gmra.mxu0 %v1438
      %v1590 = vpop.f32.mrf.mxu0
      %v1591 = vadd.f32 0.0, %v1590
      %v1592 = vpop.f32.mrf.mxu0
      %v1593 = vadd.f32 0.0, %v1592
      %1594 = vmatprep.mubr.f32.mxu0 0.0
      %1595 = vmatmul.mubr.f32.gmra.mxu0 %v1440
      %v1596 = vpop.f32.mrf.mxu0
      %v1597 = vadd.f32 0.0, %v1596
      %v1598 = vpop.f32.mrf.mxu0
      %v1599 = vadd.f32 0.0, %v1598
      %1600 = vdwg.mxu0
      %v1601 = vmul.f32 %v1543, 0.35355338
      %v1602 = vmul.f32 %v1545, 0.35355338
      %v1603 = vmul.f32 %v1549, 0.35355338
      %v1604 = vmul.f32 %v1551, 0.35355338
      %v1605 = vmul.f32 %v1555, 0.35355338
      %v1606 = vmul.f32 %v1557, 0.35355338
      %v1607 = vmul.f32 %v1561, 0.35355338
      %v1608 = vmul.f32 %v1563, 0.35355338
      %v1609 = vmul.f32 %v1567, 0.35355338
      %v1610 = vmul.f32 %v1569, 0.35355338
      %v1611 = vmul.f32 %v1573, 0.35355338
      %v1612 = vmul.f32 %v1575, 0.35355338
      %v1613 = vmul.f32 %v1579, 0.35355338
      %v1614 = vmul.f32 %v1581, 0.35355338
      %v1615 = vmul.f32 %v1585, 0.35355338
      %v1616 = vmul.f32 %v1587, 0.35355338
      %v1617 = vmul.f32 %v1591, 0.35355338
      %v1618 = vmul.f32 %v1593, 0.35355338
      %v1619 = vmul.f32 %v1597, 0.35355338
      %v1620 = vmul.f32 %v1599, 0.35355338
      %v1621 = vsel %vm980, -1e+09, %v1601
      %v1622 = vsel %vm981, -1e+09, %v1602
      %v1623 = vsel %vm980, -1e+09, %v1603
      %v1624 = vsel %vm981, -1e+09, %v1604
      %v1625 = vsel %vm980, -1e+09, %v1605
      %v1626 = vsel %vm981, -1e+09, %v1606
      %v1627 = vsel %vm980, -1e+09, %v1607
      %v1628 = vsel %vm981, -1e+09, %v1608
      %v1629 = vsel %vm980, -1e+09, %v1609
      %v1630 = vsel %vm981, -1e+09, %v1610
      %v1631 = vsel %vm980, -1e+09, %v1611
      %v1632 = vsel %vm981, -1e+09, %v1612
      %v1633 = vsel %vm980, -1e+09, %v1613
      %v1634 = vsel %vm981, -1e+09, %v1614
      %v1635 = vsel %vm980, -1e+09, %v1615
      %v1636 = vsel %vm981, -1e+09, %v1616
      %v1637 = vsel %vm980, -1e+09, %v1617
      %v1638 = vsel %vm981, -1e+09, %v1618
      %v1639 = vsel %vm980, -1e+09, %v1619
      %v1640 = vsel %vm981, -1e+09, %v1620
      %v1641 = vsel %vm744, %v1622, -inf
      %v1642 = vmax.f32 %v1621, %v1641
      %1643 = vmax.xlane.f32.xlu0 %v1642
      %v1644 = vpop.xlane.xlu0 %1643
      %v1645 = vsel %vm744, %v1624, -inf
      %v1646 = vmax.f32 %v1623, %v1645
      %1647 = vmax.xlane.f32.xlu0 %v1646
      %v1648 = vpop.xlane.xlu0 %1647
      %v1649 = vsel %vm744, %v1626, -inf
      %v1650 = vmax.f32 %v1625, %v1649
      %1651 = vmax.xlane.f32.xlu0 %v1650
      %v1652 = vpop.xlane.xlu0 %1651
      %v1653 = vsel %vm744, %v1628, -inf
      %v1654 = vmax.f32 %v1627, %v1653
      %1655 = vmax.xlane.f32.xlu0 %v1654
      %v1656 = vpop.xlane.xlu0 %1655
      %v1657 = vsel %vm744, %v1630, -inf
      %v1658 = vmax.f32 %v1629, %v1657
      %1659 = vmax.xlane.f32.xlu0 %v1658
      %v1660 = vpop.xlane.xlu0 %1659
      %v1661 = vsel %vm744, %v1632, -inf
      %v1662 = vmax.f32 %v1631, %v1661
      %1663 = vmax.xlane.f32.xlu0 %v1662
      %v1664 = vpop.xlane.xlu0 %1663
      %v1665 = vsel %vm744, %v1634, -inf
      %v1666 = vmax.f32 %v1633, %v1665
      %1667 = vmax.xlane.f32.xlu0 %v1666
      %v1668 = vpop.xlane.xlu0 %1667
      %v1669 = vsel %vm744, %v1636, -inf
      %v1670 = vmax.f32 %v1635, %v1669
      %1671 = vmax.xlane.f32.xlu0 %v1670
      %v1672 = vpop.xlane.xlu0 %1671
      %v1673 = vsel %vm744, %v1638, -inf
      %v1674 = vmax.f32 %v1637, %v1673
      %1675 = vmax.xlane.f32.xlu0 %v1674
      %v1676 = vpop.xlane.xlu0 %1675
      %v1677 = vsel %vm744, %v1640, -inf
      %v1678 = vmax.f32 %v1639, %v1677
      %1679 = vmax.xlane.f32.xlu0 %v1678
      %v1680 = vpop.xlane.xlu0 %1679
      %v1681 = vsub.f32 %v1621, %v1644
      %v1682 = vsub.f32 %v1622, %v1644
      %v1683 = vsub.f32 %v1623, %v1648
      %v1684 = vsub.f32 %v1624, %v1648
      %v1685 = vsub.f32 %v1625, %v1652
      %v1686 = vsub.f32 %v1626, %v1652
      %v1687 = vsub.f32 %v1627, %v1656
      %v1688 = vsub.f32 %v1628, %v1656
      %v1689 = vsub.f32 %v1629, %v1660
      %v1690 = vsub.f32 %v1630, %v1660
      %v1691 = vsub.f32 %v1631, %v1664
      %v1692 = vsub.f32 %v1632, %v1664
      %v1693 = vsub.f32 %v1633, %v1668
      %v1694 = vsub.f32 %v1634, %v1668
      %v1695 = vsub.f32 %v1635, %v1672
      %v1696 = vsub.f32 %v1636, %v1672
      %v1697 = vsub.f32 %v1637, %v1676
      %v1698 = vsub.f32 %v1638, %v1676
      %v1699 = vsub.f32 %v1639, %v1680
      %v1700 = vsub.f32 %v1640, %v1680
      %v1701 = vmul.f32 %v1681, 1.442695
      %v1702 = vpow.pop %v1701
      %v1703 = vmul.f32 %v1682, 1.442695
      %v1704 = vpow.pop %v1703
      %v1705 = vmul.f32 %v1683, 1.442695
      %v1706 = vpow.pop %v1705
      %v1707 = vmul.f32 %v1684, 1.442695
      %v1708 = vpow.pop %v1707
      %v1709 = vmul.f32 %v1685, 1.442695
      %v1710 = vpow.pop %v1709
      %v1711 = vmul.f32 %v1686, 1.442695
      %v1712 = vpow.pop %v1711
      %v1713 = vmul.f32 %v1687, 1.442695
      %v1714 = vpow.pop %v1713
      %v1715 = vmul.f32 %v1688, 1.442695
      %v1716 = vpow.pop %v1715
      %v1717 = vmul.f32 %v1689, 1.442695
      %v1718 = vpow.pop %v1717
      %v1719 = vmul.f32 %v1690, 1.442695
      %v1720 = vpow.pop %v1719
      %v1721 = vmul.f32 %v1691, 1.442695
      %v1722 = vpow.pop %v1721
      %v1723 = vmul.f32 %v1692, 1.442695
      %v1724 = vpow.pop %v1723
      %v1725 = vmul.f32 %v1693, 1.442695
      %v1726 = vpow.pop %v1725
      %v1727 = vmul.f32 %v1694, 1.442695
      %v1728 = vpow.pop %v1727
      %v1729 = vmul.f32 %v1695, 1.442695
      %v1730 = vpow.pop %v1729
      %v1731 = vmul.f32 %v1696, 1.442695
      %v1732 = vpow.pop %v1731
      %v1733 = vmul.f32 %v1697, 1.442695
      %v1734 = vpow.pop %v1733
      %v1735 = vmul.f32 %v1698, 1.442695
      %v1736 = vpow.pop %v1735
      %v1737 = vmul.f32 %v1699, 1.442695
      %v1738 = vpow.pop %v1737
      %v1739 = vmul.f32 %v1700, 1.442695
      %v1740 = vpow.pop %v1739
      %v1741 = vsel %vm744, %v1704, 0.0
      %v1742 = vadd.f32 %v1702, %v1741
      %1743 = vadd.xlane.f32.xlu0 %v1742
      %v1744 = vpop.xlane.xlu0 %1743
      %v1745 = vsel %vm744, %v1708, 0.0
      %v1746 = vadd.f32 %v1706, %v1745
      %1747 = vadd.xlane.f32.xlu0 %v1746
      %v1748 = vpop.xlane.xlu0 %1747
      %v1749 = vsel %vm744, %v1712, 0.0
      %v1750 = vadd.f32 %v1710, %v1749
      %1751 = vadd.xlane.f32.xlu0 %v1750
      %v1752 = vpop.xlane.xlu0 %1751
      %v1753 = vsel %vm744, %v1716, 0.0
      %v1754 = vadd.f32 %v1714, %v1753
      %1755 = vadd.xlane.f32.xlu0 %v1754
      %v1756 = vpop.xlane.xlu0 %1755
      %v1757 = vsel %vm744, %v1720, 0.0
      %v1758 = vadd.f32 %v1718, %v1757
      %1759 = vadd.xlane.f32.xlu0 %v1758
      %v1760 = vpop.xlane.xlu0 %1759
      %v1761 = vsel %vm744, %v1724, 0.0
      %v1762 = vadd.f32 %v1722, %v1761
      %1763 = vadd.xlane.f32.xlu0 %v1762
      %v1764 = vpop.xlane.xlu0 %1763
      %v1765 = vsel %vm744, %v1728, 0.0
      %v1766 = vadd.f32 %v1726, %v1765
      %1767 = vadd.xlane.f32.xlu0 %v1766
      %v1768 = vpop.xlane.xlu0 %1767
      %v1769 = vsel %vm744, %v1732, 0.0
      %v1770 = vadd.f32 %v1730, %v1769
      %1771 = vadd.xlane.f32.xlu0 %v1770
      %v1772 = vpop.xlane.xlu0 %1771
      %v1773 = vsel %vm744, %v1736, 0.0
      %v1774 = vadd.f32 %v1734, %v1773
      %1775 = vadd.xlane.f32.xlu0 %v1774
      %v1776 = vpop.xlane.xlu0 %1775
      %v1777 = vsel %vm744, %v1740, 0.0
      %v1778 = vadd.f32 %v1738, %v1777
      %1779 = vadd.xlane.f32.xlu0 %v1778
      %v1780 = vpop.xlane.xlu0 %1779
      %v1781 = vrcp.pop %v1744
      %v1782 = vmul.f32 %v1702, %v1781
      %v1783 = vmul.f32 %v1704, %v1781
      %v1784 = vrcp.pop %v1748
      %v1785 = vmul.f32 %v1706, %v1784
      %v1786 = vmul.f32 %v1708, %v1784
      %v1787 = vrcp.pop %v1752
      %v1788 = vmul.f32 %v1710, %v1787
      %v1789 = vmul.f32 %v1712, %v1787
      %v1790 = vrcp.pop %v1756
      %v1791 = vmul.f32 %v1714, %v1790
      %v1792 = vmul.f32 %v1716, %v1790
      %v1793 = vrcp.pop %v1760
      %v1794 = vmul.f32 %v1718, %v1793
      %v1795 = vmul.f32 %v1720, %v1793
      %v1796 = vrcp.pop %v1764
      %v1797 = vmul.f32 %v1722, %v1796
      %v1798 = vmul.f32 %v1724, %v1796
      %v1799 = vrcp.pop %v1768
      %v1800 = vmul.f32 %v1726, %v1799
      %v1801 = vmul.f32 %v1728, %v1799
      %v1802 = vrcp.pop %v1772
      %v1803 = vmul.f32 %v1730, %v1802
      %v1804 = vmul.f32 %v1732, %v1802
      %v1805 = vrcp.pop %v1776
      %v1806 = vmul.f32 %v1734, %v1805
      %v1807 = vmul.f32 %v1736, %v1805
      %v1808 = vrcp.pop %v1780
      %v1809 = vmul.f32 %v1738, %v1808
      %v1810 = vmul.f32 %v1740, %v1808
      %1811 = vrot.lane.b32.xlu0 %v661, 88
      %v1812 = vpop.permute.xlu0 %1811
      %1813 = vrot.lane.b32.xlu0 %v666, 88
      %v1814 = vpop.permute.xlu0 %1813
      %1815 = vrot.lane.b32.xlu0 %v671, 88
      %v1816 = vpop.permute.xlu0 %1815
      %1817 = vrot.lane.b32.xlu0 %v676, 88
      %v1818 = vpop.permute.xlu0 %1817
      %1819 = vrot.lane.b32.xlu0 %v681, 88
      %v1820 = vpop.permute.xlu0 %1819
      %1821 = vrot.lane.b32.xlu0 %v686, 88
      %v1822 = vpop.permute.xlu0 %1821
      %1823 = vrot.lane.b32.xlu0 %v691, 88
      %v1824 = vpop.permute.xlu0 %1823
      %1825 = vrot.lane.b32.xlu0 %v696, 88
      %v1826 = vpop.permute.xlu0 %1825
      %1827 = vrot.lane.b32.xlu0 %v701, 88
      %v1828 = vpop.permute.xlu0 %1827
      %1829 = vrot.lane.b32.xlu0 %v706, 88
      %v1830 = vpop.permute.xlu0 %1829
      %1831 = vrot.lane.b32.xlu0 %v711, 88
      %v1832 = vpop.permute.xlu0 %1831
      %1833 = vrot.lane.b32.xlu0 %v716, 88
      %v1834 = vpop.permute.xlu0 %1833
      %1835 = vrot.lane.b32.xlu0 %v721, 88
      %v1836 = vpop.permute.xlu0 %1835
      %1837 = vrot.lane.b32.xlu0 %v726, 88
      %v1838 = vpop.permute.xlu0 %1837
      %1839 = vrot.lane.b32.xlu0 %v731, 88
      %v1840 = vpop.permute.xlu0 %1839
      %1841 = vrot.lane.b32.xlu0 %v736, 88
      %v1842 = vpop.permute.xlu0 %1841
      %1843 = vrot.lane.b32.xlu0 %v741, 88
      %v1844 = vpop.permute.xlu0 %1843
      %v1863 = vsel %vm744, %v1783, 0
      %v1866 = vsel %vm744, %v1786, 0
      %v1869 = vsel %vm744, %v1789, 0
      %v1872 = vsel %vm744, %v1792, 0
      %v1875 = vsel %vm744, %v1795, 0
      %v1878 = vsel %vm744, %v1798, 0
      %v1881 = vsel %vm744, %v1801, 0
      %v1884 = vsel %vm744, %v1804, 0
      %v1887 = vsel %vm744, %v1807, 0
      %v1890 = vsel %vm744, %v1810, 0
      %1892 = vmatprep.subr.mxu0 0.0
      %1893 = vmatpush1.msra.mxu0 %v1842
      %1894 = vmatprep.subr.mxu0 0.0
      %1895 = vmatpush1.msra.mxu0 %v1840
      %1896 = vmatprep.subr.mxu0 0.0
      %1897 = vmatpush1.msra.mxu0 %v1838
      %1898 = vmatprep.subr.mxu0 0.0
      %1899 = vmatpush1.msra.mxu0 %v1836
      %1900 = vmatprep.subr.mxu0 0.0
      %1901 = vmatpush1.msra.mxu0 %v1834
      %1902 = vmatprep.subr.mxu0 0.0
      %1903 = vmatpush1.msra.mxu0 %v1832
      %1904 = vmatprep.subr.mxu0 0.0
      %1905 = vmatpush1.msra.mxu0 %v1830
      %1906 = vmatprep.subr.mxu0 0.0
      %1907 = vmatpush1.msra.mxu0 %v1828
      %1908 = vmatprep.subr.mxu0 0.0
      %1909 = vmatpush1.msra.mxu0 %v1826
      %1910 = vmatprep.subr.mxu0 0.0
      %1911 = vmatpush1.msra.mxu0 %v1824
      %1912 = vmatprep.subr.mxu0 0.0
      %1913 = vmatpush1.msra.mxu0 %v1822
      %1914 = vmatprep.subr.mxu0 0.0
      %1915 = vmatpush1.msra.mxu0 %v1820
      %1916 = vmatprep.subr.mxu0 0.0
      %1917 = vmatpush1.msra.mxu0 %v1818
      %1918 = vmatprep.subr.mxu0 0.0
      %1919 = vmatpush1.msra.mxu0 %v1816
      %1920 = vmatprep.subr.mxu0 0.0
      %1921 = vmatpush1.msra.mxu0 %v1814
      %1922 = vmatprep.subr.mxu0 0.0
      %1923 = vmatpush1.msra.mxu0 %v1812
      %1924 = vmatprep.subr.mxu0 0.0
      %1925 = vmatpush2.msra.mxu0 0.0
      %1926 = vmatprep.subr.mxu0 0.0
      %1927 = vmatpush2.msra.mxu0 0.0
      %1928 = vmatprep.subr.mxu0 0.0
      %1929 = vmatpush2.msra.mxu0 0.0
      %1930 = vmatprep.subr.mxu0 0.0
      %1931 = vmatpush2.msra.mxu0 0.0
      %1932 = vmatprep.subr.mxu0 0.0
      %1933 = vmatpush2.msra.mxu0 0.0
      %1934 = vmatprep.subr.mxu0 0.0
      %1935 = vmatpush2.msra.mxu0 0.0
      %1936 = vmatprep.subr.mxu0 0.0
      %1937 = vmatpush2.msra.mxu0 0.0
      %1938 = vmatprep.subr.mxu0 0.0
      %1939 = vmatpush2.msra.mxu0 0.0
      %1940 = vmatprep.subr.mxu0 0.0
      %1941 = vmatpush2.msra.mxu0 0.0
      %1942 = vmatprep.subr.mxu0 0.0
      %1943 = vmatpush2.msra.mxu0 0.0
      %1944 = vmatprep.subr.mxu0 0.0
      %1945 = vmatpush2.msra.mxu0 0.0
      %1946 = vmatprep.subr.mxu0 0.0
      %1947 = vmatpush2.msra.mxu0 0.0
      %1948 = vmatprep.subr.mxu0 0.0
      %1949 = vmatpush2.msra.mxu0 0.0
      %1950 = vmatprep.subr.mxu0 0.0
      %1951 = vmatpush2.msra.mxu0 0.0
      %1952 = vmatprep.subr.mxu0 0.0
      %1953 = vmatpush2.msra.mxu0 0.0
      %1954 = vmatprep.subr.mxu0 0.0
      %1955 = vmatpush2.msra.mxu0 %v1844
      %1956 = vmatprep.mubr.f32.mxu0 %v1863
      %1957 = vmatmul.mubr.f32.gmra.mxu0 %v1782
      %v1958 = vpop.f32.mrf.mxu0
      %v1959 = vadd.f32 0.0, %v1958
      %v1960 = vpop.f32.mrf.mxu0
      %1961 = vmatprep.mubr.f32.mxu0 %v1866
      %1962 = vmatmul.mubr.f32.gmra.mxu0 %v1785
      %v1963 = vpop.f32.mrf.mxu0
      %v1964 = vadd.f32 0.0, %v1963
      %v1965 = vpop.f32.mrf.mxu0
      %1966 = vmatprep.mubr.f32.mxu0 %v1869
      %1967 = vmatmul.mubr.f32.gmra.mxu0 %v1788
      %v1968 = vpop.f32.mrf.mxu0
      %v1969 = vadd.f32 0.0, %v1968
      %v1970 = vpop.f32.mrf.mxu0
      %1971 = vmatprep.mubr.f32.mxu0 %v1872
      %1972 = vmatmul.mubr.f32.gmra.mxu0 %v1791
      %v1973 = vpop.f32.mrf.mxu0
      %v1974 = vadd.f32 0.0, %v1973
      %v1975 = vpop.f32.mrf.mxu0
      %1976 = vmatprep.mubr.f32.mxu0 %v1875
      %1977 = vmatmul.mubr.f32.gmra.mxu0 %v1794
      %v1978 = vpop.f32.mrf.mxu0
      %v1979 = vadd.f32 0.0, %v1978
      %v1980 = vpop.f32.mrf.mxu0
      %1981 = vmatprep.mubr.f32.mxu0 %v1878
      %1982 = vmatmul.mubr.f32.gmra.mxu0 %v1797
      %v1983 = vpop.f32.mrf.mxu0
      %v1984 = vadd.f32 0.0, %v1983
      %v1985 = vpop.f32.mrf.mxu0
      %1986 = vmatprep.mubr.f32.mxu0 %v1881
      %1987 = vmatmul.mubr.f32.gmra.mxu0 %v1800
      %v1988 = vpop.f32.mrf.mxu0
      %v1989 = vadd.f32 0.0, %v1988
      %v1990 = vpop.f32.mrf.mxu0
      %1991 = vmatprep.mubr.f32.mxu0 %v1884
      %1992 = vmatmul.mubr.f32.gmra.mxu0 %v1803
      %v1993 = vpop.f32.mrf.mxu0
      %v1994 = vadd.f32 0.0, %v1993
      %v1995 = vpop.f32.mrf.mxu0
      %1996 = vmatprep.mubr.f32.mxu0 %v1887
      %1997 = vmatmul.mubr.f32.gmra.mxu0 %v1806
      %v1998 = vpop.f32.mrf.mxu0
      %v1999 = vadd.f32 0.0, %v1998
      %v2000 = vpop.f32.mrf.mxu0
      %2001 = vmatprep.mubr.f32.mxu0 %v1890
      %2002 = vmatmul.mubr.f32.gmra.mxu0 %v1809
      %v2003 = vpop.f32.mrf.mxu0
      %v2004 = vadd.f32 0.0, %v2003
      %v2005 = vpop.f32.mrf.mxu0
      %2006 = vdwg.mxu0
      %2007 = vrot.lane.b32.xlu0 %v484, 112
      %v2008 = vpop.permute.xlu0 %2007
      %2009 = vrot.lane.b32.xlu0 %v489, 112
      %v2010 = vpop.permute.xlu0 %2009
      %2011 = vrot.lane.b32.xlu0 %v494, 112
      %v2012 = vpop.permute.xlu0 %2011
      %2013 = vrot.lane.b32.xlu0 %v499, 112
      %v2014 = vpop.permute.xlu0 %2013
      %2015 = vrot.lane.b32.xlu0 %v504, 112
      %v2016 = vpop.permute.xlu0 %2015
      %2017 = vrot.lane.b32.xlu0 %v509, 112
      %v2018 = vpop.permute.xlu0 %2017
      %2019 = vrot.lane.b32.xlu0 %v514, 112
      %v2020 = vpop.permute.xlu0 %2019
      %2021 = vrot.lane.b32.xlu0 %v519, 112
      %v2022 = vpop.permute.xlu0 %2021
      %2023 = vrot.lane.b32.xlu0 %v524, 112
      %v2024 = vpop.permute.xlu0 %2023
      %2025 = vrot.lane.b32.xlu0 %v529, 112
      %v2026 = vpop.permute.xlu0 %2025
      %2027 = vrot.lane.b32.xlu0 %v661, 112
      %v2028 = vpop.permute.xlu0 %2027
      %2029 = vrot.lane.b32.xlu0 %v666, 112
      %v2030 = vpop.permute.xlu0 %2029
      %2031 = vrot.lane.b32.xlu0 %v671, 112
      %v2032 = vpop.permute.xlu0 %2031
      %2033 = vrot.lane.b32.xlu0 %v676, 112
      %v2034 = vpop.permute.xlu0 %2033
      %2035 = vrot.lane.b32.xlu0 %v681, 112
      %v2036 = vpop.permute.xlu0 %2035
      %2037 = vrot.lane.b32.xlu0 %v686, 112
      %v2038 = vpop.permute.xlu0 %2037
      %2039 = vrot.lane.b32.xlu0 %v691, 112
      %v2040 = vpop.permute.xlu0 %2039
      %2041 = vrot.lane.b32.xlu0 %v696, 112
      %v2042 = vpop.permute.xlu0 %2041
      %2043 = vrot.lane.b32.xlu0 %v701, 112
      %v2044 = vpop.permute.xlu0 %2043
      %2045 = vrot.lane.b32.xlu0 %v706, 112
      %v2046 = vpop.permute.xlu0 %2045
      %2047 = vrot.lane.b32.xlu0 %v711, 112
      %v2048 = vpop.permute.xlu0 %2047
      %2049 = vrot.lane.b32.xlu0 %v716, 112
      %v2050 = vpop.permute.xlu0 %2049
      %2051 = vrot.lane.b32.xlu0 %v721, 112
      %v2052 = vpop.permute.xlu0 %2051
      %2053 = vrot.lane.b32.xlu0 %v726, 112
      %v2054 = vpop.permute.xlu0 %2053
      %2055 = vrot.lane.b32.xlu0 %v731, 112
      %v2056 = vpop.permute.xlu0 %2055
      %2057 = vrot.lane.b32.xlu0 %v736, 112
      %v2058 = vpop.permute.xlu0 %2057
      %2059 = vrot.lane.b32.xlu0 %v741, 112
      %v2060 = vpop.permute.xlu0 %2059
      %v2061 = vsel %vm744, %v2008, 0
      %v2063 = vsel %vm744, %v2010, 0
      %v2065 = vsel %vm744, %v2012, 0
      %v2067 = vsel %vm744, %v2014, 0
      %v2069 = vsel %vm744, %v2016, 0
      %v2071 = vsel %vm744, %v2018, 0
      %v2073 = vsel %vm744, %v2020, 0
      %v2075 = vsel %vm744, %v2022, 0
      %v2077 = vsel %vm744, %v2024, 0
      %v2079 = vsel %vm744, %v2026, 0
      %v2081 = vsel %vm744, %v2028, 0
      %v2083 = vsel %vm744, %v2030, 0
      %v2085 = vsel %vm744, %v2032, 0
      %v2087 = vsel %vm744, %v2034, 0
      %v2089 = vsel %vm744, %v2036, 0
      %v2091 = vsel %vm744, %v2038, 0
      %v2093 = vsel %vm744, %v2040, 0
      %v2095 = vsel %vm744, %v2042, 0
      %v2097 = vsel %vm744, %v2044, 0
      %v2099 = vsel %vm744, %v2046, 0
      %v2101 = vsel %vm744, %v2048, 0
      %v2103 = vsel %vm744, %v2050, 0
      %v2105 = vsel %vm744, %v2052, 0
      %v2107 = vsel %vm744, %v2054, 0
      %v2109 = vsel %vm744, %v2056, 0
      %v2111 = vsel %vm744, %v2058, 0
      %v2113 = vsel %vm744, %v2060, 0
      %2115 = vmatprep.subr.mxu0 0.0
      %2116 = vmatpush1.xpose.msra.mxu0 %v2111
      %2117 = vmatprep.subr.mxu0 0.0
      %2118 = vmatpush1.xpose.msra.mxu0 %v2109
      %2119 = vmatprep.subr.mxu0 0.0
      %2120 = vmatpush1.xpose.msra.mxu0 %v2107
      %2121 = vmatprep.subr.mxu0 0.0
      %2122 = vmatpush1.xpose.msra.mxu0 %v2105
      %2123 = vmatprep.subr.mxu0 0.0
      %2124 = vmatpush1.xpose.msra.mxu0 %v2103
      %2125 = vmatprep.subr.mxu0 0.0
      %2126 = vmatpush1.xpose.msra.mxu0 %v2101
      %2127 = vmatprep.subr.mxu0 0.0
      %2128 = vmatpush1.xpose.msra.mxu0 %v2099
      %2129 = vmatprep.subr.mxu0 0.0
      %2130 = vmatpush1.xpose.msra.mxu0 %v2097
      %2131 = vmatprep.subr.mxu0 0.0
      %2132 = vmatpush1.xpose.msra.mxu0 %v2095
      %2133 = vmatprep.subr.mxu0 0.0
      %2134 = vmatpush1.xpose.msra.mxu0 %v2093
      %2135 = vmatprep.subr.mxu0 0.0
      %2136 = vmatpush1.xpose.msra.mxu0 %v2091
      %2137 = vmatprep.subr.mxu0 0.0
      %2138 = vmatpush1.xpose.msra.mxu0 %v2089
      %2139 = vmatprep.subr.mxu0 0.0
      %2140 = vmatpush1.xpose.msra.mxu0 %v2087
      %2141 = vmatprep.subr.mxu0 0.0
      %2142 = vmatpush1.xpose.msra.mxu0 %v2085
      %2143 = vmatprep.subr.mxu0 0.0
      %2144 = vmatpush1.xpose.msra.mxu0 %v2083
      %2145 = vmatprep.subr.mxu0 0.0
      %2146 = vmatpush1.xpose.msra.mxu0 %v2081
      %2147 = vmatprep.subr.mxu0 0.0
      %2148 = vmatpush2.xpose.msra.mxu0 0.0
      %2149 = vmatprep.subr.mxu0 0.0
      %2150 = vmatpush2.xpose.msra.mxu0 0.0
      %2151 = vmatprep.subr.mxu0 0.0
      %2152 = vmatpush2.xpose.msra.mxu0 0.0
      %2153 = vmatprep.subr.mxu0 0.0
      %2154 = vmatpush2.xpose.msra.mxu0 0.0
      %2155 = vmatprep.subr.mxu0 0.0
      %2156 = vmatpush2.xpose.msra.mxu0 0.0
      %2157 = vmatprep.subr.mxu0 0.0
      %2158 = vmatpush2.xpose.msra.mxu0 0.0
      %2159 = vmatprep.subr.mxu0 0.0
      %2160 = vmatpush2.xpose.msra.mxu0 0.0
      %2161 = vmatprep.subr.mxu0 0.0
      %2162 = vmatpush2.xpose.msra.mxu0 0.0
      %2163 = vmatprep.subr.mxu0 0.0
      %2164 = vmatpush2.xpose.msra.mxu0 0.0
      %2165 = vmatprep.subr.mxu0 0.0
      %2166 = vmatpush2.xpose.msra.mxu0 0.0
      %2167 = vmatprep.subr.mxu0 0.0
      %2168 = vmatpush2.xpose.msra.mxu0 0.0
      %2169 = vmatprep.subr.mxu0 0.0
      %2170 = vmatpush2.xpose.msra.mxu0 0.0
      %2171 = vmatprep.subr.mxu0 0.0
      %2172 = vmatpush2.xpose.msra.mxu0 0.0
      %2173 = vmatprep.subr.mxu0 0.0
      %2174 = vmatpush2.xpose.msra.mxu0 0.0
      %2175 = vmatprep.subr.mxu0 0.0
      %2176 = vmatpush2.xpose.msra.mxu0 0.0
      %2177 = vmatprep.subr.mxu0 0.0
      %2178 = vmatpush2.xpose.msra.mxu0 %v2113
      %2179 = vmatprep.mubr.f32.mxu0 0.0
      %2180 = vmatmul.mubr.f32.gmra.mxu0 %v2061
      %v2181 = vpop.f32.mrf.mxu0
      %v2182 = vadd.f32 0.0, %v2181
      %v2183 = vpop.f32.mrf.mxu0
      %v2184 = vadd.f32 0.0, %v2183
      %2185 = vmatprep.mubr.f32.mxu0 0.0
      %2186 = vmatmul.mubr.f32.gmra.mxu0 %v2063
      %v2187 = vpop.f32.mrf.mxu0
      %v2188 = vadd.f32 0.0, %v2187
      %v2189 = vpop.f32.mrf.mxu0
      %v2190 = vadd.f32 0.0, %v2189
      %2191 = vmatprep.mubr.f32.mxu0 0.0
      %2192 = vmatmul.mubr.f32.gmra.mxu0 %v2065
      %v2193 = vpop.f32.mrf.mxu0
      %v2194 = vadd.f32 0.0, %v2193
      %v2195 = vpop.f32.mrf.mxu0
      %v2196 = vadd.f32 0.0, %v2195
      %2197 = vmatprep.mubr.f32.mxu0 0.0
      %2198 = vmatmul.mubr.f32.gmra.mxu0 %v2067
      %v2199 = vpop.f32.mrf.mxu0
      %v2200 = vadd.f32 0.0, %v2199
      %v2201 = vpop.f32.mrf.mxu0
      %v2202 = vadd.f32 0.0, %v2201
      %2203 = vmatprep.mubr.f32.mxu0 0.0
      %2204 = vmatmul.mubr.f32.gmra.mxu0 %v2069
      %v2205 = vpop.f32.mrf.mxu0
      %v2206 = vadd.f32 0.0, %v2205
      %v2207 = vpop.f32.mrf.mxu0
      %v2208 = vadd.f32 0.0, %v2207
      %2209 = vmatprep.mubr.f32.mxu0 0.0
      %2210 = vmatmul.mubr.f32.gmra.mxu0 %v2071
      %v2211 = vpop.f32.mrf.mxu0
      %v2212 = vadd.f32 0.0, %v2211
      %v2213 = vpop.f32.mrf.mxu0
      %v2214 = vadd.f32 0.0, %v2213
      %2215 = vmatprep.mubr.f32.mxu0 0.0
      %2216 = vmatmul.mubr.f32.gmra.mxu0 %v2073
      %v2217 = vpop.f32.mrf.mxu0
      %v2218 = vadd.f32 0.0, %v2217
      %v2219 = vpop.f32.mrf.mxu0
      %v2220 = vadd.f32 0.0, %v2219
      %2221 = vmatprep.mubr.f32.mxu0 0.0
      %2222 = vmatmul.mubr.f32.gmra.mxu0 %v2075
      %v2223 = vpop.f32.mrf.mxu0
      %v2224 = vadd.f32 0.0, %v2223
      %v2225 = vpop.f32.mrf.mxu0
      %v2226 = vadd.f32 0.0, %v2225
      %2227 = vmatprep.mubr.f32.mxu0 0.0
      %2228 = vmatmul.mubr.f32.gmra.mxu0 %v2077
      %v2229 = vpop.f32.mrf.mxu0
      %v2230 = vadd.f32 0.0, %v2229
      %v2231 = vpop.f32.mrf.mxu0
      %v2232 = vadd.f32 0.0, %v2231
      %2233 = vmatprep.mubr.f32.mxu0 0.0
      %2234 = vmatmul.mubr.f32.gmra.mxu0 %v2079
      %v2235 = vpop.f32.mrf.mxu0
      %v2236 = vadd.f32 0.0, %v2235
      %v2237 = vpop.f32.mrf.mxu0
      %v2238 = vadd.f32 0.0, %v2237
      %2239 = vdwg.mxu0
      %v2240 = vmul.f32 %v2182, 0.35355338
      %v2241 = vmul.f32 %v2184, 0.35355338
      %v2242 = vmul.f32 %v2188, 0.35355338
      %v2243 = vmul.f32 %v2190, 0.35355338
      %v2244 = vmul.f32 %v2194, 0.35355338
      %v2245 = vmul.f32 %v2196, 0.35355338
      %v2246 = vmul.f32 %v2200, 0.35355338
      %v2247 = vmul.f32 %v2202, 0.35355338
      %v2248 = vmul.f32 %v2206, 0.35355338
      %v2249 = vmul.f32 %v2208, 0.35355338
      %v2250 = vmul.f32 %v2212, 0.35355338
      %v2251 = vmul.f32 %v2214, 0.35355338
      %v2252 = vmul.f32 %v2218, 0.35355338
      %v2253 = vmul.f32 %v2220, 0.35355338
      %v2254 = vmul.f32 %v2224, 0.35355338
      %v2255 = vmul.f32 %v2226, 0.35355338
      %v2256 = vmul.f32 %v2230, 0.35355338
      %v2257 = vmul.f32 %v2232, 0.35355338
      %v2258 = vmul.f32 %v2236, 0.35355338
      %v2259 = vmul.f32 %v2238, 0.35355338
      %v2260 = vsel %vm980, -1e+09, %v2240
      %v2261 = vsel %vm981, -1e+09, %v2241
      %v2262 = vsel %vm980, -1e+09, %v2242
      %v2263 = vsel %vm981, -1e+09, %v2243
      %v2264 = vsel %vm980, -1e+09, %v2244
      %v2265 = vsel %vm981, -1e+09, %v2245
      %v2266 = vsel %vm980, -1e+09, %v2246
      %v2267 = vsel %vm981, -1e+09, %v2247
      %v2268 = vsel %vm980, -1e+09, %v2248
      %v2269 = vsel %vm981, -1e+09, %v2249
      %v2270 = vsel %vm980, -1e+09, %v2250
      %v2271 = vsel %vm981, -1e+09, %v2251
      %v2272 = vsel %vm980, -1e+09, %v2252
      %v2273 = vsel %vm981, -1e+09, %v2253
      %v2274 = vsel %vm980, -1e+09, %v2254
      %v2275 = vsel %vm981, -1e+09, %v2255
      %v2276 = vsel %vm980, -1e+09, %v2256
      %v2277 = vsel %vm981, -1e+09, %v2257
      %v2278 = vsel %vm980, -1e+09, %v2258
      %v2279 = vsel %vm981, -1e+09, %v2259
      %v2280 = vsel %vm744, %v2261, -inf
      %v2281 = vmax.f32 %v2260, %v2280
      %2282 = vmax.xlane.f32.xlu0 %v2281
      %v2283 = vpop.xlane.xlu0 %2282
      %v2284 = vsel %vm744, %v2263, -inf
      %v2285 = vmax.f32 %v2262, %v2284
      %2286 = vmax.xlane.f32.xlu0 %v2285
      %v2287 = vpop.xlane.xlu0 %2286
      %v2288 = vsel %vm744, %v2265, -inf
      %v2289 = vmax.f32 %v2264, %v2288
      %2290 = vmax.xlane.f32.xlu0 %v2289
      %v2291 = vpop.xlane.xlu0 %2290
      %v2292 = vsel %vm744, %v2267, -inf
      %v2293 = vmax.f32 %v2266, %v2292
      %2294 = vmax.xlane.f32.xlu0 %v2293
      %v2295 = vpop.xlane.xlu0 %2294
      %v2296 = vsel %vm744, %v2269, -inf
      %v2297 = vmax.f32 %v2268, %v2296
      %2298 = vmax.xlane.f32.xlu0 %v2297
      %v2299 = vpop.xlane.xlu0 %2298
      %v2300 = vsel %vm744, %v2271, -inf
      %v2301 = vmax.f32 %v2270, %v2300
      %2302 = vmax.xlane.f32.xlu0 %v2301
      %v2303 = vpop.xlane.xlu0 %2302
      %v2304 = vsel %vm744, %v2273, -inf
      %v2305 = vmax.f32 %v2272, %v2304
      %2306 = vmax.xlane.f32.xlu0 %v2305
      %v2307 = vpop.xlane.xlu0 %2306
      %v2308 = vsel %vm744, %v2275, -inf
      %v2309 = vmax.f32 %v2274, %v2308
      %2310 = vmax.xlane.f32.xlu0 %v2309
      %v2311 = vpop.xlane.xlu0 %2310
      %v2312 = vsel %vm744, %v2277, -inf
      %v2313 = vmax.f32 %v2276, %v2312
      %2314 = vmax.xlane.f32.xlu0 %v2313
      %v2315 = vpop.xlane.xlu0 %2314
      %v2316 = vsel %vm744, %v2279, -inf
      %v2317 = vmax.f32 %v2278, %v2316
      %2318 = vmax.xlane.f32.xlu0 %v2317
      %v2319 = vpop.xlane.xlu0 %2318
      %v2320 = vsub.f32 %v2260, %v2283
      %v2321 = vsub.f32 %v2261, %v2283
      %v2322 = vsub.f32 %v2262, %v2287
      %v2323 = vsub.f32 %v2263, %v2287
      %v2324 = vsub.f32 %v2264, %v2291
      %v2325 = vsub.f32 %v2265, %v2291
      %v2326 = vsub.f32 %v2266, %v2295
      %v2327 = vsub.f32 %v2267, %v2295
      %v2328 = vsub.f32 %v2268, %v2299
      %v2329 = vsub.f32 %v2269, %v2299
      %v2330 = vsub.f32 %v2270, %v2303
      %v2331 = vsub.f32 %v2271, %v2303
      %v2332 = vsub.f32 %v2272, %v2307
      %v2333 = vsub.f32 %v2273, %v2307
      %v2334 = vsub.f32 %v2274, %v2311
      %v2335 = vsub.f32 %v2275, %v2311
      %v2336 = vsub.f32 %v2276, %v2315
      %v2337 = vsub.f32 %v2277, %v2315
      %v2338 = vsub.f32 %v2278, %v2319
      %v2339 = vsub.f32 %v2279, %v2319
      %v2340 = vmul.f32 %v2320, 1.442695
      %v2341 = vpow.pop %v2340
      %v2342 = vmul.f32 %v2321, 1.442695
      %v2343 = vpow.pop %v2342
      %v2344 = vmul.f32 %v2322, 1.442695
      %v2345 = vpow.pop %v2344
      %v2346 = vmul.f32 %v2323, 1.442695
      %v2347 = vpow.pop %v2346
      %v2348 = vmul.f32 %v2324, 1.442695
      %v2349 = vpow.pop %v2348
      %v2350 = vmul.f32 %v2325, 1.442695
      %v2351 = vpow.pop %v2350
      %v2352 = vmul.f32 %v2326, 1.442695
      %v2353 = vpow.pop %v2352
      %v2354 = vmul.f32 %v2327, 1.442695
      %v2355 = vpow.pop %v2354
      %v2356 = vmul.f32 %v2328, 1.442695
      %v2357 = vpow.pop %v2356
      %v2358 = vmul.f32 %v2329, 1.442695
      %v2359 = vpow.pop %v2358
      %v2360 = vmul.f32 %v2330, 1.442695
      %v2361 = vpow.pop %v2360
      %v2362 = vmul.f32 %v2331, 1.442695
      %v2363 = vpow.pop %v2362
      %v2364 = vmul.f32 %v2332, 1.442695
      %v2365 = vpow.pop %v2364
      %v2366 = vmul.f32 %v2333, 1.442695
      %v2367 = vpow.pop %v2366
      %v2368 = vmul.f32 %v2334, 1.442695
      %v2369 = vpow.pop %v2368
      %v2370 = vmul.f32 %v2335, 1.442695
      %v2371 = vpow.pop %v2370
      %v2372 = vmul.f32 %v2336, 1.442695
      %v2373 = vpow.pop %v2372
      %v2374 = vmul.f32 %v2337, 1.442695
      %v2375 = vpow.pop %v2374
      %v2376 = vmul.f32 %v2338, 1.442695
      %v2377 = vpow.pop %v2376
      %v2378 = vmul.f32 %v2339, 1.442695
      %v2379 = vpow.pop %v2378
      %v2380 = vsel %vm744, %v2343, 0.0
      %v2381 = vadd.f32 %v2341, %v2380
      %2382 = vadd.xlane.f32.xlu0 %v2381
      %v2383 = vpop.xlane.xlu0 %2382
      %v2384 = vsel %vm744, %v2347, 0.0
      %v2385 = vadd.f32 %v2345, %v2384
      %2386 = vadd.xlane.f32.xlu0 %v2385
      %v2387 = vpop.xlane.xlu0 %2386
      %v2388 = vsel %vm744, %v2351, 0.0
      %v2389 = vadd.f32 %v2349, %v2388
      %2390 = vadd.xlane.f32.xlu0 %v2389
      %v2391 = vpop.xlane.xlu0 %2390
      %v2392 = vsel %vm744, %v2355, 0.0
      %v2393 = vadd.f32 %v2353, %v2392
      %2394 = vadd.xlane.f32.xlu0 %v2393
      %v2395 = vpop.xlane.xlu0 %2394
      %v2396 = vsel %vm744, %v2359, 0.0
      %v2397 = vadd.f32 %v2357, %v2396
      %2398 = vadd.xlane.f32.xlu0 %v2397
      %v2399 = vpop.xlane.xlu0 %2398
      %v2400 = vsel %vm744, %v2363, 0.0
      %v2401 = vadd.f32 %v2361, %v2400
      %2402 = vadd.xlane.f32.xlu0 %v2401
      %v2403 = vpop.xlane.xlu0 %2402
      %v2404 = vsel %vm744, %v2367, 0.0
      %v2405 = vadd.f32 %v2365, %v2404
      %2406 = vadd.xlane.f32.xlu0 %v2405
      %v2407 = vpop.xlane.xlu0 %2406
      %v2408 = vsel %vm744, %v2371, 0.0
      %v2409 = vadd.f32 %v2369, %v2408
      %2410 = vadd.xlane.f32.xlu0 %v2409
      %v2411 = vpop.xlane.xlu0 %2410
      %v2412 = vsel %vm744, %v2375, 0.0
      %v2413 = vadd.f32 %v2373, %v2412
      %2414 = vadd.xlane.f32.xlu0 %v2413
      %v2415 = vpop.xlane.xlu0 %2414
      %v2416 = vsel %vm744, %v2379, 0.0
      %v2417 = vadd.f32 %v2377, %v2416
      %2418 = vadd.xlane.f32.xlu0 %v2417
      %v2419 = vpop.xlane.xlu0 %2418
      %v2420 = vrcp.pop %v2383
      %v2421 = vmul.f32 %v2341, %v2420
      %v2422 = vmul.f32 %v2343, %v2420
      %v2423 = vrcp.pop %v2387
      %v2424 = vmul.f32 %v2345, %v2423
      %v2425 = vmul.f32 %v2347, %v2423
      %v2426 = vrcp.pop %v2391
      %v2427 = vmul.f32 %v2349, %v2426
      %v2428 = vmul.f32 %v2351, %v2426
      %v2429 = vrcp.pop %v2395
      %v2430 = vmul.f32 %v2353, %v2429
      %v2431 = vmul.f32 %v2355, %v2429
      %v2432 = vrcp.pop %v2399
      %v2433 = vmul.f32 %v2357, %v2432
      %v2434 = vmul.f32 %v2359, %v2432
      %v2435 = vrcp.pop %v2403
      %v2436 = vmul.f32 %v2361, %v2435
      %v2437 = vmul.f32 %v2363, %v2435
      %v2438 = vrcp.pop %v2407
      %v2439 = vmul.f32 %v2365, %v2438
      %v2440 = vmul.f32 %v2367, %v2438
      %v2441 = vrcp.pop %v2411
      %v2442 = vmul.f32 %v2369, %v2441
      %v2443 = vmul.f32 %v2371, %v2441
      %v2444 = vrcp.pop %v2415
      %v2445 = vmul.f32 %v2373, %v2444
      %v2446 = vmul.f32 %v2375, %v2444
      %v2447 = vrcp.pop %v2419
      %v2448 = vmul.f32 %v2377, %v2447
      %v2449 = vmul.f32 %v2379, %v2447
      %2450 = vrot.lane.b32.xlu0 %v661, 80
      %v2451 = vpop.permute.xlu0 %2450
      %2452 = vrot.lane.b32.xlu0 %v666, 80
      %v2453 = vpop.permute.xlu0 %2452
      %2454 = vrot.lane.b32.xlu0 %v671, 80
      %v2455 = vpop.permute.xlu0 %2454
      %2456 = vrot.lane.b32.xlu0 %v676, 80
      %v2457 = vpop.permute.xlu0 %2456
      %2458 = vrot.lane.b32.xlu0 %v681, 80
      %v2459 = vpop.permute.xlu0 %2458
      %2460 = vrot.lane.b32.xlu0 %v686, 80
      %v2461 = vpop.permute.xlu0 %2460
      %2462 = vrot.lane.b32.xlu0 %v691, 80
      %v2463 = vpop.permute.xlu0 %2462
      %2464 = vrot.lane.b32.xlu0 %v696, 80
      %v2465 = vpop.permute.xlu0 %2464
      %2466 = vrot.lane.b32.xlu0 %v701, 80
      %v2467 = vpop.permute.xlu0 %2466
      %2468 = vrot.lane.b32.xlu0 %v706, 80
      %v2469 = vpop.permute.xlu0 %2468
      %2470 = vrot.lane.b32.xlu0 %v711, 80
      %v2471 = vpop.permute.xlu0 %2470
      %2472 = vrot.lane.b32.xlu0 %v716, 80
      %v2473 = vpop.permute.xlu0 %2472
      %2474 = vrot.lane.b32.xlu0 %v721, 80
      %v2475 = vpop.permute.xlu0 %2474
      %2476 = vrot.lane.b32.xlu0 %v726, 80
      %v2477 = vpop.permute.xlu0 %2476
      %2478 = vrot.lane.b32.xlu0 %v731, 80
      %v2479 = vpop.permute.xlu0 %2478
      %2480 = vrot.lane.b32.xlu0 %v736, 80
      %v2481 = vpop.permute.xlu0 %2480
      %2482 = vrot.lane.b32.xlu0 %v741, 80
      %v2483 = vpop.permute.xlu0 %2482
      %v2502 = vsel %vm744, %v2422, 0
      %v2505 = vsel %vm744, %v2425, 0
      %v2508 = vsel %vm744, %v2428, 0
      %v2511 = vsel %vm744, %v2431, 0
      %v2514 = vsel %vm744, %v2434, 0
      %v2517 = vsel %vm744, %v2437, 0
      %v2520 = vsel %vm744, %v2440, 0
      %v2523 = vsel %vm744, %v2443, 0
      %v2526 = vsel %vm744, %v2446, 0
      %v2529 = vsel %vm744, %v2449, 0
      %2531 = vmatprep.subr.mxu0 0.0
      %2532 = vmatpush1.msra.mxu0 %v2481
      %2533 = vmatprep.subr.mxu0 0.0
      %2534 = vmatpush1.msra.mxu0 %v2479
      %2535 = vmatprep.subr.mxu0 0.0
      %2536 = vmatpush1.msra.mxu0 %v2477
      %2537 = vmatprep.subr.mxu0 0.0
      %2538 = vmatpush1.msra.mxu0 %v2475
      %2539 = vmatprep.subr.mxu0 0.0
      %2540 = vmatpush1.msra.mxu0 %v2473
      %2541 = vmatprep.subr.mxu0 0.0
      %2542 = vmatpush1.msra.mxu0 %v2471
      %2543 = vmatprep.subr.mxu0 0.0
      %2544 = vmatpush1.msra.mxu0 %v2469
      %2545 = vmatprep.subr.mxu0 0.0
      %2546 = vmatpush1.msra.mxu0 %v2467
      %2547 = vmatprep.subr.mxu0 0.0
      %2548 = vmatpush1.msra.mxu0 %v2465
      %2549 = vmatprep.subr.mxu0 0.0
      %2550 = vmatpush1.msra.mxu0 %v2463
      %2551 = vmatprep.subr.mxu0 0.0
      %2552 = vmatpush1.msra.mxu0 %v2461
      %2553 = vmatprep.subr.mxu0 0.0
      %2554 = vmatpush1.msra.mxu0 %v2459
      %2555 = vmatprep.subr.mxu0 0.0
      %2556 = vmatpush1.msra.mxu0 %v2457
      %2557 = vmatprep.subr.mxu0 0.0
      %2558 = vmatpush1.msra.mxu0 %v2455
      %2559 = vmatprep.subr.mxu0 0.0
      %2560 = vmatpush1.msra.mxu0 %v2453
      %2561 = vmatprep.subr.mxu0 0.0
      %2562 = vmatpush1.msra.mxu0 %v2451
      %2563 = vmatprep.subr.mxu0 0.0
      %2564 = vmatpush2.msra.mxu0 0.0
      %2565 = vmatprep.subr.mxu0 0.0
      %2566 = vmatpush2.msra.mxu0 0.0
      %2567 = vmatprep.subr.mxu0 0.0
      %2568 = vmatpush2.msra.mxu0 0.0
      %2569 = vmatprep.subr.mxu0 0.0
      %2570 = vmatpush2.msra.mxu0 0.0
      %2571 = vmatprep.subr.mxu0 0.0
      %2572 = vmatpush2.msra.mxu0 0.0
      %2573 = vmatprep.subr.mxu0 0.0
      %2574 = vmatpush2.msra.mxu0 0.0
      %2575 = vmatprep.subr.mxu0 0.0
      %2576 = vmatpush2.msra.mxu0 0.0
      %2577 = vmatprep.subr.mxu0 0.0
      %2578 = vmatpush2.msra.mxu0 0.0
      %2579 = vmatprep.subr.mxu0 0.0
      %2580 = vmatpush2.msra.mxu0 0.0
      %2581 = vmatprep.subr.mxu0 0.0
      %2582 = vmatpush2.msra.mxu0 0.0
      %2583 = vmatprep.subr.mxu0 0.0
      %2584 = vmatpush2.msra.mxu0 0.0
      %2585 = vmatprep.subr.mxu0 0.0
      %2586 = vmatpush2.msra.mxu0 0.0
      %2587 = vmatprep.subr.mxu0 0.0
      %2588 = vmatpush2.msra.mxu0 0.0
      %2589 = vmatprep.subr.mxu0 0.0
      %2590 = vmatpush2.msra.mxu0 0.0
      %2591 = vmatprep.subr.mxu0 0.0
      %2592 = vmatpush2.msra.mxu0 0.0
      %2593 = vmatprep.subr.mxu0 0.0
      %2594 = vmatpush2.msra.mxu0 %v2483
      %2595 = vmatprep.mubr.f32.mxu0 %v2502
      %2596 = vmatmul.mubr.f32.gmra.mxu0 %v2421
      %v2597 = vpop.f32.mrf.mxu0
      %v2598 = vadd.f32 0.0, %v2597
      %v2599 = vpop.f32.mrf.mxu0
      %2600 = vmatprep.mubr.f32.mxu0 %v2505
      %2601 = vmatmul.mubr.f32.gmra.mxu0 %v2424
      %v2602 = vpop.f32.mrf.mxu0
      %v2603 = vadd.f32 0.0, %v2602
      %v2604 = vpop.f32.mrf.mxu0
      %2605 = vmatprep.mubr.f32.mxu0 %v2508
      %2606 = vmatmul.mubr.f32.gmra.mxu0 %v2427
      %v2607 = vpop.f32.mrf.mxu0
      %v2608 = vadd.f32 0.0, %v2607
      %v2609 = vpop.f32.mrf.mxu0
      %2610 = vmatprep.mubr.f32.mxu0 %v2511
      %2611 = vmatmul.mubr.f32.gmra.mxu0 %v2430
      %v2612 = vpop.f32.mrf.mxu0
      %v2613 = vadd.f32 0.0, %v2612
      %v2614 = vpop.f32.mrf.mxu0
      %2615 = vmatprep.mubr.f32.mxu0 %v2514
      %2616 = vmatmul.mubr.f32.gmra.mxu0 %v2433
      %v2617 = vpop.f32.mrf.mxu0
      %v2618 = vadd.f32 0.0, %v2617
      %v2619 = vpop.f32.mrf.mxu0
      %2620 = vmatprep.mubr.f32.mxu0 %v2517
      %2621 = vmatmul.mubr.f32.gmra.mxu0 %v2436
      %v2622 = vpop.f32.mrf.mxu0
      %v2623 = vadd.f32 0.0, %v2622
      %v2624 = vpop.f32.mrf.mxu0
      %2625 = vmatprep.mubr.f32.mxu0 %v2520
      %2626 = vmatmul.mubr.f32.gmra.mxu0 %v2439
      %v2627 = vpop.f32.mrf.mxu0
      %v2628 = vadd.f32 0.0, %v2627
      %v2629 = vpop.f32.mrf.mxu0
      %2630 = vmatprep.mubr.f32.mxu0 %v2523
      %2631 = vmatmul.mubr.f32.gmra.mxu0 %v2442
      %v2632 = vpop.f32.mrf.mxu0
      %v2633 = vadd.f32 0.0, %v2632
      %v2634 = vpop.f32.mrf.mxu0
      %2635 = vmatprep.mubr.f32.mxu0 %v2526
      %2636 = vmatmul.mubr.f32.gmra.mxu0 %v2445
      %v2637 = vpop.f32.mrf.mxu0
      %v2638 = vadd.f32 0.0, %v2637
      %v2639 = vpop.f32.mrf.mxu0
      %2640 = vmatprep.mubr.f32.mxu0 %v2529
      %2641 = vmatmul.mubr.f32.gmra.mxu0 %v2448
      %v2642 = vpop.f32.mrf.mxu0
      %v2643 = vadd.f32 0.0, %v2642
      %v2644 = vpop.f32.mrf.mxu0
      %2645 = vdwg.mxu0
      %2646 = vrot.lane.b32.xlu0 %v484, 104
      %v2647 = vpop.permute.xlu0 %2646
      %2648 = vrot.lane.b32.xlu0 %v489, 104
      %v2649 = vpop.permute.xlu0 %2648
      %2650 = vrot.lane.b32.xlu0 %v494, 104
      %v2651 = vpop.permute.xlu0 %2650
      %2652 = vrot.lane.b32.xlu0 %v499, 104
      %v2653 = vpop.permute.xlu0 %2652
      %2654 = vrot.lane.b32.xlu0 %v504, 104
      %v2655 = vpop.permute.xlu0 %2654
      %2656 = vrot.lane.b32.xlu0 %v509, 104
      %v2657 = vpop.permute.xlu0 %2656
      %2658 = vrot.lane.b32.xlu0 %v514, 104
      %v2659 = vpop.permute.xlu0 %2658
      %2660 = vrot.lane.b32.xlu0 %v519, 104
      %v2661 = vpop.permute.xlu0 %2660
      %2662 = vrot.lane.b32.xlu0 %v524, 104
      %v2663 = vpop.permute.xlu0 %2662
      %2664 = vrot.lane.b32.xlu0 %v529, 104
      %v2665 = vpop.permute.xlu0 %2664
      %2666 = vrot.lane.b32.xlu0 %v661, 104
      %v2667 = vpop.permute.xlu0 %2666
      %2668 = vrot.lane.b32.xlu0 %v666, 104
      %v2669 = vpop.permute.xlu0 %2668
      %2670 = vrot.lane.b32.xlu0 %v671, 104
      %v2671 = vpop.permute.xlu0 %2670
      %2672 = vrot.lane.b32.xlu0 %v676, 104
      %v2673 = vpop.permute.xlu0 %2672
      %2674 = vrot.lane.b32.xlu0 %v681, 104
      %v2675 = vpop.permute.xlu0 %2674
      %2676 = vrot.lane.b32.xlu0 %v686, 104
      %v2677 = vpop.permute.xlu0 %2676
      %2678 = vrot.lane.b32.xlu0 %v691, 104
      %v2679 = vpop.permute.xlu0 %2678
      %2680 = vrot.lane.b32.xlu0 %v696, 104
      %v2681 = vpop.permute.xlu0 %2680
      %2682 = vrot.lane.b32.xlu0 %v701, 104
      %v2683 = vpop.permute.xlu0 %2682
      %2684 = vrot.lane.b32.xlu0 %v706, 104
      %v2685 = vpop.permute.xlu0 %2684
      %2686 = vrot.lane.b32.xlu0 %v711, 104
      %v2687 = vpop.permute.xlu0 %2686
      %2688 = vrot.lane.b32.xlu0 %v716, 104
      %v2689 = vpop.permute.xlu0 %2688
      %2690 = vrot.lane.b32.xlu0 %v721, 104
      %v2691 = vpop.permute.xlu0 %2690
      %2692 = vrot.lane.b32.xlu0 %v726, 104
      %v2693 = vpop.permute.xlu0 %2692
      %2694 = vrot.lane.b32.xlu0 %v731, 104
      %v2695 = vpop.permute.xlu0 %2694
      %2696 = vrot.lane.b32.xlu0 %v736, 104
      %v2697 = vpop.permute.xlu0 %2696
      %2698 = vrot.lane.b32.xlu0 %v741, 104
      %v2699 = vpop.permute.xlu0 %2698
      %v2700 = vsel %vm744, %v2647, 0
      %v2702 = vsel %vm744, %v2649, 0
      %v2704 = vsel %vm744, %v2651, 0
      %v2706 = vsel %vm744, %v2653, 0
      %v2708 = vsel %vm744, %v2655, 0
      %v2710 = vsel %vm744, %v2657, 0
      %v2712 = vsel %vm744, %v2659, 0
      %v2714 = vsel %vm744, %v2661, 0
      %v2716 = vsel %vm744, %v2663, 0
      %v2718 = vsel %vm744, %v2665, 0
      %v2720 = vsel %vm744, %v2667, 0
      %v2722 = vsel %vm744, %v2669, 0
      %v2724 = vsel %vm744, %v2671, 0
      %v2726 = vsel %vm744, %v2673, 0
      %v2728 = vsel %vm744, %v2675, 0
      %v2730 = vsel %vm744, %v2677, 0
      %v2732 = vsel %vm744, %v2679, 0
      %v2734 = vsel %vm744, %v2681, 0
      %v2736 = vsel %vm744, %v2683, 0
      %v2738 = vsel %vm744, %v2685, 0
      %v2740 = vsel %vm744, %v2687, 0
      %v2742 = vsel %vm744, %v2689, 0
      %v2744 = vsel %vm744, %v2691, 0
      %v2746 = vsel %vm744, %v2693, 0
      %v2748 = vsel %vm744, %v2695, 0
      %v2750 = vsel %vm744, %v2697, 0
      %v2752 = vsel %vm744, %v2699, 0
      %2754 = vmatprep.subr.mxu0 0.0
      %2755 = vmatpush1.xpose.msra.mxu0 %v2750
      %2756 = vmatprep.subr.mxu0 0.0
      %2757 = vmatpush1.xpose.msra.mxu0 %v2748
      %2758 = vmatprep.subr.mxu0 0.0
      %2759 = vmatpush1.xpose.msra.mxu0 %v2746
      %2760 = vmatprep.subr.mxu0 0.0
      %2761 = vmatpush1.xpose.msra.mxu0 %v2744
      %2762 = vmatprep.subr.mxu0 0.0
      %2763 = vmatpush1.xpose.msra.mxu0 %v2742
      %2764 = vmatprep.subr.mxu0 0.0
      %2765 = vmatpush1.xpose.msra.mxu0 %v2740
      %2766 = vmatprep.subr.mxu0 0.0
      %2767 = vmatpush1.xpose.msra.mxu0 %v2738
      %2768 = vmatprep.subr.mxu0 0.0
      %2769 = vmatpush1.xpose.msra.mxu0 %v2736
      %2770 = vmatprep.subr.mxu0 0.0
      %2771 = vmatpush1.xpose.msra.mxu0 %v2734
      %2772 = vmatprep.subr.mxu0 0.0
      %2773 = vmatpush1.xpose.msra.mxu0 %v2732
      %2774 = vmatprep.subr.mxu0 0.0
      %2775 = vmatpush1.xpose.msra.mxu0 %v2730
      %2776 = vmatprep.subr.mxu0 0.0
      %2777 = vmatpush1.xpose.msra.mxu0 %v2728
      %2778 = vmatprep.subr.mxu0 0.0
      %2779 = vmatpush1.xpose.msra.mxu0 %v2726
      %2780 = vmatprep.subr.mxu0 0.0
      %2781 = vmatpush1.xpose.msra.mxu0 %v2724
      %2782 = vmatprep.subr.mxu0 0.0
      %2783 = vmatpush1.xpose.msra.mxu0 %v2722
      %2784 = vmatprep.subr.mxu0 0.0
      %2785 = vmatpush1.xpose.msra.mxu0 %v2720
      %2786 = vmatprep.subr.mxu0 0.0
      %2787 = vmatpush2.xpose.msra.mxu0 0.0
      %2788 = vmatprep.subr.mxu0 0.0
      %2789 = vmatpush2.xpose.msra.mxu0 0.0
      %2790 = vmatprep.subr.mxu0 0.0
      %2791 = vmatpush2.xpose.msra.mxu0 0.0
      %2792 = vmatprep.subr.mxu0 0.0
      %2793 = vmatpush2.xpose.msra.mxu0 0.0
      %2794 = vmatprep.subr.mxu0 0.0
      %2795 = vmatpush2.xpose.msra.mxu0 0.0
      %2796 = vmatprep.subr.mxu0 0.0
      %2797 = vmatpush2.xpose.msra.mxu0 0.0
      %2798 = vmatprep.subr.mxu0 0.0
      %2799 = vmatpush2.xpose.msra.mxu0 0.0
      %2800 = vmatprep.subr.mxu0 0.0
      %2801 = vmatpush2.xpose.msra.mxu0 0.0
      %2802 = vmatprep.subr.mxu0 0.0
      %2803 = vmatpush2.xpose.msra.mxu0 0.0
      %2804 = vmatprep.subr.mxu0 0.0
      %2805 = vmatpush2.xpose.msra.mxu0 0.0
      %2806 = vmatprep.subr.mxu0 0.0
      %2807 = vmatpush2.xpose.msra.mxu0 0.0
      %2808 = vmatprep.subr.mxu0 0.0
      %2809 = vmatpush2.xpose.msra.mxu0 0.0
      %2810 = vmatprep.subr.mxu0 0.0
      %2811 = vmatpush2.xpose.msra.mxu0 0.0
      %2812 = vmatprep.subr.mxu0 0.0
      %2813 = vmatpush2.xpose.msra.mxu0 0.0
      %2814 = vmatprep.subr.mxu0 0.0
      %2815 = vmatpush2.xpose.msra.mxu0 0.0
      %2816 = vmatprep.subr.mxu0 0.0
      %2817 = vmatpush2.xpose.msra.mxu0 %v2752
      %2818 = vmatprep.mubr.f32.mxu0 0.0
      %2819 = vmatmul.mubr.f32.gmra.mxu0 %v2700
      %v2820 = vpop.f32.mrf.mxu0
      %v2821 = vadd.f32 0.0, %v2820
      %v2822 = vpop.f32.mrf.mxu0
      %v2823 = vadd.f32 0.0, %v2822
      %2824 = vmatprep.mubr.f32.mxu0 0.0
      %2825 = vmatmul.mubr.f32.gmra.mxu0 %v2702
      %v2826 = vpop.f32.mrf.mxu0
      %v2827 = vadd.f32 0.0, %v2826
      %v2828 = vpop.f32.mrf.mxu0
      %v2829 = vadd.f32 0.0, %v2828
      %2830 = vmatprep.mubr.f32.mxu0 0.0
      %2831 = vmatmul.mubr.f32.gmra.mxu0 %v2704
      %v2832 = vpop.f32.mrf.mxu0
      %v2833 = vadd.f32 0.0, %v2832
      %v2834 = vpop.f32.mrf.mxu0
      %v2835 = vadd.f32 0.0, %v2834
      %2836 = vmatprep.mubr.f32.mxu0 0.0
      %2837 = vmatmul.mubr.f32.gmra.mxu0 %v2706
      %v2838 = vpop.f32.mrf.mxu0
      %v2839 = vadd.f32 0.0, %v2838
      %v2840 = vpop.f32.mrf.mxu0
      %v2841 = vadd.f32 0.0, %v2840
      %2842 = vmatprep.mubr.f32.mxu0 0.0
      %2843 = vmatmul.mubr.f32.gmra.mxu0 %v2708
      %v2844 = vpop.f32.mrf.mxu0
      %v2845 = vadd.f32 0.0, %v2844
      %v2846 = vpop.f32.mrf.mxu0
      %v2847 = vadd.f32 0.0, %v2846
      %2848 = vmatprep.mubr.f32.mxu0 0.0
      %2849 = vmatmul.mubr.f32.gmra.mxu0 %v2710
      %v2850 = vpop.f32.mrf.mxu0
      %v2851 = vadd.f32 0.0, %v2850
      %v2852 = vpop.f32.mrf.mxu0
      %v2853 = vadd.f32 0.0, %v2852
      %2854 = vmatprep.mubr.f32.mxu0 0.0
      %2855 = vmatmul.mubr.f32.gmra.mxu0 %v2712
      %v2856 = vpop.f32.mrf.mxu0
      %v2857 = vadd.f32 0.0, %v2856
      %v2858 = vpop.f32.mrf.mxu0
      %v2859 = vadd.f32 0.0, %v2858
      %2860 = vmatprep.mubr.f32.mxu0 0.0
      %2861 = vmatmul.mubr.f32.gmra.mxu0 %v2714
      %v2862 = vpop.f32.mrf.mxu0
      %v2863 = vadd.f32 0.0, %v2862
      %v2864 = vpop.f32.mrf.mxu0
      %v2865 = vadd.f32 0.0, %v2864
      %2866 = vmatprep.mubr.f32.mxu0 0.0
      %2867 = vmatmul.mubr.f32.gmra.mxu0 %v2716
      %v2868 = vpop.f32.mrf.mxu0
      %v2869 = vadd.f32 0.0, %v2868
      %v2870 = vpop.f32.mrf.mxu0
      %v2871 = vadd.f32 0.0, %v2870
      %2872 = vmatprep.mubr.f32.mxu0 0.0
      %2873 = vmatmul.mubr.f32.gmra.mxu0 %v2718
      %v2874 = vpop.f32.mrf.mxu0
      %v2875 = vadd.f32 0.0, %v2874
      %v2876 = vpop.f32.mrf.mxu0
      %v2877 = vadd.f32 0.0, %v2876
      %2878 = vdwg.mxu0
      %v2879 = vmul.f32 %v2821, 0.35355338
      %v2880 = vmul.f32 %v2823, 0.35355338
      %v2881 = vmul.f32 %v2827, 0.35355338
      %v2882 = vmul.f32 %v2829, 0.35355338
      %v2883 = vmul.f32 %v2833, 0.35355338
      %v2884 = vmul.f32 %v2835, 0.35355338
      %v2885 = vmul.f32 %v2839, 0.35355338
      %v2886 = vmul.f32 %v2841, 0.35355338
      %v2887 = vmul.f32 %v2845, 0.35355338
      %v2888 = vmul.f32 %v2847, 0.35355338
      %v2889 = vmul.f32 %v2851, 0.35355338
      %v2890 = vmul.f32 %v2853, 0.35355338
      %v2891 = vmul.f32 %v2857, 0.35355338
      %v2892 = vmul.f32 %v2859, 0.35355338
      %v2893 = vmul.f32 %v2863, 0.35355338
      %v2894 = vmul.f32 %v2865, 0.35355338
      %v2895 = vmul.f32 %v2869, 0.35355338
      %v2896 = vmul.f32 %v2871, 0.35355338
      %v2897 = vmul.f32 %v2875, 0.35355338
      %v2898 = vmul.f32 %v2877, 0.35355338
      %v2899 = vsel %vm980, -1e+09, %v2879
      %v2900 = vsel %vm981, -1e+09, %v2880
      %v2901 = vsel %vm980, -1e+09, %v2881
      %v2902 = vsel %vm981, -1e+09, %v2882
      %v2903 = vsel %vm980, -1e+09, %v2883
      %v2904 = vsel %vm981, -1e+09, %v2884
      %v2905 = vsel %vm980, -1e+09, %v2885
      %v2906 = vsel %vm981, -1e+09, %v2886
      %v2907 = vsel %vm980, -1e+09, %v2887
      %v2908 = vsel %vm981, -1e+09, %v2888
      %v2909 = vsel %vm980, -1e+09, %v2889
      %v2910 = vsel %vm981, -1e+09, %v2890
      %v2911 = vsel %vm980, -1e+09, %v2891
      %v2912 = vsel %vm981, -1e+09, %v2892
      %v2913 = vsel %vm980, -1e+09, %v2893
      %v2914 = vsel %vm981, -1e+09, %v2894
      %v2915 = vsel %vm980, -1e+09, %v2895
      %v2916 = vsel %vm981, -1e+09, %v2896
      %v2917 = vsel %vm980, -1e+09, %v2897
      %v2918 = vsel %vm981, -1e+09, %v2898
      %v2919 = vsel %vm744, %v2900, -inf
      %v2920 = vmax.f32 %v2899, %v2919
      %2921 = vmax.xlane.f32.xlu0 %v2920
      %v2922 = vpop.xlane.xlu0 %2921
      %v2923 = vsel %vm744, %v2902, -inf
      %v2924 = vmax.f32 %v2901, %v2923
      %2925 = vmax.xlane.f32.xlu0 %v2924
      %v2926 = vpop.xlane.xlu0 %2925
      %v2927 = vsel %vm744, %v2904, -inf
      %v2928 = vmax.f32 %v2903, %v2927
      %2929 = vmax.xlane.f32.xlu0 %v2928
      %v2930 = vpop.xlane.xlu0 %2929
      %v2931 = vsel %vm744, %v2906, -inf
      %v2932 = vmax.f32 %v2905, %v2931
      %2933 = vmax.xlane.f32.xlu0 %v2932
      %v2934 = vpop.xlane.xlu0 %2933
      %v2935 = vsel %vm744, %v2908, -inf
      %v2936 = vmax.f32 %v2907, %v2935
      %2937 = vmax.xlane.f32.xlu0 %v2936
      %v2938 = vpop.xlane.xlu0 %2937
      %v2939 = vsel %vm744, %v2910, -inf
      %v2940 = vmax.f32 %v2909, %v2939
      %2941 = vmax.xlane.f32.xlu0 %v2940
      %v2942 = vpop.xlane.xlu0 %2941
      %v2943 = vsel %vm744, %v2912, -inf
      %v2944 = vmax.f32 %v2911, %v2943
      %2945 = vmax.xlane.f32.xlu0 %v2944
      %v2946 = vpop.xlane.xlu0 %2945
      %v2947 = vsel %vm744, %v2914, -inf
      %v2948 = vmax.f32 %v2913, %v2947
      %2949 = vmax.xlane.f32.xlu0 %v2948
      %v2950 = vpop.xlane.xlu0 %2949
      %v2951 = vsel %vm744, %v2916, -inf
      %v2952 = vmax.f32 %v2915, %v2951
      %2953 = vmax.xlane.f32.xlu0 %v2952
      %v2954 = vpop.xlane.xlu0 %2953
      %v2955 = vsel %vm744, %v2918, -inf
      %v2956 = vmax.f32 %v2917, %v2955
      %2957 = vmax.xlane.f32.xlu0 %v2956
      %v2958 = vpop.xlane.xlu0 %2957
      %v2959 = vsub.f32 %v2899, %v2922
      %v2960 = vsub.f32 %v2900, %v2922
      %v2961 = vsub.f32 %v2901, %v2926
      %v2962 = vsub.f32 %v2902, %v2926
      %v2963 = vsub.f32 %v2903, %v2930
      %v2964 = vsub.f32 %v2904, %v2930
      %v2965 = vsub.f32 %v2905, %v2934
      %v2966 = vsub.f32 %v2906, %v2934
      %v2967 = vsub.f32 %v2907, %v2938
      %v2968 = vsub.f32 %v2908, %v2938
      %v2969 = vsub.f32 %v2909, %v2942
      %v2970 = vsub.f32 %v2910, %v2942
      %v2971 = vsub.f32 %v2911, %v2946
      %v2972 = vsub.f32 %v2912, %v2946
      %v2973 = vsub.f32 %v2913, %v2950
      %v2974 = vsub.f32 %v2914, %v2950
      %v2975 = vsub.f32 %v2915, %v2954
      %v2976 = vsub.f32 %v2916, %v2954
      %v2977 = vsub.f32 %v2917, %v2958
      %v2978 = vsub.f32 %v2918, %v2958
      %v2979 = vmul.f32 %v2959, 1.442695
      %v2980 = vpow.pop %v2979
      %v2981 = vmul.f32 %v2960, 1.442695
      %v2982 = vpow.pop %v2981
      %v2983 = vmul.f32 %v2961, 1.442695
      %v2984 = vpow.pop %v2983
      %v2985 = vmul.f32 %v2962, 1.442695
      %v2986 = vpow.pop %v2985
      %v2987 = vmul.f32 %v2963, 1.442695
      %v2988 = vpow.pop %v2987
      %v2989 = vmul.f32 %v2964, 1.442695
      %v2990 = vpow.pop %v2989
      %v2991 = vmul.f32 %v2965, 1.442695
      %v2992 = vpow.pop %v2991
      %v2993 = vmul.f32 %v2966, 1.442695
      %v2994 = vpow.pop %v2993
      %v2995 = vmul.f32 %v2967, 1.442695
      %v2996 = vpow.pop %v2995
      %v2997 = vmul.f32 %v2968, 1.442695
      %v2998 = vpow.pop %v2997
      %v2999 = vmul.f32 %v2969, 1.442695
      %v3000 = vpow.pop %v2999
      %v3001 = vmul.f32 %v2970, 1.442695
      %v3002 = vpow.pop %v3001
      %v3003 = vmul.f32 %v2971, 1.442695
      %v3004 = vpow.pop %v3003
      %v3005 = vmul.f32 %v2972, 1.442695
      %v3006 = vpow.pop %v3005
      %v3007 = vmul.f32 %v2973, 1.442695
      %v3008 = vpow.pop %v3007
      %v3009 = vmul.f32 %v2974, 1.442695
      %v3010 = vpow.pop %v3009
      %v3011 = vmul.f32 %v2975, 1.442695
      %v3012 = vpow.pop %v3011
      %v3013 = vmul.f32 %v2976, 1.442695
      %v3014 = vpow.pop %v3013
      %v3015 = vmul.f32 %v2977, 1.442695
      %v3016 = vpow.pop %v3015
      %v3017 = vmul.f32 %v2978, 1.442695
      %v3018 = vpow.pop %v3017
      %v3019 = vsel %vm744, %v2982, 0.0
      %v3020 = vadd.f32 %v2980, %v3019
      %3021 = vadd.xlane.f32.xlu0 %v3020
      %v3022 = vpop.xlane.xlu0 %3021
      %v3023 = vsel %vm744, %v2986, 0.0
      %v3024 = vadd.f32 %v2984, %v3023
      %3025 = vadd.xlane.f32.xlu0 %v3024
      %v3026 = vpop.xlane.xlu0 %3025
      %v3027 = vsel %vm744, %v2990, 0.0
      %v3028 = vadd.f32 %v2988, %v3027
      %3029 = vadd.xlane.f32.xlu0 %v3028
      %v3030 = vpop.xlane.xlu0 %3029
      %v3031 = vsel %vm744, %v2994, 0.0
      %v3032 = vadd.f32 %v2992, %v3031
      %3033 = vadd.xlane.f32.xlu0 %v3032
      %v3034 = vpop.xlane.xlu0 %3033
      %v3035 = vsel %vm744, %v2998, 0.0
      %v3036 = vadd.f32 %v2996, %v3035
      %3037 = vadd.xlane.f32.xlu0 %v3036
      %v3038 = vpop.xlane.xlu0 %3037
      %v3039 = vsel %vm744, %v3002, 0.0
      %v3040 = vadd.f32 %v3000, %v3039
      %3041 = vadd.xlane.f32.xlu0 %v3040
      %v3042 = vpop.xlane.xlu0 %3041
      %v3043 = vsel %vm744, %v3006, 0.0
      %v3044 = vadd.f32 %v3004, %v3043
      %3045 = vadd.xlane.f32.xlu0 %v3044
      %v3046 = vpop.xlane.xlu0 %3045
      %v3047 = vsel %vm744, %v3010, 0.0
      %v3048 = vadd.f32 %v3008, %v3047
      %3049 = vadd.xlane.f32.xlu0 %v3048
      %v3050 = vpop.xlane.xlu0 %3049
      %v3051 = vsel %vm744, %v3014, 0.0
      %v3052 = vadd.f32 %v3012, %v3051
      %3053 = vadd.xlane.f32.xlu0 %v3052
      %v3054 = vpop.xlane.xlu0 %3053
      %v3055 = vsel %vm744, %v3018, 0.0
      %v3056 = vadd.f32 %v3016, %v3055
      %3057 = vadd.xlane.f32.xlu0 %v3056
      %v3058 = vpop.xlane.xlu0 %3057
      %v3059 = vrcp.pop %v3022
      %v3060 = vmul.f32 %v2980, %v3059
      %v3061 = vmul.f32 %v2982, %v3059
      %v3062 = vrcp.pop %v3026
      %v3063 = vmul.f32 %v2984, %v3062
      %v3064 = vmul.f32 %v2986, %v3062
      %v3065 = vrcp.pop %v3030
      %v3066 = vmul.f32 %v2988, %v3065
      %v3067 = vmul.f32 %v2990, %v3065
      %v3068 = vrcp.pop %v3034
      %v3069 = vmul.f32 %v2992, %v3068
      %v3070 = vmul.f32 %v2994, %v3068
      %v3071 = vrcp.pop %v3038
      %v3072 = vmul.f32 %v2996, %v3071
      %v3073 = vmul.f32 %v2998, %v3071
      %v3074 = vrcp.pop %v3042
      %v3075 = vmul.f32 %v3000, %v3074
      %v3076 = vmul.f32 %v3002, %v3074
      %v3077 = vrcp.pop %v3046
      %v3078 = vmul.f32 %v3004, %v3077
      %v3079 = vmul.f32 %v3006, %v3077
      %v3080 = vrcp.pop %v3050
      %v3081 = vmul.f32 %v3008, %v3080
      %v3082 = vmul.f32 %v3010, %v3080
      %v3083 = vrcp.pop %v3054
      %v3084 = vmul.f32 %v3012, %v3083
      %v3085 = vmul.f32 %v3014, %v3083
      %v3086 = vrcp.pop %v3058
      %v3087 = vmul.f32 %v3016, %v3086
      %v3088 = vmul.f32 %v3018, %v3086
      %3089 = vrot.lane.b32.xlu0 %v661, 72
      %v3090 = vpop.permute.xlu0 %3089
      %3091 = vrot.lane.b32.xlu0 %v666, 72
      %v3092 = vpop.permute.xlu0 %3091
      %3093 = vrot.lane.b32.xlu0 %v671, 72
      %v3094 = vpop.permute.xlu0 %3093
      %3095 = vrot.lane.b32.xlu0 %v676, 72
      %v3096 = vpop.permute.xlu0 %3095
      %3097 = vrot.lane.b32.xlu0 %v681, 72
      %v3098 = vpop.permute.xlu0 %3097
      %3099 = vrot.lane.b32.xlu0 %v686, 72
      %v3100 = vpop.permute.xlu0 %3099
      %3101 = vrot.lane.b32.xlu0 %v691, 72
      %v3102 = vpop.permute.xlu0 %3101
      %3103 = vrot.lane.b32.xlu0 %v696, 72
      %v3104 = vpop.permute.xlu0 %3103
      %3105 = vrot.lane.b32.xlu0 %v701, 72
      %v3106 = vpop.permute.xlu0 %3105
      %3107 = vrot.lane.b32.xlu0 %v706, 72
      %v3108 = vpop.permute.xlu0 %3107
      %3109 = vrot.lane.b32.xlu0 %v711, 72
      %v3110 = vpop.permute.xlu0 %3109
      %3111 = vrot.lane.b32.xlu0 %v716, 72
      %v3112 = vpop.permute.xlu0 %3111
      %3113 = vrot.lane.b32.xlu0 %v721, 72
      %v3114 = vpop.permute.xlu0 %3113
      %3115 = vrot.lane.b32.xlu0 %v726, 72
      %v3116 = vpop.permute.xlu0 %3115
      %3117 = vrot.lane.b32.xlu0 %v731, 72
      %v3118 = vpop.permute.xlu0 %3117
      %3119 = vrot.lane.b32.xlu0 %v736, 72
      %v3120 = vpop.permute.xlu0 %3119
      %3121 = vrot.lane.b32.xlu0 %v741, 72
      %v3122 = vpop.permute.xlu0 %3121
      %v3141 = vsel %vm744, %v3061, 0
      %v3144 = vsel %vm744, %v3064, 0
      %v3147 = vsel %vm744, %v3067, 0
      %v3150 = vsel %vm744, %v3070, 0
      %v3153 = vsel %vm744, %v3073, 0
      %v3156 = vsel %vm744, %v3076, 0
      %v3159 = vsel %vm744, %v3079, 0
      %v3162 = vsel %vm744, %v3082, 0
      %v3165 = vsel %vm744, %v3085, 0
      %v3168 = vsel %vm744, %v3088, 0
      %3170 = vmatprep.subr.mxu0 0.0
      %3171 = vmatpush1.msra.mxu0 %v3120
      %3172 = vmatprep.subr.mxu0 0.0
      %3173 = vmatpush1.msra.mxu0 %v3118
      %3174 = vmatprep.subr.mxu0 0.0
      %3175 = vmatpush1.msra.mxu0 %v3116
      %3176 = vmatprep.subr.mxu0 0.0
      %3177 = vmatpush1.msra.mxu0 %v3114
      %3178 = vmatprep.subr.mxu0 0.0
      %3179 = vmatpush1.msra.mxu0 %v3112
      %3180 = vmatprep.subr.mxu0 0.0
      %3181 = vmatpush1.msra.mxu0 %v3110
      %3182 = vmatprep.subr.mxu0 0.0
      %3183 = vmatpush1.msra.mxu0 %v3108
      %3184 = vmatprep.subr.mxu0 0.0
      %3185 = vmatpush1.msra.mxu0 %v3106
      %3186 = vmatprep.subr.mxu0 0.0
      %3187 = vmatpush1.msra.mxu0 %v3104
      %3188 = vmatprep.subr.mxu0 0.0
      %3189 = vmatpush1.msra.mxu0 %v3102
      %3190 = vmatprep.subr.mxu0 0.0
      %3191 = vmatpush1.msra.mxu0 %v3100
      %3192 = vmatprep.subr.mxu0 0.0
      %3193 = vmatpush1.msra.mxu0 %v3098
      %3194 = vmatprep.subr.mxu0 0.0
      %3195 = vmatpush1.msra.mxu0 %v3096
      %3196 = vmatprep.subr.mxu0 0.0
      %3197 = vmatpush1.msra.mxu0 %v3094
      %3198 = vmatprep.subr.mxu0 0.0
      %3199 = vmatpush1.msra.mxu0 %v3092
      %3200 = vmatprep.subr.mxu0 0.0
      %3201 = vmatpush1.msra.mxu0 %v3090
      %3202 = vmatprep.subr.mxu0 0.0
      %3203 = vmatpush2.msra.mxu0 0.0
      %3204 = vmatprep.subr.mxu0 0.0
      %3205 = vmatpush2.msra.mxu0 0.0
      %3206 = vmatprep.subr.mxu0 0.0
      %3207 = vmatpush2.msra.mxu0 0.0
      %3208 = vmatprep.subr.mxu0 0.0
      %3209 = vmatpush2.msra.mxu0 0.0
      %3210 = vmatprep.subr.mxu0 0.0
      %3211 = vmatpush2.msra.mxu0 0.0
      %3212 = vmatprep.subr.mxu0 0.0
      %3213 = vmatpush2.msra.mxu0 0.0
      %3214 = vmatprep.subr.mxu0 0.0
      %3215 = vmatpush2.msra.mxu0 0.0
      %3216 = vmatprep.subr.mxu0 0.0
      %3217 = vmatpush2.msra.mxu0 0.0
      %3218 = vmatprep.subr.mxu0 0.0
      %3219 = vmatpush2.msra.mxu0 0.0
      %3220 = vmatprep.subr.mxu0 0.0
      %3221 = vmatpush2.msra.mxu0 0.0
      %3222 = vmatprep.subr.mxu0 0.0
      %3223 = vmatpush2.msra.mxu0 0.0
      %3224 = vmatprep.subr.mxu0 0.0
      %3225 = vmatpush2.msra.mxu0 0.0
      %3226 = vmatprep.subr.mxu0 0.0
      %3227 = vmatpush2.msra.mxu0 0.0
      %3228 = vmatprep.subr.mxu0 0.0
      %3229 = vmatpush2.msra.mxu0 0.0
      %3230 = vmatprep.subr.mxu0 0.0
      %3231 = vmatpush2.msra.mxu0 0.0
      %3232 = vmatprep.subr.mxu0 0.0
      %3233 = vmatpush2.msra.mxu0 %v3122
      %3234 = vmatprep.mubr.f32.mxu0 %v3141
      %3235 = vmatmul.mubr.f32.gmra.mxu0 %v3060
      %v3236 = vpop.f32.mrf.mxu0
      %v3237 = vadd.f32 0.0, %v3236
      %v3238 = vpop.f32.mrf.mxu0
      %3239 = vmatprep.mubr.f32.mxu0 %v3144
      %3240 = vmatmul.mubr.f32.gmra.mxu0 %v3063
      %v3241 = vpop.f32.mrf.mxu0
      %v3242 = vadd.f32 0.0, %v3241
      %v3243 = vpop.f32.mrf.mxu0
      %3244 = vmatprep.mubr.f32.mxu0 %v3147
      %3245 = vmatmul.mubr.f32.gmra.mxu0 %v3066
      %v3246 = vpop.f32.mrf.mxu0
      %v3247 = vadd.f32 0.0, %v3246
      %v3248 = vpop.f32.mrf.mxu0
      %3249 = vmatprep.mubr.f32.mxu0 %v3150
      %3250 = vmatmul.mubr.f32.gmra.mxu0 %v3069
      %v3251 = vpop.f32.mrf.mxu0
      %v3252 = vadd.f32 0.0, %v3251
      %v3253 = vpop.f32.mrf.mxu0
      %3254 = vmatprep.mubr.f32.mxu0 %v3153
      %3255 = vmatmul.mubr.f32.gmra.mxu0 %v3072
      %v3256 = vpop.f32.mrf.mxu0
      %v3257 = vadd.f32 0.0, %v3256
      %v3258 = vpop.f32.mrf.mxu0
      %3259 = vmatprep.mubr.f32.mxu0 %v3156
      %3260 = vmatmul.mubr.f32.gmra.mxu0 %v3075
      %v3261 = vpop.f32.mrf.mxu0
      %v3262 = vadd.f32 0.0, %v3261
      %v3263 = vpop.f32.mrf.mxu0
      %3264 = vmatprep.mubr.f32.mxu0 %v3159
      %3265 = vmatmul.mubr.f32.gmra.mxu0 %v3078
      %v3266 = vpop.f32.mrf.mxu0
      %v3267 = vadd.f32 0.0, %v3266
      %v3268 = vpop.f32.mrf.mxu0
      %3269 = vmatprep.mubr.f32.mxu0 %v3162
      %3270 = vmatmul.mubr.f32.gmra.mxu0 %v3081
      %v3271 = vpop.f32.mrf.mxu0
      %v3272 = vadd.f32 0.0, %v3271
      %v3273 = vpop.f32.mrf.mxu0
      %3274 = vmatprep.mubr.f32.mxu0 %v3165
      %3275 = vmatmul.mubr.f32.gmra.mxu0 %v3084
      %v3276 = vpop.f32.mrf.mxu0
      %v3277 = vadd.f32 0.0, %v3276
      %v3278 = vpop.f32.mrf.mxu0
      %3279 = vmatprep.mubr.f32.mxu0 %v3168
      %3280 = vmatmul.mubr.f32.gmra.mxu0 %v3087
      %v3281 = vpop.f32.mrf.mxu0
      %v3282 = vadd.f32 0.0, %v3281
      %v3283 = vpop.f32.mrf.mxu0
      %3284 = vdwg.mxu0
      %3295 = vrot.lane.b32.xlu0 %v1959, 8
      %v3296 = vpop.permute.xlu0 %3295
      %3297 = vrot.lane.b32.xlu0 %v1964, 8
      %v3298 = vpop.permute.xlu0 %3297
      %3299 = vrot.lane.b32.xlu0 %v1969, 8
      %v3300 = vpop.permute.xlu0 %3299
      %3301 = vrot.lane.b32.xlu0 %v1974, 8
      %v3302 = vpop.permute.xlu0 %3301
      %3303 = vrot.lane.b32.xlu0 %v1979, 8
      %v3304 = vpop.permute.xlu0 %3303
      %3305 = vrot.lane.b32.xlu0 %v1984, 8
      %v3306 = vpop.permute.xlu0 %3305
      %3307 = vrot.lane.b32.xlu0 %v1989, 8
      %v3308 = vpop.permute.xlu0 %3307
      %3309 = vrot.lane.b32.xlu0 %v1994, 8
      %v3310 = vpop.permute.xlu0 %3309
      %3311 = vrot.lane.b32.xlu0 %v1999, 8
      %v3312 = vpop.permute.xlu0 %3311
      %3313 = vrot.lane.b32.xlu0 %v2004, 8
      %v3314 = vpop.permute.xlu0 %3313
      %3335 = vrot.lane.b32.xlu0 %v2598, 16
      %v3336 = vpop.permute.xlu0 %3335
      %3337 = vrot.lane.b32.xlu0 %v2603, 16
      %v3338 = vpop.permute.xlu0 %3337
      %3339 = vrot.lane.b32.xlu0 %v2608, 16
      %v3340 = vpop.permute.xlu0 %3339
      %3341 = vrot.lane.b32.xlu0 %v2613, 16
      %v3342 = vpop.permute.xlu0 %3341
      %3343 = vrot.lane.b32.xlu0 %v2618, 16
      %v3344 = vpop.permute.xlu0 %3343
      %3345 = vrot.lane.b32.xlu0 %v2623, 16
      %v3346 = vpop.permute.xlu0 %3345
      %3347 = vrot.lane.b32.xlu0 %v2628, 16
      %v3348 = vpop.permute.xlu0 %3347
      %3349 = vrot.lane.b32.xlu0 %v2633, 16
      %v3350 = vpop.permute.xlu0 %3349
      %3351 = vrot.lane.b32.xlu0 %v2638, 16
      %v3352 = vpop.permute.xlu0 %3351
      %3353 = vrot.lane.b32.xlu0 %v2643, 16
      %v3354 = vpop.permute.xlu0 %3353
      %3375 = vrot.lane.b32.xlu0 %v3237, 24
      %v3376 = vpop.permute.xlu0 %3375
      %3377 = vrot.lane.b32.xlu0 %v3242, 24
      %v3378 = vpop.permute.xlu0 %3377
      %3379 = vrot.lane.b32.xlu0 %v3247, 24
      %v3380 = vpop.permute.xlu0 %3379
      %3381 = vrot.lane.b32.xlu0 %v3252, 24
      %v3382 = vpop.permute.xlu0 %3381
      %3383 = vrot.lane.b32.xlu0 %v3257, 24
      %v3384 = vpop.permute.xlu0 %3383
      %3385 = vrot.lane.b32.xlu0 %v3262, 24
      %v3386 = vpop.permute.xlu0 %3385
      %3387 = vrot.lane.b32.xlu0 %v3267, 24
      %v3388 = vpop.permute.xlu0 %3387
      %3389 = vrot.lane.b32.xlu0 %v3272, 24
      %v3390 = vpop.permute.xlu0 %3389
      %3391 = vrot.lane.b32.xlu0 %v3277, 24
      %v3392 = vpop.permute.xlu0 %3391
      %3393 = vrot.lane.b32.xlu0 %v3282, 24
      %v3394 = vpop.permute.xlu0 %3393
      %v3405 = vsel %vm744, %v1320, %v3296
      %v3406 = vsel %vm744, %v1325, %v3298
      %v3407 = vsel %vm744, %v1330, %v3300
      %v3408 = vsel %vm744, %v1335, %v3302
      %v3409 = vsel %vm744, %v1340, %v3304
      %v3410 = vsel %vm744, %v1345, %v3306
      %v3411 = vsel %vm744, %v1350, %v3308
      %v3412 = vsel %vm744, %v1355, %v3310
      %v3413 = vsel %vm744, %v1360, %v3312
      %v3414 = vsel %vm744, %v1365, %v3314
      %vm3415 = vcmask 130048
      %v3416 = vsel %vm3415, %v3405, %v3336
      %v3417 = vsel %vm3415, %v3406, %v3338
      %v3418 = vsel %vm3415, %v3407, %v3340
      %v3419 = vsel %vm3415, %v3408, %v3342
      %v3420 = vsel %vm3415, %v3409, %v3344
      %v3421 = vsel %vm3415, %v3410, %v3346
      %v3422 = vsel %vm3415, %v3411, %v3348
      %v3423 = vsel %vm3415, %v3412, %v3350
      %v3424 = vsel %vm3415, %v3413, %v3352
      %v3425 = vsel %vm3415, %v3414, %v3354
      %vm3426 = vcmask 195584
      %v3427 = vsel %vm3426, %v3416, %v3376
      %v3428 = vsel %vm3426, %v3417, %v3378
      %v3429 = vsel %vm3426, %v3418, %v3380
      %v3430 = vsel %vm3426, %v3419, %v3382
      %v3431 = vsel %vm3426, %v3420, %v3384
      %v3432 = vsel %vm3426, %v3421, %v3386
      %v3433 = vsel %vm3426, %v3422, %v3388
      %v3434 = vsel %vm3426, %v3423, %v3390
      %v3435 = vsel %vm3426, %v3424, %v3392
      %v3436 = vsel %vm3426, %v3425, %v3394
      %vm3437 = vcmask 654336
      %v3439 = vsel %vm3437, %v371, 0
      %v3442 = vsel %vm3437, %v372, 0
      %v3445 = vsel %vm3437, %v373, 0
      %3447 = vmatprep.subr.mxu0 0.0
      %3448 = vmatpush1.msra.mxu0 0.0
      %3449 = vmatprep.subr.mxu0 0.0
      %3450 = vmatpush1.msra.mxu0 0.0
      %3451 = vmatprep.subr.mxu0 0.0
      %3452 = vmatpush1.msra.mxu0 0.0
      %3453 = vmatprep.subr.mxu0 0.0
      %3454 = vmatpush1.msra.mxu0 0.0
      %3455 = vmatprep.subr.mxu0 0.0
      %3456 = vmatpush1.msra.mxu0 0.0
      %3457 = vmatprep.subr.mxu0 0.0
      %3458 = vmatpush1.msra.mxu0 0.0
      %3459 = vmatprep.subr.mxu0 0.0
      %3460 = vmatpush1.msra.mxu0 %v3436
      %3461 = vmatprep.subr.mxu0 0.0
      %3462 = vmatpush1.msra.mxu0 %v3435
      %3463 = vmatprep.subr.mxu0 0.0
      %3464 = vmatpush1.msra.mxu0 %v3434
      %3465 = vmatprep.subr.mxu0 0.0
      %3466 = vmatpush1.msra.mxu0 %v3433
      %3467 = vmatprep.subr.mxu0 0.0
      %3468 = vmatpush1.msra.mxu0 %v3432
      %3469 = vmatprep.subr.mxu0 0.0
      %3470 = vmatpush1.msra.mxu0 %v3431
      %3471 = vmatprep.subr.mxu0 0.0
      %3472 = vmatpush1.msra.mxu0 %v3430
      %3473 = vmatprep.subr.mxu0 0.0
      %3474 = vmatpush1.msra.mxu0 %v3429
      %3475 = vmatprep.subr.mxu0 0.0
      %3476 = vmatpush1.msra.mxu0 %v3428
      %3477 = vmatprep.subr.mxu0 0.0
      %3478 = vmatpush1.msra.mxu0 %v3427
      %3479 = vmatprep.subr.mxu0 0.0
      %3480 = vmatpush2.msra.mxu0 0.0
      %3481 = vmatprep.subr.mxu0 0.0
      %3482 = vmatpush2.msra.mxu0 0.0
      %3483 = vmatprep.subr.mxu0 0.0
      %3484 = vmatpush2.msra.mxu0 0.0
      %3485 = vmatprep.subr.mxu0 0.0
      %3486 = vmatpush2.msra.mxu0 0.0
      %3487 = vmatprep.subr.mxu0 0.0
      %3488 = vmatpush2.msra.mxu0 0.0
      %3489 = vmatprep.subr.mxu0 0.0
      %3490 = vmatpush2.msra.mxu0 0.0
      %3491 = vmatprep.subr.mxu0 0.0
      %3492 = vmatpush2.msra.mxu0 0.0
      %3493 = vmatprep.subr.mxu0 0.0
      %3494 = vmatpush2.msra.mxu0 0.0
      %3495 = vmatprep.subr.mxu0 0.0
      %3496 = vmatpush2.msra.mxu0 0.0
      %3497 = vmatprep.subr.mxu0 0.0
      %3498 = vmatpush2.msra.mxu0 0.0
      %3499 = vmatprep.subr.mxu0 0.0
      %3500 = vmatpush2.msra.mxu0 0.0
      %3501 = vmatprep.subr.mxu0 0.0
      %3502 = vmatpush2.msra.mxu0 0.0
      %3503 = vmatprep.subr.mxu0 0.0
      %3504 = vmatpush2.msra.mxu0 0.0
      %3505 = vmatprep.subr.mxu0 0.0
      %3506 = vmatpush2.msra.mxu0 0.0
      %3507 = vmatprep.subr.mxu0 0.0
      %3508 = vmatpush2.msra.mxu0 0.0
      %3509 = vmatprep.subr.mxu0 0.0
      %3510 = vmatpush2.msra.mxu0 0.0
      %3511 = vmatprep.mubr.f32.mxu0 0.0
      %3512 = vmatmul.mubr.f32.gmra.mxu0 %v3439
      %v3513 = vpop.f32.mrf.mxu0
      %v3514 = vadd.f32 0.0, %v3513
      %v3515 = vpop.f32.mrf.mxu0
      %3516 = vmatprep.mubr.f32.mxu0 0.0
      %3517 = vmatmul.mubr.f32.gmra.mxu0 %v3442
      %v3518 = vpop.f32.mrf.mxu0
      %v3519 = vadd.f32 0.0, %v3518
      %v3520 = vpop.f32.mrf.mxu0
      %3521 = vmatprep.mubr.f32.mxu0 0.0
      %3522 = vmatmul.mubr.f32.gmra.mxu0 %v3445
      %v3523 = vpop.f32.mrf.mxu0
      %v3524 = vadd.f32 0.0, %v3523
      %v3525 = vpop.f32.mrf.mxu0
      %3526 = vdwg.mxu0
      %3527 = vrot.lane.b32.xlu0 %v484, 96
      %v3528 = vpop.permute.xlu0 %3527
      %3529 = vrot.lane.b32.xlu0 %v489, 96
      %v3530 = vpop.permute.xlu0 %3529
      %3531 = vrot.lane.b32.xlu0 %v494, 96
      %v3532 = vpop.permute.xlu0 %3531
      %3533 = vrot.lane.b32.xlu0 %v499, 96
      %v3534 = vpop.permute.xlu0 %3533
      %3535 = vrot.lane.b32.xlu0 %v504, 96
      %v3536 = vpop.permute.xlu0 %3535
      %3537 = vrot.lane.b32.xlu0 %v509, 96
      %v3538 = vpop.permute.xlu0 %3537
      %3539 = vrot.lane.b32.xlu0 %v514, 96
      %v3540 = vpop.permute.xlu0 %3539
      %3541 = vrot.lane.b32.xlu0 %v519, 96
      %v3542 = vpop.permute.xlu0 %3541
      %3543 = vrot.lane.b32.xlu0 %v524, 96
      %v3544 = vpop.permute.xlu0 %3543
      %3545 = vrot.lane.b32.xlu0 %v529, 96
      %v3546 = vpop.permute.xlu0 %3545
      %3547 = vrot.lane.b32.xlu0 %v661, 64
      %v3548 = vpop.permute.xlu0 %3547
      %3549 = vrot.lane.b32.xlu0 %v666, 64
      %v3550 = vpop.permute.xlu0 %3549
      %3551 = vrot.lane.b32.xlu0 %v671, 64
      %v3552 = vpop.permute.xlu0 %3551
      %3553 = vrot.lane.b32.xlu0 %v676, 64
      %v3554 = vpop.permute.xlu0 %3553
      %3555 = vrot.lane.b32.xlu0 %v681, 64
      %v3556 = vpop.permute.xlu0 %3555
      %3557 = vrot.lane.b32.xlu0 %v686, 64
      %v3558 = vpop.permute.xlu0 %3557
      %3559 = vrot.lane.b32.xlu0 %v691, 64
      %v3560 = vpop.permute.xlu0 %3559
      %3561 = vrot.lane.b32.xlu0 %v696, 64
      %v3562 = vpop.permute.xlu0 %3561
      %3563 = vrot.lane.b32.xlu0 %v701, 64
      %v3564 = vpop.permute.xlu0 %3563
      %3565 = vrot.lane.b32.xlu0 %v706, 64
      %v3566 = vpop.permute.xlu0 %3565
      %3567 = vrot.lane.b32.xlu0 %v711, 64
      %v3568 = vpop.permute.xlu0 %3567
      %3569 = vrot.lane.b32.xlu0 %v716, 64
      %v3570 = vpop.permute.xlu0 %3569
      %3571 = vrot.lane.b32.xlu0 %v721, 64
      %v3572 = vpop.permute.xlu0 %3571
      %3573 = vrot.lane.b32.xlu0 %v726, 64
      %v3574 = vpop.permute.xlu0 %3573
      %3575 = vrot.lane.b32.xlu0 %v731, 64
      %v3576 = vpop.permute.xlu0 %3575
      %3577 = vrot.lane.b32.xlu0 %v736, 64
      %v3578 = vpop.permute.xlu0 %3577
      %3579 = vrot.lane.b32.xlu0 %v741, 64
      %v3580 = vpop.permute.xlu0 %3579
      %v3581 = vsel %vm744, %v3528, 0
      %v3583 = vsel %vm744, %v3530, 0
      %v3585 = vsel %vm744, %v3532, 0
      %v3587 = vsel %vm744, %v3534, 0
      %v3589 = vsel %vm744, %v3536, 0
      %v3591 = vsel %vm744, %v3538, 0
      %v3593 = vsel %vm744, %v3540, 0
      %v3595 = vsel %vm744, %v3542, 0
      %v3597 = vsel %vm744, %v3544, 0
      %v3599 = vsel %vm744, %v3546, 0
      %v3601 = vsel %vm744, %v3548, 0
      %v3603 = vsel %vm744, %v3550, 0
      %v3605 = vsel %vm744, %v3552, 0
      %v3607 = vsel %vm744, %v3554, 0
      %v3609 = vsel %vm744, %v3556, 0
      %v3611 = vsel %vm744, %v3558, 0
      %v3613 = vsel %vm744, %v3560, 0
      %v3615 = vsel %vm744, %v3562, 0
      %v3617 = vsel %vm744, %v3564, 0
      %v3619 = vsel %vm744, %v3566, 0
      %v3621 = vsel %vm744, %v3568, 0
      %v3623 = vsel %vm744, %v3570, 0
      %v3625 = vsel %vm744, %v3572, 0
      %v3627 = vsel %vm744, %v3574, 0
      %v3629 = vsel %vm744, %v3576, 0
      %v3631 = vsel %vm744, %v3578, 0
      %v3633 = vsel %vm744, %v3580, 0
      %3635 = vmatprep.subr.mxu0 0.0
      %3636 = vmatpush1.xpose.msra.mxu0 %v3631
      %3637 = vmatprep.subr.mxu0 0.0
      %3638 = vmatpush1.xpose.msra.mxu0 %v3629
      %3639 = vmatprep.subr.mxu0 0.0
      %3640 = vmatpush1.xpose.msra.mxu0 %v3627
      %3641 = vmatprep.subr.mxu0 0.0
      %3642 = vmatpush1.xpose.msra.mxu0 %v3625
      %3643 = vmatprep.subr.mxu0 0.0
      %3644 = vmatpush1.xpose.msra.mxu0 %v3623
      %3645 = vmatprep.subr.mxu0 0.0
      %3646 = vmatpush1.xpose.msra.mxu0 %v3621
      %3647 = vmatprep.subr.mxu0 0.0
      %3648 = vmatpush1.xpose.msra.mxu0 %v3619
      %3649 = vmatprep.subr.mxu0 0.0
      %3650 = vmatpush1.xpose.msra.mxu0 %v3617
      %3651 = vmatprep.subr.mxu0 0.0
      %3652 = vmatpush1.xpose.msra.mxu0 %v3615
      %3653 = vmatprep.subr.mxu0 0.0
      %3654 = vmatpush1.xpose.msra.mxu0 %v3613
      %3655 = vmatprep.subr.mxu0 0.0
      %3656 = vmatpush1.xpose.msra.mxu0 %v3611
      %3657 = vmatprep.subr.mxu0 0.0
      %3658 = vmatpush1.xpose.msra.mxu0 %v3609
      %3659 = vmatprep.subr.mxu0 0.0
      %3660 = vmatpush1.xpose.msra.mxu0 %v3607
      %3661 = vmatprep.subr.mxu0 0.0
      %3662 = vmatpush1.xpose.msra.mxu0 %v3605
      %3663 = vmatprep.subr.mxu0 0.0
      %3664 = vmatpush1.xpose.msra.mxu0 %v3603
      %3665 = vmatprep.subr.mxu0 0.0
      %3666 = vmatpush1.xpose.msra.mxu0 %v3601
      %3667 = vmatprep.subr.mxu0 0.0
      %3668 = vmatpush2.xpose.msra.mxu0 0.0
      %3669 = vmatprep.subr.mxu0 0.0
      %3670 = vmatpush2.xpose.msra.mxu0 0.0
      %3671 = vmatprep.subr.mxu0 0.0
      %3672 = vmatpush2.xpose.msra.mxu0 0.0
      %3673 = vmatprep.subr.mxu0 0.0
      %3674 = vmatpush2.xpose.msra.mxu0 0.0
      %3675 = vmatprep.subr.mxu0 0.0
      %3676 = vmatpush2.xpose.msra.mxu0 0.0
      %3677 = vmatprep.subr.mxu0 0.0
      %3678 = vmatpush2.xpose.msra.mxu0 0.0
      %3679 = vmatprep.subr.mxu0 0.0
      %3680 = vmatpush2.xpose.msra.mxu0 0.0
      %3681 = vmatprep.subr.mxu0 0.0
      %3682 = vmatpush2.xpose.msra.mxu0 0.0
      %3683 = vmatprep.subr.mxu0 0.0
      %3684 = vmatpush2.xpose.msra.mxu0 0.0
      %3685 = vmatprep.subr.mxu0 0.0
      %3686 = vmatpush2.xpose.msra.mxu0 0.0
      %3687 = vmatprep.subr.mxu0 0.0
      %3688 = vmatpush2.xpose.msra.mxu0 0.0
      %3689 = vmatprep.subr.mxu0 0.0
      %3690 = vmatpush2.xpose.msra.mxu0 0.0
      %3691 = vmatprep.subr.mxu0 0.0
      %3692 = vmatpush2.xpose.msra.mxu0 0.0
      %3693 = vmatprep.subr.mxu0 0.0
      %3694 = vmatpush2.xpose.msra.mxu0 0.0
      %3695 = vmatprep.subr.mxu0 0.0
      %3696 = vmatpush2.xpose.msra.mxu0 0.0
      %3697 = vmatprep.subr.mxu0 0.0
      %3698 = vmatpush2.xpose.msra.mxu0 %v3633
      %3699 = vmatprep.mubr.f32.mxu0 0.0
      %3700 = vmatmul.mubr.f32.gmra.mxu0 %v3581
      %v3701 = vpop.f32.mrf.mxu0
      %v3702 = vadd.f32 0.0, %v3701
      %v3703 = vpop.f32.mrf.mxu0
      %v3704 = vadd.f32 0.0, %v3703
      %3705 = vmatprep.mubr.f32.mxu0 0.0
      %3706 = vmatmul.mubr.f32.gmra.mxu0 %v3583
      %v3707 = vpop.f32.mrf.mxu0
      %v3708 = vadd.f32 0.0, %v3707
      %v3709 = vpop.f32.mrf.mxu0
      %v3710 = vadd.f32 0.0, %v3709
      %3711 = vmatprep.mubr.f32.mxu0 0.0
      %3712 = vmatmul.mubr.f32.gmra.mxu0 %v3585
      %v3713 = vpop.f32.mrf.mxu0
      %v3714 = vadd.f32 0.0, %v3713
      %v3715 = vpop.f32.mrf.mxu0
      %v3716 = vadd.f32 0.0, %v3715
      %3717 = vmatprep.mubr.f32.mxu0 0.0
      %3718 = vmatmul.mubr.f32.gmra.mxu0 %v3587
      %v3719 = vpop.f32.mrf.mxu0
      %v3720 = vadd.f32 0.0, %v3719
      %v3721 = vpop.f32.mrf.mxu0
      %v3722 = vadd.f32 0.0, %v3721
      %3723 = vmatprep.mubr.f32.mxu0 0.0
      %3724 = vmatmul.mubr.f32.gmra.mxu0 %v3589
      %v3725 = vpop.f32.mrf.mxu0
      %v3726 = vadd.f32 0.0, %v3725
      %v3727 = vpop.f32.mrf.mxu0
      %v3728 = vadd.f32 0.0, %v3727
      %3729 = vmatprep.mubr.f32.mxu0 0.0
      %3730 = vmatmul.mubr.f32.gmra.mxu0 %v3591
      %v3731 = vpop.f32.mrf.mxu0
      %v3732 = vadd.f32 0.0, %v3731
      %v3733 = vpop.f32.mrf.mxu0
      %v3734 = vadd.f32 0.0, %v3733
      %3735 = vmatprep.mubr.f32.mxu0 0.0
      %3736 = vmatmul.mubr.f32.gmra.mxu0 %v3593
      %v3737 = vpop.f32.mrf.mxu0
      %v3738 = vadd.f32 0.0, %v3737
      %v3739 = vpop.f32.mrf.mxu0
      %v3740 = vadd.f32 0.0, %v3739
      %3741 = vmatprep.mubr.f32.mxu0 0.0
      %3742 = vmatmul.mubr.f32.gmra.mxu0 %v3595
      %v3743 = vpop.f32.mrf.mxu0
      %v3744 = vadd.f32 0.0, %v3743
      %v3745 = vpop.f32.mrf.mxu0
      %v3746 = vadd.f32 0.0, %v3745
      %3747 = vmatprep.mubr.f32.mxu0 0.0
      %3748 = vmatmul.mubr.f32.gmra.mxu0 %v3597
      %v3749 = vpop.f32.mrf.mxu0
      %v3750 = vadd.f32 0.0, %v3749
      %v3751 = vpop.f32.mrf.mxu0
      %v3752 = vadd.f32 0.0, %v3751
      %3753 = vmatprep.mubr.f32.mxu0 0.0
      %3754 = vmatmul.mubr.f32.gmra.mxu0 %v3599
      %v3755 = vpop.f32.mrf.mxu0
      %v3756 = vadd.f32 0.0, %v3755
      %v3757 = vpop.f32.mrf.mxu0
      %v3758 = vadd.f32 0.0, %v3757
      %3759 = vdwg.mxu0
      %v3760 = vmul.f32 %v3702, 0.35355338
      %v3761 = vmul.f32 %v3704, 0.35355338
      %v3762 = vmul.f32 %v3708, 0.35355338
      %v3763 = vmul.f32 %v3710, 0.35355338
      %v3764 = vmul.f32 %v3714, 0.35355338
      %v3765 = vmul.f32 %v3716, 0.35355338
      %v3766 = vmul.f32 %v3720, 0.35355338
      %v3767 = vmul.f32 %v3722, 0.35355338
      %v3768 = vmul.f32 %v3726, 0.35355338
      %v3769 = vmul.f32 %v3728, 0.35355338
      %v3770 = vmul.f32 %v3732, 0.35355338
      %v3771 = vmul.f32 %v3734, 0.35355338
      %v3772 = vmul.f32 %v3738, 0.35355338
      %v3773 = vmul.f32 %v3740, 0.35355338
      %v3774 = vmul.f32 %v3744, 0.35355338
      %v3775 = vmul.f32 %v3746, 0.35355338
      %v3776 = vmul.f32 %v3750, 0.35355338
      %v3777 = vmul.f32 %v3752, 0.35355338
      %v3778 = vmul.f32 %v3756, 0.35355338
      %v3779 = vmul.f32 %v3758, 0.35355338
      %v3780 = vsel %vm980, -1e+09, %v3760
      %v3781 = vsel %vm981, -1e+09, %v3761
      %v3782 = vsel %vm980, -1e+09, %v3762
      %v3783 = vsel %vm981, -1e+09, %v3763
      %v3784 = vsel %vm980, -1e+09, %v3764
      %v3785 = vsel %vm981, -1e+09, %v3765
      %v3786 = vsel %vm980, -1e+09, %v3766
      %v3787 = vsel %vm981, -1e+09, %v3767
      %v3788 = vsel %vm980, -1e+09, %v3768
      %v3789 = vsel %vm981, -1e+09, %v3769
      %v3790 = vsel %vm980, -1e+09, %v3770
      %v3791 = vsel %vm981, -1e+09, %v3771
      %v3792 = vsel %vm980, -1e+09, %v3772
      %v3793 = vsel %vm981, -1e+09, %v3773
      %v3794 = vsel %vm980, -1e+09, %v3774
      %v3795 = vsel %vm981, -1e+09, %v3775
      %v3796 = vsel %vm980, -1e+09, %v3776
      %v3797 = vsel %vm981, -1e+09, %v3777
      %v3798 = vsel %vm980, -1e+09, %v3778
      %v3799 = vsel %vm981, -1e+09, %v3779
      %v3800 = vsel %vm744, %v3781, -inf
      %v3801 = vmax.f32 %v3780, %v3800
      %3802 = vmax.xlane.f32.xlu0 %v3801
      %v3803 = vpop.xlane.xlu0 %3802
      %v3804 = vsel %vm744, %v3783, -inf
      %v3805 = vmax.f32 %v3782, %v3804
      %3806 = vmax.xlane.f32.xlu0 %v3805
      %v3807 = vpop.xlane.xlu0 %3806
      %v3808 = vsel %vm744, %v3785, -inf
      %v3809 = vmax.f32 %v3784, %v3808
      %3810 = vmax.xlane.f32.xlu0 %v3809
      %v3811 = vpop.xlane.xlu0 %3810
      %v3812 = vsel %vm744, %v3787, -inf
      %v3813 = vmax.f32 %v3786, %v3812
      %3814 = vmax.xlane.f32.xlu0 %v3813
      %v3815 = vpop.xlane.xlu0 %3814
      %v3816 = vsel %vm744, %v3789, -inf
      %v3817 = vmax.f32 %v3788, %v3816
      %3818 = vmax.xlane.f32.xlu0 %v3817
      %v3819 = vpop.xlane.xlu0 %3818
      %v3820 = vsel %vm744, %v3791, -inf
      %v3821 = vmax.f32 %v3790, %v3820
      %3822 = vmax.xlane.f32.xlu0 %v3821
      %v3823 = vpop.xlane.xlu0 %3822
      %v3824 = vsel %vm744, %v3793, -inf
      %v3825 = vmax.f32 %v3792, %v3824
      %3826 = vmax.xlane.f32.xlu0 %v3825
      %v3827 = vpop.xlane.xlu0 %3826
      %v3828 = vsel %vm744, %v3795, -inf
      %v3829 = vmax.f32 %v3794, %v3828
      %3830 = vmax.xlane.f32.xlu0 %v3829
      %v3831 = vpop.xlane.xlu0 %3830
      %v3832 = vsel %vm744, %v3797, -inf
      %v3833 = vmax.f32 %v3796, %v3832
      %3834 = vmax.xlane.f32.xlu0 %v3833
      %v3835 = vpop.xlane.xlu0 %3834
      %v3836 = vsel %vm744, %v3799, -inf
      %v3837 = vmax.f32 %v3798, %v3836
      %3838 = vmax.xlane.f32.xlu0 %v3837
      %v3839 = vpop.xlane.xlu0 %3838
      %v3840 = vsub.f32 %v3780, %v3803
      %v3841 = vsub.f32 %v3781, %v3803
      %v3842 = vsub.f32 %v3782, %v3807
      %v3843 = vsub.f32 %v3783, %v3807
      %v3844 = vsub.f32 %v3784, %v3811
      %v3845 = vsub.f32 %v3785, %v3811
      %v3846 = vsub.f32 %v3786, %v3815
      %v3847 = vsub.f32 %v3787, %v3815
      %v3848 = vsub.f32 %v3788, %v3819
      %v3849 = vsub.f32 %v3789, %v3819
      %v3850 = vsub.f32 %v3790, %v3823
      %v3851 = vsub.f32 %v3791, %v3823
      %v3852 = vsub.f32 %v3792, %v3827
      %v3853 = vsub.f32 %v3793, %v3827
      %v3854 = vsub.f32 %v3794, %v3831
      %v3855 = vsub.f32 %v3795, %v3831
      %v3856 = vsub.f32 %v3796, %v3835
      %v3857 = vsub.f32 %v3797, %v3835
      %v3858 = vsub.f32 %v3798, %v3839
      %v3859 = vsub.f32 %v3799, %v3839
      %v3860 = vmul.f32 %v3840, 1.442695
      %v3861 = vpow.pop %v3860
      %v3862 = vmul.f32 %v3841, 1.442695
      %v3863 = vpow.pop %v3862
      %v3864 = vmul.f32 %v3842, 1.442695
      %v3865 = vpow.pop %v3864
      %v3866 = vmul.f32 %v3843, 1.442695
      %v3867 = vpow.pop %v3866
      %v3868 = vmul.f32 %v3844, 1.442695
      %v3869 = vpow.pop %v3868
      %v3870 = vmul.f32 %v3845, 1.442695
      %v3871 = vpow.pop %v3870
      %v3872 = vmul.f32 %v3846, 1.442695
      %v3873 = vpow.pop %v3872
      %v3874 = vmul.f32 %v3847, 1.442695
      %v3875 = vpow.pop %v3874
      %v3876 = vmul.f32 %v3848, 1.442695
      %v3877 = vpow.pop %v3876
      %v3878 = vmul.f32 %v3849, 1.442695
      %v3879 = vpow.pop %v3878
      %v3880 = vmul.f32 %v3850, 1.442695
      %v3881 = vpow.pop %v3880
      %v3882 = vmul.f32 %v3851, 1.442695
      %v3883 = vpow.pop %v3882
      %v3884 = vmul.f32 %v3852, 1.442695
      %v3885 = vpow.pop %v3884
      %v3886 = vmul.f32 %v3853, 1.442695
      %v3887 = vpow.pop %v3886
      %v3888 = vmul.f32 %v3854, 1.442695
      %v3889 = vpow.pop %v3888
      %v3890 = vmul.f32 %v3855, 1.442695
      %v3891 = vpow.pop %v3890
      %v3892 = vmul.f32 %v3856, 1.442695
      %v3893 = vpow.pop %v3892
      %v3894 = vmul.f32 %v3857, 1.442695
      %v3895 = vpow.pop %v3894
      %v3896 = vmul.f32 %v3858, 1.442695
      %v3897 = vpow.pop %v3896
      %v3898 = vmul.f32 %v3859, 1.442695
      %v3899 = vpow.pop %v3898
      %v3900 = vsel %vm744, %v3863, 0.0
      %v3901 = vadd.f32 %v3861, %v3900
      %3902 = vadd.xlane.f32.xlu0 %v3901
      %v3903 = vpop.xlane.xlu0 %3902
      %v3904 = vsel %vm744, %v3867, 0.0
      %v3905 = vadd.f32 %v3865, %v3904
      %3906 = vadd.xlane.f32.xlu0 %v3905
      %v3907 = vpop.xlane.xlu0 %3906
      %v3908 = vsel %vm744, %v3871, 0.0
      %v3909 = vadd.f32 %v3869, %v3908
      %3910 = vadd.xlane.f32.xlu0 %v3909
      %v3911 = vpop.xlane.xlu0 %3910
      %v3912 = vsel %vm744, %v3875, 0.0
      %v3913 = vadd.f32 %v3873, %v3912
      %3914 = vadd.xlane.f32.xlu0 %v3913
      %v3915 = vpop.xlane.xlu0 %3914
      %v3916 = vsel %vm744, %v3879, 0.0
      %v3917 = vadd.f32 %v3877, %v3916
      %3918 = vadd.xlane.f32.xlu0 %v3917
      %v3919 = vpop.xlane.xlu0 %3918
      %v3920 = vsel %vm744, %v3883, 0.0
      %v3921 = vadd.f32 %v3881, %v3920
      %3922 = vadd.xlane.f32.xlu0 %v3921
      %v3923 = vpop.xlane.xlu0 %3922
      %v3924 = vsel %vm744, %v3887, 0.0
      %v3925 = vadd.f32 %v3885, %v3924
      %3926 = vadd.xlane.f32.xlu0 %v3925
      %v3927 = vpop.xlane.xlu0 %3926
      %v3928 = vsel %vm744, %v3891, 0.0
      %v3929 = vadd.f32 %v3889, %v3928
      %3930 = vadd.xlane.f32.xlu0 %v3929
      %v3931 = vpop.xlane.xlu0 %3930
      %v3932 = vsel %vm744, %v3895, 0.0
      %v3933 = vadd.f32 %v3893, %v3932
      %3934 = vadd.xlane.f32.xlu0 %v3933
      %v3935 = vpop.xlane.xlu0 %3934
      %v3936 = vsel %vm744, %v3899, 0.0
      %v3937 = vadd.f32 %v3897, %v3936
      %3938 = vadd.xlane.f32.xlu0 %v3937
      %v3939 = vpop.xlane.xlu0 %3938
      %v3940 = vrcp.pop %v3903
      %v3941 = vmul.f32 %v3861, %v3940
      %v3942 = vmul.f32 %v3863, %v3940
      %v3943 = vrcp.pop %v3907
      %v3944 = vmul.f32 %v3865, %v3943
      %v3945 = vmul.f32 %v3867, %v3943
      %v3946 = vrcp.pop %v3911
      %v3947 = vmul.f32 %v3869, %v3946
      %v3948 = vmul.f32 %v3871, %v3946
      %v3949 = vrcp.pop %v3915
      %v3950 = vmul.f32 %v3873, %v3949
      %v3951 = vmul.f32 %v3875, %v3949
      %v3952 = vrcp.pop %v3919
      %v3953 = vmul.f32 %v3877, %v3952
      %v3954 = vmul.f32 %v3879, %v3952
      %v3955 = vrcp.pop %v3923
      %v3956 = vmul.f32 %v3881, %v3955
      %v3957 = vmul.f32 %v3883, %v3955
      %v3958 = vrcp.pop %v3927
      %v3959 = vmul.f32 %v3885, %v3958
      %v3960 = vmul.f32 %v3887, %v3958
      %v3961 = vrcp.pop %v3931
      %v3962 = vmul.f32 %v3889, %v3961
      %v3963 = vmul.f32 %v3891, %v3961
      %v3964 = vrcp.pop %v3935
      %v3965 = vmul.f32 %v3893, %v3964
      %v3966 = vmul.f32 %v3895, %v3964
      %v3967 = vrcp.pop %v3939
      %v3968 = vmul.f32 %v3897, %v3967
      %v3969 = vmul.f32 %v3899, %v3967
      %3970 = vrot.lane.b32.xlu0 %v661, 32
      %v3971 = vpop.permute.xlu0 %3970
      %3972 = vrot.lane.b32.xlu0 %v666, 32
      %v3973 = vpop.permute.xlu0 %3972
      %3974 = vrot.lane.b32.xlu0 %v671, 32
      %v3975 = vpop.permute.xlu0 %3974
      %3976 = vrot.lane.b32.xlu0 %v676, 32
      %v3977 = vpop.permute.xlu0 %3976
      %3978 = vrot.lane.b32.xlu0 %v681, 32
      %v3979 = vpop.permute.xlu0 %3978
      %3980 = vrot.lane.b32.xlu0 %v686, 32
      %v3981 = vpop.permute.xlu0 %3980
      %3982 = vrot.lane.b32.xlu0 %v691, 32
      %v3983 = vpop.permute.xlu0 %3982
      %3984 = vrot.lane.b32.xlu0 %v696, 32
      %v3985 = vpop.permute.xlu0 %3984
      %3986 = vrot.lane.b32.xlu0 %v701, 32
      %v3987 = vpop.permute.xlu0 %3986
      %3988 = vrot.lane.b32.xlu0 %v706, 32
      %v3989 = vpop.permute.xlu0 %3988
      %3990 = vrot.lane.b32.xlu0 %v711, 32
      %v3991 = vpop.permute.xlu0 %3990
      %3992 = vrot.lane.b32.xlu0 %v716, 32
      %v3993 = vpop.permute.xlu0 %3992
      %3994 = vrot.lane.b32.xlu0 %v721, 32
      %v3995 = vpop.permute.xlu0 %3994
      %3996 = vrot.lane.b32.xlu0 %v726, 32
      %v3997 = vpop.permute.xlu0 %3996
      %3998 = vrot.lane.b32.xlu0 %v731, 32
      %v3999 = vpop.permute.xlu0 %3998
      %4000 = vrot.lane.b32.xlu0 %v736, 32
      %v4001 = vpop.permute.xlu0 %4000
      %4002 = vrot.lane.b32.xlu0 %v741, 32
      %v4003 = vpop.permute.xlu0 %4002
      %v4022 = vsel %vm744, %v3942, 0
      %v4025 = vsel %vm744, %v3945, 0
      %v4028 = vsel %vm744, %v3948, 0
      %v4031 = vsel %vm744, %v3951, 0
      %v4034 = vsel %vm744, %v3954, 0
      %v4037 = vsel %vm744, %v3957, 0
      %v4040 = vsel %vm744, %v3960, 0
      %v4043 = vsel %vm744, %v3963, 0
      %v4046 = vsel %vm744, %v3966, 0
      %v4049 = vsel %vm744, %v3969, 0
      %4051 = vmatprep.subr.mxu0 0.0
      %4052 = vmatpush1.msra.mxu0 %v4001
      %4053 = vmatprep.subr.mxu0 0.0
      %4054 = vmatpush1.msra.mxu0 %v3999
      %4055 = vmatprep.subr.mxu0 0.0
      %4056 = vmatpush1.msra.mxu0 %v3997
      %4057 = vmatprep.subr.mxu0 0.0
      %4058 = vmatpush1.msra.mxu0 %v3995
      %4059 = vmatprep.subr.mxu0 0.0
      %4060 = vmatpush1.msra.mxu0 %v3993
      %4061 = vmatprep.subr.mxu0 0.0
      %4062 = vmatpush1.msra.mxu0 %v3991
      %4063 = vmatprep.subr.mxu0 0.0
      %4064 = vmatpush1.msra.mxu0 %v3989
      %4065 = vmatprep.subr.mxu0 0.0
      %4066 = vmatpush1.msra.mxu0 %v3987
      %4067 = vmatprep.subr.mxu0 0.0
      %4068 = vmatpush1.msra.mxu0 %v3985
      %4069 = vmatprep.subr.mxu0 0.0
      %4070 = vmatpush1.msra.mxu0 %v3983
      %4071 = vmatprep.subr.mxu0 0.0
      %4072 = vmatpush1.msra.mxu0 %v3981
      %4073 = vmatprep.subr.mxu0 0.0
      %4074 = vmatpush1.msra.mxu0 %v3979
      %4075 = vmatprep.subr.mxu0 0.0
      %4076 = vmatpush1.msra.mxu0 %v3977
      %4077 = vmatprep.subr.mxu0 0.0
      %4078 = vmatpush1.msra.mxu0 %v3975
      %4079 = vmatprep.subr.mxu0 0.0
      %4080 = vmatpush1.msra.mxu0 %v3973
      %4081 = vmatprep.subr.mxu0 0.0
      %4082 = vmatpush1.msra.mxu0 %v3971
      %4083 = vmatprep.subr.mxu0 0.0
      %4084 = vmatpush2.msra.mxu0 0.0
      %4085 = vmatprep.subr.mxu0 0.0
      %4086 = vmatpush2.msra.mxu0 0.0
      %4087 = vmatprep.subr.mxu0 0.0
      %4088 = vmatpush2.msra.mxu0 0.0
      %4089 = vmatprep.subr.mxu0 0.0
      %4090 = vmatpush2.msra.mxu0 0.0
      %4091 = vmatprep.subr.mxu0 0.0
      %4092 = vmatpush2.msra.mxu0 0.0
      %4093 = vmatprep.subr.mxu0 0.0
      %4094 = vmatpush2.msra.mxu0 0.0
      %4095 = vmatprep.subr.mxu0 0.0
      %4096 = vmatpush2.msra.mxu0 0.0
      %4097 = vmatprep.subr.mxu0 0.0
      %4098 = vmatpush2.msra.mxu0 0.0
      %4099 = vmatprep.subr.mxu0 0.0
      %4100 = vmatpush2.msra.mxu0 0.0
      %4101 = vmatprep.subr.mxu0 0.0
      %4102 = vmatpush2.msra.mxu0 0.0
      %4103 = vmatprep.subr.mxu0 0.0
      %4104 = vmatpush2.msra.mxu0 0.0
      %4105 = vmatprep.subr.mxu0 0.0
      %4106 = vmatpush2.msra.mxu0 0.0
      %4107 = vmatprep.subr.mxu0 0.0
      %4108 = vmatpush2.msra.mxu0 0.0
      %4109 = vmatprep.subr.mxu0 0.0
      %4110 = vmatpush2.msra.mxu0 0.0
      %4111 = vmatprep.subr.mxu0 0.0
      %4112 = vmatpush2.msra.mxu0 0.0
      %4113 = vmatprep.subr.mxu0 0.0
      %4114 = vmatpush2.msra.mxu0 %v4003
      %4115 = vmatprep.mubr.f32.mxu0 %v4022
      %4116 = vmatmul.mubr.f32.gmra.mxu0 %v3941
      %v4117 = vpop.f32.mrf.mxu0
      %v4118 = vadd.f32 0.0, %v4117
      %v4119 = vpop.f32.mrf.mxu0
      %4120 = vmatprep.mubr.f32.mxu0 %v4025
      %4121 = vmatmul.mubr.f32.gmra.mxu0 %v3944
      %v4122 = vpop.f32.mrf.mxu0
      %v4123 = vadd.f32 0.0, %v4122
      %v4124 = vpop.f32.mrf.mxu0
      %4125 = vmatprep.mubr.f32.mxu0 %v4028
      %4126 = vmatmul.mubr.f32.gmra.mxu0 %v3947
      %v4127 = vpop.f32.mrf.mxu0
      %v4128 = vadd.f32 0.0, %v4127
      %v4129 = vpop.f32.mrf.mxu0
      %4130 = vmatprep.mubr.f32.mxu0 %v4031
      %4131 = vmatmul.mubr.f32.gmra.mxu0 %v3950
      %v4132 = vpop.f32.mrf.mxu0
      %v4133 = vadd.f32 0.0, %v4132
      %v4134 = vpop.f32.mrf.mxu0
      %4135 = vmatprep.mubr.f32.mxu0 %v4034
      %4136 = vmatmul.mubr.f32.gmra.mxu0 %v3953
      %v4137 = vpop.f32.mrf.mxu0
      %v4138 = vadd.f32 0.0, %v4137
      %v4139 = vpop.f32.mrf.mxu0
      %4140 = vmatprep.mubr.f32.mxu0 %v4037
      %4141 = vmatmul.mubr.f32.gmra.mxu0 %v3956
      %v4142 = vpop.f32.mrf.mxu0
      %v4143 = vadd.f32 0.0, %v4142
      %v4144 = vpop.f32.mrf.mxu0
      %4145 = vmatprep.mubr.f32.mxu0 %v4040
      %4146 = vmatmul.mubr.f32.gmra.mxu0 %v3959
      %v4147 = vpop.f32.mrf.mxu0
      %v4148 = vadd.f32 0.0, %v4147
      %v4149 = vpop.f32.mrf.mxu0
      %4150 = vmatprep.mubr.f32.mxu0 %v4043
      %4151 = vmatmul.mubr.f32.gmra.mxu0 %v3962
      %v4152 = vpop.f32.mrf.mxu0
      %v4153 = vadd.f32 0.0, %v4152
      %v4154 = vpop.f32.mrf.mxu0
      %4155 = vmatprep.mubr.f32.mxu0 %v4046
      %4156 = vmatmul.mubr.f32.gmra.mxu0 %v3965
      %v4157 = vpop.f32.mrf.mxu0
      %v4158 = vadd.f32 0.0, %v4157
      %v4159 = vpop.f32.mrf.mxu0
      %4160 = vmatprep.mubr.f32.mxu0 %v4049
      %4161 = vmatmul.mubr.f32.gmra.mxu0 %v3968
      %v4162 = vpop.f32.mrf.mxu0
      %v4163 = vadd.f32 0.0, %v4162
      %v4164 = vpop.f32.mrf.mxu0
      %4165 = vdwg.mxu0
      %4166 = vrot.lane.b32.xlu0 %v484, 88
      %v4167 = vpop.permute.xlu0 %4166
      %4168 = vrot.lane.b32.xlu0 %v489, 88
      %v4169 = vpop.permute.xlu0 %4168
      %4170 = vrot.lane.b32.xlu0 %v494, 88
      %v4171 = vpop.permute.xlu0 %4170
      %4172 = vrot.lane.b32.xlu0 %v499, 88
      %v4173 = vpop.permute.xlu0 %4172
      %4174 = vrot.lane.b32.xlu0 %v504, 88
      %v4175 = vpop.permute.xlu0 %4174
      %4176 = vrot.lane.b32.xlu0 %v509, 88
      %v4177 = vpop.permute.xlu0 %4176
      %4178 = vrot.lane.b32.xlu0 %v514, 88
      %v4179 = vpop.permute.xlu0 %4178
      %4180 = vrot.lane.b32.xlu0 %v519, 88
      %v4181 = vpop.permute.xlu0 %4180
      %4182 = vrot.lane.b32.xlu0 %v524, 88
      %v4183 = vpop.permute.xlu0 %4182
      %4184 = vrot.lane.b32.xlu0 %v529, 88
      %v4185 = vpop.permute.xlu0 %4184
      %4186 = vrot.lane.b32.xlu0 %v661, 56
      %v4187 = vpop.permute.xlu0 %4186
      %4188 = vrot.lane.b32.xlu0 %v666, 56
      %v4189 = vpop.permute.xlu0 %4188
      %4190 = vrot.lane.b32.xlu0 %v671, 56
      %v4191 = vpop.permute.xlu0 %4190
      %4192 = vrot.lane.b32.xlu0 %v676, 56
      %v4193 = vpop.permute.xlu0 %4192
      %4194 = vrot.lane.b32.xlu0 %v681, 56
      %v4195 = vpop.permute.xlu0 %4194
      %4196 = vrot.lane.b32.xlu0 %v686, 56
      %v4197 = vpop.permute.xlu0 %4196
      %4198 = vrot.lane.b32.xlu0 %v691, 56
      %v4199 = vpop.permute.xlu0 %4198
      %4200 = vrot.lane.b32.xlu0 %v696, 56
      %v4201 = vpop.permute.xlu0 %4200
      %4202 = vrot.lane.b32.xlu0 %v701, 56
      %v4203 = vpop.permute.xlu0 %4202
      %4204 = vrot.lane.b32.xlu0 %v706, 56
      %v4205 = vpop.permute.xlu0 %4204
      %4206 = vrot.lane.b32.xlu0 %v711, 56
      %v4207 = vpop.permute.xlu0 %4206
      %4208 = vrot.lane.b32.xlu0 %v716, 56
      %v4209 = vpop.permute.xlu0 %4208
      %4210 = vrot.lane.b32.xlu0 %v721, 56
      %v4211 = vpop.permute.xlu0 %4210
      %4212 = vrot.lane.b32.xlu0 %v726, 56
      %v4213 = vpop.permute.xlu0 %4212
      %4214 = vrot.lane.b32.xlu0 %v731, 56
      %v4215 = vpop.permute.xlu0 %4214
      %4216 = vrot.lane.b32.xlu0 %v736, 56
      %v4217 = vpop.permute.xlu0 %4216
      %4218 = vrot.lane.b32.xlu0 %v741, 56
      %v4219 = vpop.permute.xlu0 %4218
      %v4220 = vsel %vm744, %v4167, 0
      %v4222 = vsel %vm744, %v4169, 0
      %v4224 = vsel %vm744, %v4171, 0
      %v4226 = vsel %vm744, %v4173, 0
      %v4228 = vsel %vm744, %v4175, 0
      %v4230 = vsel %vm744, %v4177, 0
      %v4232 = vsel %vm744, %v4179, 0
      %v4234 = vsel %vm744, %v4181, 0
      %v4236 = vsel %vm744, %v4183, 0
      %v4238 = vsel %vm744, %v4185, 0
      %v4240 = vsel %vm744, %v4187, 0
      %v4242 = vsel %vm744, %v4189, 0
      %v4244 = vsel %vm744, %v4191, 0
      %v4246 = vsel %vm744, %v4193, 0
      %v4248 = vsel %vm744, %v4195, 0
      %v4250 = vsel %vm744, %v4197, 0
      %v4252 = vsel %vm744, %v4199, 0
      %v4254 = vsel %vm744, %v4201, 0
      %v4256 = vsel %vm744, %v4203, 0
      %v4258 = vsel %vm744, %v4205, 0
      %v4260 = vsel %vm744, %v4207, 0
      %v4262 = vsel %vm744, %v4209, 0
      %v4264 = vsel %vm744, %v4211, 0
      %v4266 = vsel %vm744, %v4213, 0
      %v4268 = vsel %vm744, %v4215, 0
      %v4270 = vsel %vm744, %v4217, 0
      %v4272 = vsel %vm744, %v4219, 0
      %4274 = vmatprep.subr.mxu0 0.0
      %4275 = vmatpush1.xpose.msra.mxu0 %v4270
      %4276 = vmatprep.subr.mxu0 0.0
      %4277 = vmatpush1.xpose.msra.mxu0 %v4268
      %4278 = vmatprep.subr.mxu0 0.0
      %4279 = vmatpush1.xpose.msra.mxu0 %v4266
      %4280 = vmatprep.subr.mxu0 0.0
      %4281 = vmatpush1.xpose.msra.mxu0 %v4264
      %4282 = vmatprep.subr.mxu0 0.0
      %4283 = vmatpush1.xpose.msra.mxu0 %v4262
      %4284 = vmatprep.subr.mxu0 0.0
      %4285 = vmatpush1.xpose.msra.mxu0 %v4260
      %4286 = vmatprep.subr.mxu0 0.0
      %4287 = vmatpush1.xpose.msra.mxu0 %v4258
      %4288 = vmatprep.subr.mxu0 0.0
      %4289 = vmatpush1.xpose.msra.mxu0 %v4256
      %4290 = vmatprep.subr.mxu0 0.0
      %4291 = vmatpush1.xpose.msra.mxu0 %v4254
      %4292 = vmatprep.subr.mxu0 0.0
      %4293 = vmatpush1.xpose.msra.mxu0 %v4252
      %4294 = vmatprep.subr.mxu0 0.0
      %4295 = vmatpush1.xpose.msra.mxu0 %v4250
      %4296 = vmatprep.subr.mxu0 0.0
      %4297 = vmatpush1.xpose.msra.mxu0 %v4248
      %4298 = vmatprep.subr.mxu0 0.0
      %4299 = vmatpush1.xpose.msra.mxu0 %v4246
      %4300 = vmatprep.subr.mxu0 0.0
      %4301 = vmatpush1.xpose.msra.mxu0 %v4244
      %4302 = vmatprep.subr.mxu0 0.0
      %4303 = vmatpush1.xpose.msra.mxu0 %v4242
      %4304 = vmatprep.subr.mxu0 0.0
      %4305 = vmatpush1.xpose.msra.mxu0 %v4240
      %4306 = vmatprep.subr.mxu0 0.0
      %4307 = vmatpush2.xpose.msra.mxu0 0.0
      %4308 = vmatprep.subr.mxu0 0.0
      %4309 = vmatpush2.xpose.msra.mxu0 0.0
      %4310 = vmatprep.subr.mxu0 0.0
      %4311 = vmatpush2.xpose.msra.mxu0 0.0
      %4312 = vmatprep.subr.mxu0 0.0
      %4313 = vmatpush2.xpose.msra.mxu0 0.0
      %4314 = vmatprep.subr.mxu0 0.0
      %4315 = vmatpush2.xpose.msra.mxu0 0.0
      %4316 = vmatprep.subr.mxu0 0.0
      %4317 = vmatpush2.xpose.msra.mxu0 0.0
      %4318 = vmatprep.subr.mxu0 0.0
      %4319 = vmatpush2.xpose.msra.mxu0 0.0
      %4320 = vmatprep.subr.mxu0 0.0
      %4321 = vmatpush2.xpose.msra.mxu0 0.0
      %4322 = vmatprep.subr.mxu0 0.0
      %4323 = vmatpush2.xpose.msra.mxu0 0.0
      %4324 = vmatprep.subr.mxu0 0.0
      %4325 = vmatpush2.xpose.msra.mxu0 0.0
      %4326 = vmatprep.subr.mxu0 0.0
      %4327 = vmatpush2.xpose.msra.mxu0 0.0
      %4328 = vmatprep.subr.mxu0 0.0
      %4329 = vmatpush2.xpose.msra.mxu0 0.0
      %4330 = vmatprep.subr.mxu0 0.0
      %4331 = vmatpush2.xpose.msra.mxu0 0.0
      %4332 = vmatprep.subr.mxu0 0.0
      %4333 = vmatpush2.xpose.msra.mxu0 0.0
      %4334 = vmatprep.subr.mxu0 0.0
      %4335 = vmatpush2.xpose.msra.mxu0 0.0
      %4336 = vmatprep.subr.mxu0 0.0
      %4337 = vmatpush2.xpose.msra.mxu0 %v4272
      %4338 = vmatprep.mubr.f32.mxu0 0.0
      %4339 = vmatmul.mubr.f32.gmra.mxu0 %v4220
      %v4340 = vpop.f32.mrf.mxu0
      %v4341 = vadd.f32 0.0, %v4340
      %v4342 = vpop.f32.mrf.mxu0
      %v4343 = vadd.f32 0.0, %v4342
      %4344 = vmatprep.mubr.f32.mxu0 0.0
      %4345 = vmatmul.mubr.f32.gmra.mxu0 %v4222
      %v4346 = vpop.f32.mrf.mxu0
      %v4347 = vadd.f32 0.0, %v4346
      %v4348 = vpop.f32.mrf.mxu0
      %v4349 = vadd.f32 0.0, %v4348
      %4350 = vmatprep.mubr.f32.mxu0 0.0
      %4351 = vmatmul.mubr.f32.gmra.mxu0 %v4224
      %v4352 = vpop.f32.mrf.mxu0
      %v4353 = vadd.f32 0.0, %v4352
      %v4354 = vpop.f32.mrf.mxu0
      %v4355 = vadd.f32 0.0, %v4354
      %4356 = vmatprep.mubr.f32.mxu0 0.0
      %4357 = vmatmul.mubr.f32.gmra.mxu0 %v4226
      %v4358 = vpop.f32.mrf.mxu0
      %v4359 = vadd.f32 0.0, %v4358
      %v4360 = vpop.f32.mrf.mxu0
      %v4361 = vadd.f32 0.0, %v4360
      %4362 = vmatprep.mubr.f32.mxu0 0.0
      %4363 = vmatmul.mubr.f32.gmra.mxu0 %v4228
      %v4364 = vpop.f32.mrf.mxu0
      %v4365 = vadd.f32 0.0, %v4364
      %v4366 = vpop.f32.mrf.mxu0
      %v4367 = vadd.f32 0.0, %v4366
      %4368 = vmatprep.mubr.f32.mxu0 0.0
      %4369 = vmatmul.mubr.f32.gmra.mxu0 %v4230
      %v4370 = vpop.f32.mrf.mxu0
      %v4371 = vadd.f32 0.0, %v4370
      %v4372 = vpop.f32.mrf.mxu0
      %v4373 = vadd.f32 0.0, %v4372
      %4374 = vmatprep.mubr.f32.mxu0 0.0
      %4375 = vmatmul.mubr.f32.gmra.mxu0 %v4232
      %v4376 = vpop.f32.mrf.mxu0
      %v4377 = vadd.f32 0.0, %v4376
      %v4378 = vpop.f32.mrf.mxu0
      %v4379 = vadd.f32 0.0, %v4378
      %4380 = vmatprep.mubr.f32.mxu0 0.0
      %4381 = vmatmul.mubr.f32.gmra.mxu0 %v4234
      %v4382 = vpop.f32.mrf.mxu0
      %v4383 = vadd.f32 0.0, %v4382
      %v4384 = vpop.f32.mrf.mxu0
      %v4385 = vadd.f32 0.0, %v4384
      %4386 = vmatprep.mubr.f32.mxu0 0.0
      %4387 = vmatmul.mubr.f32.gmra.mxu0 %v4236
      %v4388 = vpop.f32.mrf.mxu0
      %v4389 = vadd.f32 0.0, %v4388
      %v4390 = vpop.f32.mrf.mxu0
      %v4391 = vadd.f32 0.0, %v4390
      %4392 = vmatprep.mubr.f32.mxu0 0.0
      %4393 = vmatmul.mubr.f32.gmra.mxu0 %v4238
      %v4394 = vpop.f32.mrf.mxu0
      %v4395 = vadd.f32 0.0, %v4394
      %v4396 = vpop.f32.mrf.mxu0
      %v4397 = vadd.f32 0.0, %v4396
      %4398 = vdwg.mxu0
      %v4399 = vmul.f32 %v4341, 0.35355338
      %v4400 = vmul.f32 %v4343, 0.35355338
      %v4401 = vmul.f32 %v4347, 0.35355338
      %v4402 = vmul.f32 %v4349, 0.35355338
      %v4403 = vmul.f32 %v4353, 0.35355338
      %v4404 = vmul.f32 %v4355, 0.35355338
      %v4405 = vmul.f32 %v4359, 0.35355338
      %v4406 = vmul.f32 %v4361, 0.35355338
      %v4407 = vmul.f32 %v4365, 0.35355338
      %v4408 = vmul.f32 %v4367, 0.35355338
      %v4409 = vmul.f32 %v4371, 0.35355338
      %v4410 = vmul.f32 %v4373, 0.35355338
      %v4411 = vmul.f32 %v4377, 0.35355338
      %v4412 = vmul.f32 %v4379, 0.35355338
      %v4413 = vmul.f32 %v4383, 0.35355338
      %v4414 = vmul.f32 %v4385, 0.35355338
      %v4415 = vmul.f32 %v4389, 0.35355338
      %v4416 = vmul.f32 %v4391, 0.35355338
      %v4417 = vmul.f32 %v4395, 0.35355338
      %v4418 = vmul.f32 %v4397, 0.35355338
      %v4419 = vsel %vm980, -1e+09, %v4399
      %v4420 = vsel %vm981, -1e+09, %v4400
      %v4421 = vsel %vm980, -1e+09, %v4401
      %v4422 = vsel %vm981, -1e+09, %v4402
      %v4423 = vsel %vm980, -1e+09, %v4403
      %v4424 = vsel %vm981, -1e+09, %v4404
      %v4425 = vsel %vm980, -1e+09, %v4405
      %v4426 = vsel %vm981, -1e+09, %v4406
      %v4427 = vsel %vm980, -1e+09, %v4407
      %v4428 = vsel %vm981, -1e+09, %v4408
      %v4429 = vsel %vm980, -1e+09, %v4409
      %v4430 = vsel %vm981, -1e+09, %v4410
      %v4431 = vsel %vm980, -1e+09, %v4411
      %v4432 = vsel %vm981, -1e+09, %v4412
      %v4433 = vsel %vm980, -1e+09, %v4413
      %v4434 = vsel %vm981, -1e+09, %v4414
      %v4435 = vsel %vm980, -1e+09, %v4415
      %v4436 = vsel %vm981, -1e+09, %v4416
      %v4437 = vsel %vm980, -1e+09, %v4417
      %v4438 = vsel %vm981, -1e+09, %v4418
      %v4439 = vsel %vm744, %v4420, -inf
      %v4440 = vmax.f32 %v4419, %v4439
      %4441 = vmax.xlane.f32.xlu0 %v4440
      %v4442 = vpop.xlane.xlu0 %4441
      %v4443 = vsel %vm744, %v4422, -inf
      %v4444 = vmax.f32 %v4421, %v4443
      %4445 = vmax.xlane.f32.xlu0 %v4444
      %v4446 = vpop.xlane.xlu0 %4445
      %v4447 = vsel %vm744, %v4424, -inf
      %v4448 = vmax.f32 %v4423, %v4447
      %4449 = vmax.xlane.f32.xlu0 %v4448
      %v4450 = vpop.xlane.xlu0 %4449
      %v4451 = vsel %vm744, %v4426, -inf
      %v4452 = vmax.f32 %v4425, %v4451
      %4453 = vmax.xlane.f32.xlu0 %v4452
      %v4454 = vpop.xlane.xlu0 %4453
      %v4455 = vsel %vm744, %v4428, -inf
      %v4456 = vmax.f32 %v4427, %v4455
      %4457 = vmax.xlane.f32.xlu0 %v4456
      %v4458 = vpop.xlane.xlu0 %4457
      %v4459 = vsel %vm744, %v4430, -inf
      %v4460 = vmax.f32 %v4429, %v4459
      %4461 = vmax.xlane.f32.xlu0 %v4460
      %v4462 = vpop.xlane.xlu0 %4461
      %v4463 = vsel %vm744, %v4432, -inf
      %v4464 = vmax.f32 %v4431, %v4463
      %4465 = vmax.xlane.f32.xlu0 %v4464
      %v4466 = vpop.xlane.xlu0 %4465
      %v4467 = vsel %vm744, %v4434, -inf
      %v4468 = vmax.f32 %v4433, %v4467
      %4469 = vmax.xlane.f32.xlu0 %v4468
      %v4470 = vpop.xlane.xlu0 %4469
      %v4471 = vsel %vm744, %v4436, -inf
      %v4472 = vmax.f32 %v4435, %v4471
      %4473 = vmax.xlane.f32.xlu0 %v4472
      %v4474 = vpop.xlane.xlu0 %4473
      %v4475 = vsel %vm744, %v4438, -inf
      %v4476 = vmax.f32 %v4437, %v4475
      %4477 = vmax.xlane.f32.xlu0 %v4476
      %v4478 = vpop.xlane.xlu0 %4477
      %v4479 = vsub.f32 %v4419, %v4442
      %v4480 = vsub.f32 %v4420, %v4442
      %v4481 = vsub.f32 %v4421, %v4446
      %v4482 = vsub.f32 %v4422, %v4446
      %v4483 = vsub.f32 %v4423, %v4450
      %v4484 = vsub.f32 %v4424, %v4450
      %v4485 = vsub.f32 %v4425, %v4454
      %v4486 = vsub.f32 %v4426, %v4454
      %v4487 = vsub.f32 %v4427, %v4458
      %v4488 = vsub.f32 %v4428, %v4458
      %v4489 = vsub.f32 %v4429, %v4462
      %v4490 = vsub.f32 %v4430, %v4462
      %v4491 = vsub.f32 %v4431, %v4466
      %v4492 = vsub.f32 %v4432, %v4466
      %v4493 = vsub.f32 %v4433, %v4470
      %v4494 = vsub.f32 %v4434, %v4470
      %v4495 = vsub.f32 %v4435, %v4474
      %v4496 = vsub.f32 %v4436, %v4474
      %v4497 = vsub.f32 %v4437, %v4478
      %v4498 = vsub.f32 %v4438, %v4478
      %v4499 = vmul.f32 %v4479, 1.442695
      %v4500 = vpow.pop %v4499
      %v4501 = vmul.f32 %v4480, 1.442695
      %v4502 = vpow.pop %v4501
      %v4503 = vmul.f32 %v4481, 1.442695
      %v4504 = vpow.pop %v4503
      %v4505 = vmul.f32 %v4482, 1.442695
      %v4506 = vpow.pop %v4505
      %v4507 = vmul.f32 %v4483, 1.442695
      %v4508 = vpow.pop %v4507
      %v4509 = vmul.f32 %v4484, 1.442695
      %v4510 = vpow.pop %v4509
      %v4511 = vmul.f32 %v4485, 1.442695
      %v4512 = vpow.pop %v4511
      %v4513 = vmul.f32 %v4486, 1.442695
      %v4514 = vpow.pop %v4513
      %v4515 = vmul.f32 %v4487, 1.442695
      %v4516 = vpow.pop %v4515
      %v4517 = vmul.f32 %v4488, 1.442695
      %v4518 = vpow.pop %v4517
      %v4519 = vmul.f32 %v4489, 1.442695
      %v4520 = vpow.pop %v4519
      %v4521 = vmul.f32 %v4490, 1.442695
      %v4522 = vpow.pop %v4521
      %v4523 = vmul.f32 %v4491, 1.442695
      %v4524 = vpow.pop %v4523
      %v4525 = vmul.f32 %v4492, 1.442695
      %v4526 = vpow.pop %v4525
      %v4527 = vmul.f32 %v4493, 1.442695
      %v4528 = vpow.pop %v4527
      %v4529 = vmul.f32 %v4494, 1.442695
      %v4530 = vpow.pop %v4529
      %v4531 = vmul.f32 %v4495, 1.442695
      %v4532 = vpow.pop %v4531
      %v4533 = vmul.f32 %v4496, 1.442695
      %v4534 = vpow.pop %v4533
      %v4535 = vmul.f32 %v4497, 1.442695
      %v4536 = vpow.pop %v4535
      %v4537 = vmul.f32 %v4498, 1.442695
      %v4538 = vpow.pop %v4537
      %v4539 = vsel %vm744, %v4502, 0.0
      %v4540 = vadd.f32 %v4500, %v4539
      %4541 = vadd.xlane.f32.xlu0 %v4540
      %v4542 = vpop.xlane.xlu0 %4541
      %v4543 = vsel %vm744, %v4506, 0.0
      %v4544 = vadd.f32 %v4504, %v4543
      %4545 = vadd.xlane.f32.xlu0 %v4544
      %v4546 = vpop.xlane.xlu0 %4545
      %v4547 = vsel %vm744, %v4510, 0.0
      %v4548 = vadd.f32 %v4508, %v4547
      %4549 = vadd.xlane.f32.xlu0 %v4548
      %v4550 = vpop.xlane.xlu0 %4549
      %v4551 = vsel %vm744, %v4514, 0.0
      %v4552 = vadd.f32 %v4512, %v4551
      %4553 = vadd.xlane.f32.xlu0 %v4552
      %v4554 = vpop.xlane.xlu0 %4553
      %v4555 = vsel %vm744, %v4518, 0.0
      %v4556 = vadd.f32 %v4516, %v4555
      %4557 = vadd.xlane.f32.xlu0 %v4556
      %v4558 = vpop.xlane.xlu0 %4557
      %v4559 = vsel %vm744, %v4522, 0.0
      %v4560 = vadd.f32 %v4520, %v4559
      %4561 = vadd.xlane.f32.xlu0 %v4560
      %v4562 = vpop.xlane.xlu0 %4561
      %v4563 = vsel %vm744, %v4526, 0.0
      %v4564 = vadd.f32 %v4524, %v4563
      %4565 = vadd.xlane.f32.xlu0 %v4564
      %v4566 = vpop.xlane.xlu0 %4565
      %v4567 = vsel %vm744, %v4530, 0.0
      %v4568 = vadd.f32 %v4528, %v4567
      %4569 = vadd.xlane.f32.xlu0 %v4568
      %v4570 = vpop.xlane.xlu0 %4569
      %v4571 = vsel %vm744, %v4534, 0.0
      %v4572 = vadd.f32 %v4532, %v4571
      %4573 = vadd.xlane.f32.xlu0 %v4572
      %v4574 = vpop.xlane.xlu0 %4573
      %v4575 = vsel %vm744, %v4538, 0.0
      %v4576 = vadd.f32 %v4536, %v4575
      %4577 = vadd.xlane.f32.xlu0 %v4576
      %v4578 = vpop.xlane.xlu0 %4577
      %v4579 = vrcp.pop %v4542
      %v4580 = vmul.f32 %v4500, %v4579
      %v4581 = vmul.f32 %v4502, %v4579
      %v4582 = vrcp.pop %v4546
      %v4583 = vmul.f32 %v4504, %v4582
      %v4584 = vmul.f32 %v4506, %v4582
      %v4585 = vrcp.pop %v4550
      %v4586 = vmul.f32 %v4508, %v4585
      %v4587 = vmul.f32 %v4510, %v4585
      %v4588 = vrcp.pop %v4554
      %v4589 = vmul.f32 %v4512, %v4588
      %v4590 = vmul.f32 %v4514, %v4588
      %v4591 = vrcp.pop %v4558
      %v4592 = vmul.f32 %v4516, %v4591
      %v4593 = vmul.f32 %v4518, %v4591
      %v4594 = vrcp.pop %v4562
      %v4595 = vmul.f32 %v4520, %v4594
      %v4596 = vmul.f32 %v4522, %v4594
      %v4597 = vrcp.pop %v4566
      %v4598 = vmul.f32 %v4524, %v4597
      %v4599 = vmul.f32 %v4526, %v4597
      %v4600 = vrcp.pop %v4570
      %v4601 = vmul.f32 %v4528, %v4600
      %v4602 = vmul.f32 %v4530, %v4600
      %v4603 = vrcp.pop %v4574
      %v4604 = vmul.f32 %v4532, %v4603
      %v4605 = vmul.f32 %v4534, %v4603
      %v4606 = vrcp.pop %v4578
      %v4607 = vmul.f32 %v4536, %v4606
      %v4608 = vmul.f32 %v4538, %v4606
      %4609 = vrot.lane.b32.xlu0 %v661, 24
      %v4610 = vpop.permute.xlu0 %4609
      %4611 = vrot.lane.b32.xlu0 %v666, 24
      %v4612 = vpop.permute.xlu0 %4611
      %4613 = vrot.lane.b32.xlu0 %v671, 24
      %v4614 = vpop.permute.xlu0 %4613
      %4615 = vrot.lane.b32.xlu0 %v676, 24
      %v4616 = vpop.permute.xlu0 %4615
      %4617 = vrot.lane.b32.xlu0 %v681, 24
      %v4618 = vpop.permute.xlu0 %4617
      %4619 = vrot.lane.b32.xlu0 %v686, 24
      %v4620 = vpop.permute.xlu0 %4619
      %4621 = vrot.lane.b32.xlu0 %v691, 24
      %v4622 = vpop.permute.xlu0 %4621
      %4623 = vrot.lane.b32.xlu0 %v696, 24
      %v4624 = vpop.permute.xlu0 %4623
      %4625 = vrot.lane.b32.xlu0 %v701, 24
      %v4626 = vpop.permute.xlu0 %4625
      %4627 = vrot.lane.b32.xlu0 %v706, 24
      %v4628 = vpop.permute.xlu0 %4627
      %4629 = vrot.lane.b32.xlu0 %v711, 24
      %v4630 = vpop.permute.xlu0 %4629
      %4631 = vrot.lane.b32.xlu0 %v716, 24
      %v4632 = vpop.permute.xlu0 %4631
      %4633 = vrot.lane.b32.xlu0 %v721, 24
      %v4634 = vpop.permute.xlu0 %4633
      %4635 = vrot.lane.b32.xlu0 %v726, 24
      %v4636 = vpop.permute.xlu0 %4635
      %4637 = vrot.lane.b32.xlu0 %v731, 24
      %v4638 = vpop.permute.xlu0 %4637
      %4639 = vrot.lane.b32.xlu0 %v736, 24
      %v4640 = vpop.permute.xlu0 %4639
      %4641 = vrot.lane.b32.xlu0 %v741, 24
      %v4642 = vpop.permute.xlu0 %4641
      %v4661 = vsel %vm744, %v4581, 0
      %v4664 = vsel %vm744, %v4584, 0
      %v4667 = vsel %vm744, %v4587, 0
      %v4670 = vsel %vm744, %v4590, 0
      %v4673 = vsel %vm744, %v4593, 0
      %v4676 = vsel %vm744, %v4596, 0
      %v4679 = vsel %vm744, %v4599, 0
      %v4682 = vsel %vm744, %v4602, 0
      %v4685 = vsel %vm744, %v4605, 0
      %v4688 = vsel %vm744, %v4608, 0
      %4690 = vmatprep.subr.mxu0 0.0
      %4691 = vmatpush1.msra.mxu0 %v4640
      %4692 = vmatprep.subr.mxu0 0.0
      %4693 = vmatpush1.msra.mxu0 %v4638
      %4694 = vmatprep.subr.mxu0 0.0
      %4695 = vmatpush1.msra.mxu0 %v4636
      %4696 = vmatprep.subr.mxu0 0.0
      %4697 = vmatpush1.msra.mxu0 %v4634
      %4698 = vmatprep.subr.mxu0 0.0
      %4699 = vmatpush1.msra.mxu0 %v4632
      %4700 = vmatprep.subr.mxu0 0.0
      %4701 = vmatpush1.msra.mxu0 %v4630
      %4702 = vmatprep.subr.mxu0 0.0
      %4703 = vmatpush1.msra.mxu0 %v4628
      %4704 = vmatprep.subr.mxu0 0.0
      %4705 = vmatpush1.msra.mxu0 %v4626
      %4706 = vmatprep.subr.mxu0 0.0
      %4707 = vmatpush1.msra.mxu0 %v4624
      %4708 = vmatprep.subr.mxu0 0.0
      %4709 = vmatpush1.msra.mxu0 %v4622
      %4710 = vmatprep.subr.mxu0 0.0
      %4711 = vmatpush1.msra.mxu0 %v4620
      %4712 = vmatprep.subr.mxu0 0.0
      %4713 = vmatpush1.msra.mxu0 %v4618
      %4714 = vmatprep.subr.mxu0 0.0
      %4715 = vmatpush1.msra.mxu0 %v4616
      %4716 = vmatprep.subr.mxu0 0.0
      %4717 = vmatpush1.msra.mxu0 %v4614
      %4718 = vmatprep.subr.mxu0 0.0
      %4719 = vmatpush1.msra.mxu0 %v4612
      %4720 = vmatprep.subr.mxu0 0.0
      %4721 = vmatpush1.msra.mxu0 %v4610
      %4722 = vmatprep.subr.mxu0 0.0
      %4723 = vmatpush2.msra.mxu0 0.0
      %4724 = vmatprep.subr.mxu0 0.0
      %4725 = vmatpush2.msra.mxu0 0.0
      %4726 = vmatprep.subr.mxu0 0.0
      %4727 = vmatpush2.msra.mxu0 0.0
      %4728 = vmatprep.subr.mxu0 0.0
      %4729 = vmatpush2.msra.mxu0 0.0
      %4730 = vmatprep.subr.mxu0 0.0
      %4731 = vmatpush2.msra.mxu0 0.0
      %4732 = vmatprep.subr.mxu0 0.0
      %4733 = vmatpush2.msra.mxu0 0.0
      %4734 = vmatprep.subr.mxu0 0.0
      %4735 = vmatpush2.msra.mxu0 0.0
      %4736 = vmatprep.subr.mxu0 0.0
      %4737 = vmatpush2.msra.mxu0 0.0
      %4738 = vmatprep.subr.mxu0 0.0
      %4739 = vmatpush2.msra.mxu0 0.0
      %4740 = vmatprep.subr.mxu0 0.0
      %4741 = vmatpush2.msra.mxu0 0.0
      %4742 = vmatprep.subr.mxu0 0.0
      %4743 = vmatpush2.msra.mxu0 0.0
      %4744 = vmatprep.subr.mxu0 0.0
      %4745 = vmatpush2.msra.mxu0 0.0
      %4746 = vmatprep.subr.mxu0 0.0
      %4747 = vmatpush2.msra.mxu0 0.0
      %4748 = vmatprep.subr.mxu0 0.0
      %4749 = vmatpush2.msra.mxu0 0.0
      %4750 = vmatprep.subr.mxu0 0.0
      %4751 = vmatpush2.msra.mxu0 0.0
      %4752 = vmatprep.subr.mxu0 0.0
      %4753 = vmatpush2.msra.mxu0 %v4642
      %4754 = vmatprep.mubr.f32.mxu0 %v4661
      %4755 = vmatmul.mubr.f32.gmra.mxu0 %v4580
      %v4756 = vpop.f32.mrf.mxu0
      %v4757 = vadd.f32 0.0, %v4756
      %v4758 = vpop.f32.mrf.mxu0
      %4759 = vmatprep.mubr.f32.mxu0 %v4664
      %4760 = vmatmul.mubr.f32.gmra.mxu0 %v4583
      %v4761 = vpop.f32.mrf.mxu0
      %v4762 = vadd.f32 0.0, %v4761
      %v4763 = vpop.f32.mrf.mxu0
      %4764 = vmatprep.mubr.f32.mxu0 %v4667
      %4765 = vmatmul.mubr.f32.gmra.mxu0 %v4586
      %v4766 = vpop.f32.mrf.mxu0
      %v4767 = vadd.f32 0.0, %v4766
      %v4768 = vpop.f32.mrf.mxu0
      %4769 = vmatprep.mubr.f32.mxu0 %v4670
      %4770 = vmatmul.mubr.f32.gmra.mxu0 %v4589
      %v4771 = vpop.f32.mrf.mxu0
      %v4772 = vadd.f32 0.0, %v4771
      %v4773 = vpop.f32.mrf.mxu0
      %4774 = vmatprep.mubr.f32.mxu0 %v4673
      %4775 = vmatmul.mubr.f32.gmra.mxu0 %v4592
      %v4776 = vpop.f32.mrf.mxu0
      %v4777 = vadd.f32 0.0, %v4776
      %v4778 = vpop.f32.mrf.mxu0
      %4779 = vmatprep.mubr.f32.mxu0 %v4676
      %4780 = vmatmul.mubr.f32.gmra.mxu0 %v4595
      %v4781 = vpop.f32.mrf.mxu0
      %v4782 = vadd.f32 0.0, %v4781
      %v4783 = vpop.f32.mrf.mxu0
      %4784 = vmatprep.mubr.f32.mxu0 %v4679
      %4785 = vmatmul.mubr.f32.gmra.mxu0 %v4598
      %v4786 = vpop.f32.mrf.mxu0
      %v4787 = vadd.f32 0.0, %v4786
      %v4788 = vpop.f32.mrf.mxu0
      %4789 = vmatprep.mubr.f32.mxu0 %v4682
      %4790 = vmatmul.mubr.f32.gmra.mxu0 %v4601
      %v4791 = vpop.f32.mrf.mxu0
      %v4792 = vadd.f32 0.0, %v4791
      %v4793 = vpop.f32.mrf.mxu0
      %4794 = vmatprep.mubr.f32.mxu0 %v4685
      %4795 = vmatmul.mubr.f32.gmra.mxu0 %v4604
      %v4796 = vpop.f32.mrf.mxu0
      %v4797 = vadd.f32 0.0, %v4796
      %v4798 = vpop.f32.mrf.mxu0
      %4799 = vmatprep.mubr.f32.mxu0 %v4688
      %4800 = vmatmul.mubr.f32.gmra.mxu0 %v4607
      %v4801 = vpop.f32.mrf.mxu0
      %v4802 = vadd.f32 0.0, %v4801
      %v4803 = vpop.f32.mrf.mxu0
      %4804 = vdwg.mxu0
      %4805 = vrot.lane.b32.xlu0 %v484, 80
      %v4806 = vpop.permute.xlu0 %4805
      %4807 = vrot.lane.b32.xlu0 %v489, 80
      %v4808 = vpop.permute.xlu0 %4807
      %4809 = vrot.lane.b32.xlu0 %v494, 80
      %v4810 = vpop.permute.xlu0 %4809
      %4811 = vrot.lane.b32.xlu0 %v499, 80
      %v4812 = vpop.permute.xlu0 %4811
      %4813 = vrot.lane.b32.xlu0 %v504, 80
      %v4814 = vpop.permute.xlu0 %4813
      %4815 = vrot.lane.b32.xlu0 %v509, 80
      %v4816 = vpop.permute.xlu0 %4815
      %4817 = vrot.lane.b32.xlu0 %v514, 80
      %v4818 = vpop.permute.xlu0 %4817
      %4819 = vrot.lane.b32.xlu0 %v519, 80
      %v4820 = vpop.permute.xlu0 %4819
      %4821 = vrot.lane.b32.xlu0 %v524, 80
      %v4822 = vpop.permute.xlu0 %4821
      %4823 = vrot.lane.b32.xlu0 %v529, 80
      %v4824 = vpop.permute.xlu0 %4823
      %4825 = vrot.lane.b32.xlu0 %v661, 48
      %v4826 = vpop.permute.xlu0 %4825
      %4827 = vrot.lane.b32.xlu0 %v666, 48
      %v4828 = vpop.permute.xlu0 %4827
      %4829 = vrot.lane.b32.xlu0 %v671, 48
      %v4830 = vpop.permute.xlu0 %4829
      %4831 = vrot.lane.b32.xlu0 %v676, 48
      %v4832 = vpop.permute.xlu0 %4831
      %4833 = vrot.lane.b32.xlu0 %v681, 48
      %v4834 = vpop.permute.xlu0 %4833
      %4835 = vrot.lane.b32.xlu0 %v686, 48
      %v4836 = vpop.permute.xlu0 %4835
      %4837 = vrot.lane.b32.xlu0 %v691, 48
      %v4838 = vpop.permute.xlu0 %4837
      %4839 = vrot.lane.b32.xlu0 %v696, 48
      %v4840 = vpop.permute.xlu0 %4839
      %4841 = vrot.lane.b32.xlu0 %v701, 48
      %v4842 = vpop.permute.xlu0 %4841
      %4843 = vrot.lane.b32.xlu0 %v706, 48
      %v4844 = vpop.permute.xlu0 %4843
      %4845 = vrot.lane.b32.xlu0 %v711, 48
      %v4846 = vpop.permute.xlu0 %4845
      %4847 = vrot.lane.b32.xlu0 %v716, 48
      %v4848 = vpop.permute.xlu0 %4847
      %4849 = vrot.lane.b32.xlu0 %v721, 48
      %v4850 = vpop.permute.xlu0 %4849
      %4851 = vrot.lane.b32.xlu0 %v726, 48
      %v4852 = vpop.permute.xlu0 %4851
      %4853 = vrot.lane.b32.xlu0 %v731, 48
      %v4854 = vpop.permute.xlu0 %4853
      %4855 = vrot.lane.b32.xlu0 %v736, 48
      %v4856 = vpop.permute.xlu0 %4855
      %4857 = vrot.lane.b32.xlu0 %v741, 48
      %v4858 = vpop.permute.xlu0 %4857
      %v4859 = vsel %vm744, %v4806, 0
      %v4861 = vsel %vm744, %v4808, 0
      %v4863 = vsel %vm744, %v4810, 0
      %v4865 = vsel %vm744, %v4812, 0
      %v4867 = vsel %vm744, %v4814, 0
      %v4869 = vsel %vm744, %v4816, 0
      %v4871 = vsel %vm744, %v4818, 0
      %v4873 = vsel %vm744, %v4820, 0
      %v4875 = vsel %vm744, %v4822, 0
      %v4877 = vsel %vm744, %v4824, 0
      %v4879 = vsel %vm744, %v4826, 0
      %v4881 = vsel %vm744, %v4828, 0
      %v4883 = vsel %vm744, %v4830, 0
      %v4885 = vsel %vm744, %v4832, 0
      %v4887 = vsel %vm744, %v4834, 0
      %v4889 = vsel %vm744, %v4836, 0
      %v4891 = vsel %vm744, %v4838, 0
      %v4893 = vsel %vm744, %v4840, 0
      %v4895 = vsel %vm744, %v4842, 0
      %v4897 = vsel %vm744, %v4844, 0
      %v4899 = vsel %vm744, %v4846, 0
      %v4901 = vsel %vm744, %v4848, 0
      %v4903 = vsel %vm744, %v4850, 0
      %v4905 = vsel %vm744, %v4852, 0
      %v4907 = vsel %vm744, %v4854, 0
      %v4909 = vsel %vm744, %v4856, 0
      %v4911 = vsel %vm744, %v4858, 0
      %4913 = vmatprep.subr.mxu0 0.0
      %4914 = vmatpush1.xpose.msra.mxu0 %v4909
      %4915 = vmatprep.subr.mxu0 0.0
      %4916 = vmatpush1.xpose.msra.mxu0 %v4907
      %4917 = vmatprep.subr.mxu0 0.0
      %4918 = vmatpush1.xpose.msra.mxu0 %v4905
      %4919 = vmatprep.subr.mxu0 0.0
      %4920 = vmatpush1.xpose.msra.mxu0 %v4903
      %4921 = vmatprep.subr.mxu0 0.0
      %4922 = vmatpush1.xpose.msra.mxu0 %v4901
      %4923 = vmatprep.subr.mxu0 0.0
      %4924 = vmatpush1.xpose.msra.mxu0 %v4899
      %4925 = vmatprep.subr.mxu0 0.0
      %4926 = vmatpush1.xpose.msra.mxu0 %v4897
      %4927 = vmatprep.subr.mxu0 0.0
      %4928 = vmatpush1.xpose.msra.mxu0 %v4895
      %4929 = vmatprep.subr.mxu0 0.0
      %4930 = vmatpush1.xpose.msra.mxu0 %v4893
      %4931 = vmatprep.subr.mxu0 0.0
      %4932 = vmatpush1.xpose.msra.mxu0 %v4891
      %4933 = vmatprep.subr.mxu0 0.0
      %4934 = vmatpush1.xpose.msra.mxu0 %v4889
      %4935 = vmatprep.subr.mxu0 0.0
      %4936 = vmatpush1.xpose.msra.mxu0 %v4887
      %4937 = vmatprep.subr.mxu0 0.0
      %4938 = vmatpush1.xpose.msra.mxu0 %v4885
      %4939 = vmatprep.subr.mxu0 0.0
      %4940 = vmatpush1.xpose.msra.mxu0 %v4883
      %4941 = vmatprep.subr.mxu0 0.0
      %4942 = vmatpush1.xpose.msra.mxu0 %v4881
      %4943 = vmatprep.subr.mxu0 0.0
      %4944 = vmatpush1.xpose.msra.mxu0 %v4879
      %4945 = vmatprep.subr.mxu0 0.0
      %4946 = vmatpush2.xpose.msra.mxu0 0.0
      %4947 = vmatprep.subr.mxu0 0.0
      %4948 = vmatpush2.xpose.msra.mxu0 0.0
      %4949 = vmatprep.subr.mxu0 0.0
      %4950 = vmatpush2.xpose.msra.mxu0 0.0
      %4951 = vmatprep.subr.mxu0 0.0
      %4952 = vmatpush2.xpose.msra.mxu0 0.0
      %4953 = vmatprep.subr.mxu0 0.0
      %4954 = vmatpush2.xpose.msra.mxu0 0.0
      %4955 = vmatprep.subr.mxu0 0.0
      %4956 = vmatpush2.xpose.msra.mxu0 0.0
      %4957 = vmatprep.subr.mxu0 0.0
      %4958 = vmatpush2.xpose.msra.mxu0 0.0
      %4959 = vmatprep.subr.mxu0 0.0
      %4960 = vmatpush2.xpose.msra.mxu0 0.0
      %4961 = vmatprep.subr.mxu0 0.0
      %4962 = vmatpush2.xpose.msra.mxu0 0.0
      %4963 = vmatprep.subr.mxu0 0.0
      %4964 = vmatpush2.xpose.msra.mxu0 0.0
      %4965 = vmatprep.subr.mxu0 0.0
      %4966 = vmatpush2.xpose.msra.mxu0 0.0
      %4967 = vmatprep.subr.mxu0 0.0
      %4968 = vmatpush2.xpose.msra.mxu0 0.0
      %4969 = vmatprep.subr.mxu0 0.0
      %4970 = vmatpush2.xpose.msra.mxu0 0.0
      %4971 = vmatprep.subr.mxu0 0.0
      %4972 = vmatpush2.xpose.msra.mxu0 0.0
      %4973 = vmatprep.subr.mxu0 0.0
      %4974 = vmatpush2.xpose.msra.mxu0 0.0
      %4975 = vmatprep.subr.mxu0 0.0
      %4976 = vmatpush2.xpose.msra.mxu0 %v4911
      %4977 = vmatprep.mubr.f32.mxu0 0.0
      %4978 = vmatmul.mubr.f32.gmra.mxu0 %v4859
      %v4979 = vpop.f32.mrf.mxu0
      %v4980 = vadd.f32 0.0, %v4979
      %v4981 = vpop.f32.mrf.mxu0
      %v4982 = vadd.f32 0.0, %v4981
      %4983 = vmatprep.mubr.f32.mxu0 0.0
      %4984 = vmatmul.mubr.f32.gmra.mxu0 %v4861
      %v4985 = vpop.f32.mrf.mxu0
      %v4986 = vadd.f32 0.0, %v4985
      %v4987 = vpop.f32.mrf.mxu0
      %v4988 = vadd.f32 0.0, %v4987
      %4989 = vmatprep.mubr.f32.mxu0 0.0
      %4990 = vmatmul.mubr.f32.gmra.mxu0 %v4863
      %v4991 = vpop.f32.mrf.mxu0
      %v4992 = vadd.f32 0.0, %v4991
      %v4993 = vpop.f32.mrf.mxu0
      %v4994 = vadd.f32 0.0, %v4993
      %4995 = vmatprep.mubr.f32.mxu0 0.0
      %4996 = vmatmul.mubr.f32.gmra.mxu0 %v4865
      %v4997 = vpop.f32.mrf.mxu0
      %v4998 = vadd.f32 0.0, %v4997
      %v4999 = vpop.f32.mrf.mxu0
      %v5000 = vadd.f32 0.0, %v4999
      %5001 = vmatprep.mubr.f32.mxu0 0.0
      %5002 = vmatmul.mubr.f32.gmra.mxu0 %v4867
      %v5003 = vpop.f32.mrf.mxu0
      %v5004 = vadd.f32 0.0, %v5003
      %v5005 = vpop.f32.mrf.mxu0
      %v5006 = vadd.f32 0.0, %v5005
      %5007 = vmatprep.mubr.f32.mxu0 0.0
      %5008 = vmatmul.mubr.f32.gmra.mxu0 %v4869
      %v5009 = vpop.f32.mrf.mxu0
      %v5010 = vadd.f32 0.0, %v5009
      %v5011 = vpop.f32.mrf.mxu0
      %v5012 = vadd.f32 0.0, %v5011
      %5013 = vmatprep.mubr.f32.mxu0 0.0
      %5014 = vmatmul.mubr.f32.gmra.mxu0 %v4871
      %v5015 = vpop.f32.mrf.mxu0
      %v5016 = vadd.f32 0.0, %v5015
      %v5017 = vpop.f32.mrf.mxu0
      %v5018 = vadd.f32 0.0, %v5017
      %5019 = vmatprep.mubr.f32.mxu0 0.0
      %5020 = vmatmul.mubr.f32.gmra.mxu0 %v4873
      %v5021 = vpop.f32.mrf.mxu0
      %v5022 = vadd.f32 0.0, %v5021
      %v5023 = vpop.f32.mrf.mxu0
      %v5024 = vadd.f32 0.0, %v5023
      %5025 = vmatprep.mubr.f32.mxu0 0.0
      %5026 = vmatmul.mubr.f32.gmra.mxu0 %v4875
      %v5027 = vpop.f32.mrf.mxu0
      %v5028 = vadd.f32 0.0, %v5027
      %v5029 = vpop.f32.mrf.mxu0
      %v5030 = vadd.f32 0.0, %v5029
      %5031 = vmatprep.mubr.f32.mxu0 0.0
      %5032 = vmatmul.mubr.f32.gmra.mxu0 %v4877
      %v5033 = vpop.f32.mrf.mxu0
      %v5034 = vadd.f32 0.0, %v5033
      %v5035 = vpop.f32.mrf.mxu0
      %v5036 = vadd.f32 0.0, %v5035
      %5037 = vdwg.mxu0
      %v5038 = vmul.f32 %v4980, 0.35355338
      %v5039 = vmul.f32 %v4982, 0.35355338
      %v5040 = vmul.f32 %v4986, 0.35355338
      %v5041 = vmul.f32 %v4988, 0.35355338
      %v5042 = vmul.f32 %v4992, 0.35355338
      %v5043 = vmul.f32 %v4994, 0.35355338
      %v5044 = vmul.f32 %v4998, 0.35355338
      %v5045 = vmul.f32 %v5000, 0.35355338
      %v5046 = vmul.f32 %v5004, 0.35355338
      %v5047 = vmul.f32 %v5006, 0.35355338
      %v5048 = vmul.f32 %v5010, 0.35355338
      %v5049 = vmul.f32 %v5012, 0.35355338
      %v5050 = vmul.f32 %v5016, 0.35355338
      %v5051 = vmul.f32 %v5018, 0.35355338
      %v5052 = vmul.f32 %v5022, 0.35355338
      %v5053 = vmul.f32 %v5024, 0.35355338
      %v5054 = vmul.f32 %v5028, 0.35355338
      %v5055 = vmul.f32 %v5030, 0.35355338
      %v5056 = vmul.f32 %v5034, 0.35355338
      %v5057 = vmul.f32 %v5036, 0.35355338
      %v5058 = vsel %vm980, -1e+09, %v5038
      %v5059 = vsel %vm981, -1e+09, %v5039
      %v5060 = vsel %vm980, -1e+09, %v5040
      %v5061 = vsel %vm981, -1e+09, %v5041
      %v5062 = vsel %vm980, -1e+09, %v5042
      %v5063 = vsel %vm981, -1e+09, %v5043
      %v5064 = vsel %vm980, -1e+09, %v5044
      %v5065 = vsel %vm981, -1e+09, %v5045
      %v5066 = vsel %vm980, -1e+09, %v5046
      %v5067 = vsel %vm981, -1e+09, %v5047
      %v5068 = vsel %vm980, -1e+09, %v5048
      %v5069 = vsel %vm981, -1e+09, %v5049
      %v5070 = vsel %vm980, -1e+09, %v5050
      %v5071 = vsel %vm981, -1e+09, %v5051
      %v5072 = vsel %vm980, -1e+09, %v5052
      %v5073 = vsel %vm981, -1e+09, %v5053
      %v5074 = vsel %vm980, -1e+09, %v5054
      %v5075 = vsel %vm981, -1e+09, %v5055
      %v5076 = vsel %vm980, -1e+09, %v5056
      %v5077 = vsel %vm981, -1e+09, %v5057
      %v5078 = vsel %vm744, %v5059, -inf
      %v5079 = vmax.f32 %v5058, %v5078
      %5080 = vmax.xlane.f32.xlu0 %v5079
      %v5081 = vpop.xlane.xlu0 %5080
      %v5082 = vsel %vm744, %v5061, -inf
      %v5083 = vmax.f32 %v5060, %v5082
      %5084 = vmax.xlane.f32.xlu0 %v5083
      %v5085 = vpop.xlane.xlu0 %5084
      %v5086 = vsel %vm744, %v5063, -inf
      %v5087 = vmax.f32 %v5062, %v5086
      %5088 = vmax.xlane.f32.xlu0 %v5087
      %v5089 = vpop.xlane.xlu0 %5088
      %v5090 = vsel %vm744, %v5065, -inf
      %v5091 = vmax.f32 %v5064, %v5090
      %5092 = vmax.xlane.f32.xlu0 %v5091
      %v5093 = vpop.xlane.xlu0 %5092
      %v5094 = vsel %vm744, %v5067, -inf
      %v5095 = vmax.f32 %v5066, %v5094
      %5096 = vmax.xlane.f32.xlu0 %v5095
      %v5097 = vpop.xlane.xlu0 %5096
      %v5098 = vsel %vm744, %v5069, -inf
      %v5099 = vmax.f32 %v5068, %v5098
      %5100 = vmax.xlane.f32.xlu0 %v5099
      %v5101 = vpop.xlane.xlu0 %5100
      %v5102 = vsel %vm744, %v5071, -inf
      %v5103 = vmax.f32 %v5070, %v5102
      %5104 = vmax.xlane.f32.xlu0 %v5103
      %v5105 = vpop.xlane.xlu0 %5104
      %v5106 = vsel %vm744, %v5073, -inf
      %v5107 = vmax.f32 %v5072, %v5106
      %5108 = vmax.xlane.f32.xlu0 %v5107
      %v5109 = vpop.xlane.xlu0 %5108
      %v5110 = vsel %vm744, %v5075, -inf
      %v5111 = vmax.f32 %v5074, %v5110
      %5112 = vmax.xlane.f32.xlu0 %v5111
      %v5113 = vpop.xlane.xlu0 %5112
      %v5114 = vsel %vm744, %v5077, -inf
      %v5115 = vmax.f32 %v5076, %v5114
      %5116 = vmax.xlane.f32.xlu0 %v5115
      %v5117 = vpop.xlane.xlu0 %5116
      %v5118 = vsub.f32 %v5058, %v5081
      %v5119 = vsub.f32 %v5059, %v5081
      %v5120 = vsub.f32 %v5060, %v5085
      %v5121 = vsub.f32 %v5061, %v5085
      %v5122 = vsub.f32 %v5062, %v5089
      %v5123 = vsub.f32 %v5063, %v5089
      %v5124 = vsub.f32 %v5064, %v5093
      %v5125 = vsub.f32 %v5065, %v5093
      %v5126 = vsub.f32 %v5066, %v5097
      %v5127 = vsub.f32 %v5067, %v5097
      %v5128 = vsub.f32 %v5068, %v5101
      %v5129 = vsub.f32 %v5069, %v5101
      %v5130 = vsub.f32 %v5070, %v5105
      %v5131 = vsub.f32 %v5071, %v5105
      %v5132 = vsub.f32 %v5072, %v5109
      %v5133 = vsub.f32 %v5073, %v5109
      %v5134 = vsub.f32 %v5074, %v5113
      %v5135 = vsub.f32 %v5075, %v5113
      %v5136 = vsub.f32 %v5076, %v5117
      %v5137 = vsub.f32 %v5077, %v5117
      %v5138 = vmul.f32 %v5118, 1.442695
      %v5139 = vpow.pop %v5138
      %v5140 = vmul.f32 %v5119, 1.442695
      %v5141 = vpow.pop %v5140
      %v5142 = vmul.f32 %v5120, 1.442695
      %v5143 = vpow.pop %v5142
      %v5144 = vmul.f32 %v5121, 1.442695
      %v5145 = vpow.pop %v5144
      %v5146 = vmul.f32 %v5122, 1.442695
      %v5147 = vpow.pop %v5146
      %v5148 = vmul.f32 %v5123, 1.442695
      %v5149 = vpow.pop %v5148
      %v5150 = vmul.f32 %v5124, 1.442695
      %v5151 = vpow.pop %v5150
      %v5152 = vmul.f32 %v5125, 1.442695
      %v5153 = vpow.pop %v5152
      %v5154 = vmul.f32 %v5126, 1.442695
      %v5155 = vpow.pop %v5154
      %v5156 = vmul.f32 %v5127, 1.442695
      %v5157 = vpow.pop %v5156
      %v5158 = vmul.f32 %v5128, 1.442695
      %v5159 = vpow.pop %v5158
      %v5160 = vmul.f32 %v5129, 1.442695
      %v5161 = vpow.pop %v5160
      %v5162 = vmul.f32 %v5130, 1.442695
      %v5163 = vpow.pop %v5162
      %v5164 = vmul.f32 %v5131, 1.442695
      %v5165 = vpow.pop %v5164
      %v5166 = vmul.f32 %v5132, 1.442695
      %v5167 = vpow.pop %v5166
      %v5168 = vmul.f32 %v5133, 1.442695
      %v5169 = vpow.pop %v5168
      %v5170 = vmul.f32 %v5134, 1.442695
      %v5171 = vpow.pop %v5170
      %v5172 = vmul.f32 %v5135, 1.442695
      %v5173 = vpow.pop %v5172
      %v5174 = vmul.f32 %v5136, 1.442695
      %v5175 = vpow.pop %v5174
      %v5176 = vmul.f32 %v5137, 1.442695
      %v5177 = vpow.pop %v5176
      %v5178 = vsel %vm744, %v5141, 0.0
      %v5179 = vadd.f32 %v5139, %v5178
      %5180 = vadd.xlane.f32.xlu0 %v5179
      %v5181 = vpop.xlane.xlu0 %5180
      %v5182 = vsel %vm744, %v5145, 0.0
      %v5183 = vadd.f32 %v5143, %v5182
      %5184 = vadd.xlane.f32.xlu0 %v5183
      %v5185 = vpop.xlane.xlu0 %5184
      %v5186 = vsel %vm744, %v5149, 0.0
      %v5187 = vadd.f32 %v5147, %v5186
      %5188 = vadd.xlane.f32.xlu0 %v5187
      %v5189 = vpop.xlane.xlu0 %5188
      %v5190 = vsel %vm744, %v5153, 0.0
      %v5191 = vadd.f32 %v5151, %v5190
      %5192 = vadd.xlane.f32.xlu0 %v5191
      %v5193 = vpop.xlane.xlu0 %5192
      %v5194 = vsel %vm744, %v5157, 0.0
      %v5195 = vadd.f32 %v5155, %v5194
      %5196 = vadd.xlane.f32.xlu0 %v5195
      %v5197 = vpop.xlane.xlu0 %5196
      %v5198 = vsel %vm744, %v5161, 0.0
      %v5199 = vadd.f32 %v5159, %v5198
      %5200 = vadd.xlane.f32.xlu0 %v5199
      %v5201 = vpop.xlane.xlu0 %5200
      %v5202 = vsel %vm744, %v5165, 0.0
      %v5203 = vadd.f32 %v5163, %v5202
      %5204 = vadd.xlane.f32.xlu0 %v5203
      %v5205 = vpop.xlane.xlu0 %5204
      %v5206 = vsel %vm744, %v5169, 0.0
      %v5207 = vadd.f32 %v5167, %v5206
      %5208 = vadd.xlane.f32.xlu0 %v5207
      %v5209 = vpop.xlane.xlu0 %5208
      %v5210 = vsel %vm744, %v5173, 0.0
      %v5211 = vadd.f32 %v5171, %v5210
      %5212 = vadd.xlane.f32.xlu0 %v5211
      %v5213 = vpop.xlane.xlu0 %5212
      %v5214 = vsel %vm744, %v5177, 0.0
      %v5215 = vadd.f32 %v5175, %v5214
      %5216 = vadd.xlane.f32.xlu0 %v5215
      %v5217 = vpop.xlane.xlu0 %5216
      %v5218 = vrcp.pop %v5181
      %v5219 = vmul.f32 %v5139, %v5218
      %v5220 = vmul.f32 %v5141, %v5218
      %v5221 = vrcp.pop %v5185
      %v5222 = vmul.f32 %v5143, %v5221
      %v5223 = vmul.f32 %v5145, %v5221
      %v5224 = vrcp.pop %v5189
      %v5225 = vmul.f32 %v5147, %v5224
      %v5226 = vmul.f32 %v5149, %v5224
      %v5227 = vrcp.pop %v5193
      %v5228 = vmul.f32 %v5151, %v5227
      %v5229 = vmul.f32 %v5153, %v5227
      %v5230 = vrcp.pop %v5197
      %v5231 = vmul.f32 %v5155, %v5230
      %v5232 = vmul.f32 %v5157, %v5230
      %v5233 = vrcp.pop %v5201
      %v5234 = vmul.f32 %v5159, %v5233
      %v5235 = vmul.f32 %v5161, %v5233
      %v5236 = vrcp.pop %v5205
      %v5237 = vmul.f32 %v5163, %v5236
      %v5238 = vmul.f32 %v5165, %v5236
      %v5239 = vrcp.pop %v5209
      %v5240 = vmul.f32 %v5167, %v5239
      %v5241 = vmul.f32 %v5169, %v5239
      %v5242 = vrcp.pop %v5213
      %v5243 = vmul.f32 %v5171, %v5242
      %v5244 = vmul.f32 %v5173, %v5242
      %v5245 = vrcp.pop %v5217
      %v5246 = vmul.f32 %v5175, %v5245
      %v5247 = vmul.f32 %v5177, %v5245
      %5248 = vrot.lane.b32.xlu0 %v661, 16
      %v5249 = vpop.permute.xlu0 %5248
      %5250 = vrot.lane.b32.xlu0 %v666, 16
      %v5251 = vpop.permute.xlu0 %5250
      %5252 = vrot.lane.b32.xlu0 %v671, 16
      %v5253 = vpop.permute.xlu0 %5252
      %5254 = vrot.lane.b32.xlu0 %v676, 16
      %v5255 = vpop.permute.xlu0 %5254
      %5256 = vrot.lane.b32.xlu0 %v681, 16
      %v5257 = vpop.permute.xlu0 %5256
      %5258 = vrot.lane.b32.xlu0 %v686, 16
      %v5259 = vpop.permute.xlu0 %5258
      %5260 = vrot.lane.b32.xlu0 %v691, 16
      %v5261 = vpop.permute.xlu0 %5260
      %5262 = vrot.lane.b32.xlu0 %v696, 16
      %v5263 = vpop.permute.xlu0 %5262
      %5264 = vrot.lane.b32.xlu0 %v701, 16
      %v5265 = vpop.permute.xlu0 %5264
      %5266 = vrot.lane.b32.xlu0 %v706, 16
      %v5267 = vpop.permute.xlu0 %5266
      %5268 = vrot.lane.b32.xlu0 %v711, 16
      %v5269 = vpop.permute.xlu0 %5268
      %5270 = vrot.lane.b32.xlu0 %v716, 16
      %v5271 = vpop.permute.xlu0 %5270
      %5272 = vrot.lane.b32.xlu0 %v721, 16
      %v5273 = vpop.permute.xlu0 %5272
      %5274 = vrot.lane.b32.xlu0 %v726, 16
      %v5275 = vpop.permute.xlu0 %5274
      %5276 = vrot.lane.b32.xlu0 %v731, 16
      %v5277 = vpop.permute.xlu0 %5276
      %5278 = vrot.lane.b32.xlu0 %v736, 16
      %v5279 = vpop.permute.xlu0 %5278
      %5280 = vrot.lane.b32.xlu0 %v741, 16
      %v5281 = vpop.permute.xlu0 %5280
      %v5300 = vsel %vm744, %v5220, 0
      %v5303 = vsel %vm744, %v5223, 0
      %v5306 = vsel %vm744, %v5226, 0
      %v5309 = vsel %vm744, %v5229, 0
      %v5312 = vsel %vm744, %v5232, 0
      %v5315 = vsel %vm744, %v5235, 0
      %v5318 = vsel %vm744, %v5238, 0
      %v5321 = vsel %vm744, %v5241, 0
      %v5324 = vsel %vm744, %v5244, 0
      %v5327 = vsel %vm744, %v5247, 0
      %5329 = vmatprep.subr.mxu0 0.0
      %5330 = vmatpush1.msra.mxu0 %v5279
      %5331 = vmatprep.subr.mxu0 0.0
      %5332 = vmatpush1.msra.mxu0 %v5277
      %5333 = vmatprep.subr.mxu0 0.0
      %5334 = vmatpush1.msra.mxu0 %v5275
      %5335 = vmatprep.subr.mxu0 0.0
      %5336 = vmatpush1.msra.mxu0 %v5273
      %5337 = vmatprep.subr.mxu0 0.0
      %5338 = vmatpush1.msra.mxu0 %v5271
      %5339 = vmatprep.subr.mxu0 0.0
      %5340 = vmatpush1.msra.mxu0 %v5269
      %5341 = vmatprep.subr.mxu0 0.0
      %5342 = vmatpush1.msra.mxu0 %v5267
      %5343 = vmatprep.subr.mxu0 0.0
      %5344 = vmatpush1.msra.mxu0 %v5265
      %5345 = vmatprep.subr.mxu0 0.0
      %5346 = vmatpush1.msra.mxu0 %v5263
      %5347 = vmatprep.subr.mxu0 0.0
      %5348 = vmatpush1.msra.mxu0 %v5261
      %5349 = vmatprep.subr.mxu0 0.0
      %5350 = vmatpush1.msra.mxu0 %v5259
      %5351 = vmatprep.subr.mxu0 0.0
      %5352 = vmatpush1.msra.mxu0 %v5257
      %5353 = vmatprep.subr.mxu0 0.0
      %5354 = vmatpush1.msra.mxu0 %v5255
      %5355 = vmatprep.subr.mxu0 0.0
      %5356 = vmatpush1.msra.mxu0 %v5253
      %5357 = vmatprep.subr.mxu0 0.0
      %5358 = vmatpush1.msra.mxu0 %v5251
      %5359 = vmatprep.subr.mxu0 0.0
      %5360 = vmatpush1.msra.mxu0 %v5249
      %5361 = vmatprep.subr.mxu0 0.0
      %5362 = vmatpush2.msra.mxu0 0.0
      %5363 = vmatprep.subr.mxu0 0.0
      %5364 = vmatpush2.msra.mxu0 0.0
      %5365 = vmatprep.subr.mxu0 0.0
      %5366 = vmatpush2.msra.mxu0 0.0
      %5367 = vmatprep.subr.mxu0 0.0
      %5368 = vmatpush2.msra.mxu0 0.0
      %5369 = vmatprep.subr.mxu0 0.0
      %5370 = vmatpush2.msra.mxu0 0.0
      %5371 = vmatprep.subr.mxu0 0.0
      %5372 = vmatpush2.msra.mxu0 0.0
      %5373 = vmatprep.subr.mxu0 0.0
      %5374 = vmatpush2.msra.mxu0 0.0
      %5375 = vmatprep.subr.mxu0 0.0
      %5376 = vmatpush2.msra.mxu0 0.0
      %5377 = vmatprep.subr.mxu0 0.0
      %5378 = vmatpush2.msra.mxu0 0.0
      %5379 = vmatprep.subr.mxu0 0.0
      %5380 = vmatpush2.msra.mxu0 0.0
      %5381 = vmatprep.subr.mxu0 0.0
      %5382 = vmatpush2.msra.mxu0 0.0
      %5383 = vmatprep.subr.mxu0 0.0
      %5384 = vmatpush2.msra.mxu0 0.0
      %5385 = vmatprep.subr.mxu0 0.0
      %5386 = vmatpush2.msra.mxu0 0.0
      %5387 = vmatprep.subr.mxu0 0.0
      %5388 = vmatpush2.msra.mxu0 0.0
      %5389 = vmatprep.subr.mxu0 0.0
      %5390 = vmatpush2.msra.mxu0 0.0
      %5391 = vmatprep.subr.mxu0 0.0
      %5392 = vmatpush2.msra.mxu0 %v5281
      %5393 = vmatprep.mubr.f32.mxu0 %v5300
      %5394 = vmatmul.mubr.f32.gmra.mxu0 %v5219
      %v5395 = vpop.f32.mrf.mxu0
      %v5396 = vadd.f32 0.0, %v5395
      %v5397 = vpop.f32.mrf.mxu0
      %5398 = vmatprep.mubr.f32.mxu0 %v5303
      %5399 = vmatmul.mubr.f32.gmra.mxu0 %v5222
      %v5400 = vpop.f32.mrf.mxu0
      %v5401 = vadd.f32 0.0, %v5400
      %v5402 = vpop.f32.mrf.mxu0
      %5403 = vmatprep.mubr.f32.mxu0 %v5306
      %5404 = vmatmul.mubr.f32.gmra.mxu0 %v5225
      %v5405 = vpop.f32.mrf.mxu0
      %v5406 = vadd.f32 0.0, %v5405
      %v5407 = vpop.f32.mrf.mxu0
      %5408 = vmatprep.mubr.f32.mxu0 %v5309
      %5409 = vmatmul.mubr.f32.gmra.mxu0 %v5228
      %v5410 = vpop.f32.mrf.mxu0
      %v5411 = vadd.f32 0.0, %v5410
      %v5412 = vpop.f32.mrf.mxu0
      %5413 = vmatprep.mubr.f32.mxu0 %v5312
      %5414 = vmatmul.mubr.f32.gmra.mxu0 %v5231
      %v5415 = vpop.f32.mrf.mxu0
      %v5416 = vadd.f32 0.0, %v5415
      %v5417 = vpop.f32.mrf.mxu0
      %5418 = vmatprep.mubr.f32.mxu0 %v5315
      %5419 = vmatmul.mubr.f32.gmra.mxu0 %v5234
      %v5420 = vpop.f32.mrf.mxu0
      %v5421 = vadd.f32 0.0, %v5420
      %v5422 = vpop.f32.mrf.mxu0
      %5423 = vmatprep.mubr.f32.mxu0 %v5318
      %5424 = vmatmul.mubr.f32.gmra.mxu0 %v5237
      %v5425 = vpop.f32.mrf.mxu0
      %v5426 = vadd.f32 0.0, %v5425
      %v5427 = vpop.f32.mrf.mxu0
      %5428 = vmatprep.mubr.f32.mxu0 %v5321
      %5429 = vmatmul.mubr.f32.gmra.mxu0 %v5240
      %v5430 = vpop.f32.mrf.mxu0
      %v5431 = vadd.f32 0.0, %v5430
      %v5432 = vpop.f32.mrf.mxu0
      %5433 = vmatprep.mubr.f32.mxu0 %v5324
      %5434 = vmatmul.mubr.f32.gmra.mxu0 %v5243
      %v5435 = vpop.f32.mrf.mxu0
      %v5436 = vadd.f32 0.0, %v5435
      %v5437 = vpop.f32.mrf.mxu0
      %5438 = vmatprep.mubr.f32.mxu0 %v5327
      %5439 = vmatmul.mubr.f32.gmra.mxu0 %v5246
      %v5440 = vpop.f32.mrf.mxu0
      %v5441 = vadd.f32 0.0, %v5440
      %v5442 = vpop.f32.mrf.mxu0
      %5443 = vdwg.mxu0
      %5444 = vrot.lane.b32.xlu0 %v484, 72
      %v5445 = vpop.permute.xlu0 %5444
      %5446 = vrot.lane.b32.xlu0 %v489, 72
      %v5447 = vpop.permute.xlu0 %5446
      %5448 = vrot.lane.b32.xlu0 %v494, 72
      %v5449 = vpop.permute.xlu0 %5448
      %5450 = vrot.lane.b32.xlu0 %v499, 72
      %v5451 = vpop.permute.xlu0 %5450
      %5452 = vrot.lane.b32.xlu0 %v504, 72
      %v5453 = vpop.permute.xlu0 %5452
      %5454 = vrot.lane.b32.xlu0 %v509, 72
      %v5455 = vpop.permute.xlu0 %5454
      %5456 = vrot.lane.b32.xlu0 %v514, 72
      %v5457 = vpop.permute.xlu0 %5456
      %5458 = vrot.lane.b32.xlu0 %v519, 72
      %v5459 = vpop.permute.xlu0 %5458
      %5460 = vrot.lane.b32.xlu0 %v524, 72
      %v5461 = vpop.permute.xlu0 %5460
      %5462 = vrot.lane.b32.xlu0 %v529, 72
      %v5463 = vpop.permute.xlu0 %5462
      %5464 = vrot.lane.b32.xlu0 %v661, 40
      %v5465 = vpop.permute.xlu0 %5464
      %5466 = vrot.lane.b32.xlu0 %v666, 40
      %v5467 = vpop.permute.xlu0 %5466
      %5468 = vrot.lane.b32.xlu0 %v671, 40
      %v5469 = vpop.permute.xlu0 %5468
      %5470 = vrot.lane.b32.xlu0 %v676, 40
      %v5471 = vpop.permute.xlu0 %5470
      %5472 = vrot.lane.b32.xlu0 %v681, 40
      %v5473 = vpop.permute.xlu0 %5472
      %5474 = vrot.lane.b32.xlu0 %v686, 40
      %v5475 = vpop.permute.xlu0 %5474
      %5476 = vrot.lane.b32.xlu0 %v691, 40
      %v5477 = vpop.permute.xlu0 %5476
      %5478 = vrot.lane.b32.xlu0 %v696, 40
      %v5479 = vpop.permute.xlu0 %5478
      %5480 = vrot.lane.b32.xlu0 %v701, 40
      %v5481 = vpop.permute.xlu0 %5480
      %5482 = vrot.lane.b32.xlu0 %v706, 40
      %v5483 = vpop.permute.xlu0 %5482
      %5484 = vrot.lane.b32.xlu0 %v711, 40
      %v5485 = vpop.permute.xlu0 %5484
      %5486 = vrot.lane.b32.xlu0 %v716, 40
      %v5487 = vpop.permute.xlu0 %5486
      %5488 = vrot.lane.b32.xlu0 %v721, 40
      %v5489 = vpop.permute.xlu0 %5488
      %5490 = vrot.lane.b32.xlu0 %v726, 40
      %v5491 = vpop.permute.xlu0 %5490
      %5492 = vrot.lane.b32.xlu0 %v731, 40
      %v5493 = vpop.permute.xlu0 %5492
      %5494 = vrot.lane.b32.xlu0 %v736, 40
      %v5495 = vpop.permute.xlu0 %5494
      %5496 = vrot.lane.b32.xlu0 %v741, 40
      %v5497 = vpop.permute.xlu0 %5496
      %v5498 = vsel %vm744, %v5445, 0
      %v5500 = vsel %vm744, %v5447, 0
      %v5502 = vsel %vm744, %v5449, 0
      %v5504 = vsel %vm744, %v5451, 0
      %v5506 = vsel %vm744, %v5453, 0
      %v5508 = vsel %vm744, %v5455, 0
      %v5510 = vsel %vm744, %v5457, 0
      %v5512 = vsel %vm744, %v5459, 0
      %v5514 = vsel %vm744, %v5461, 0
      %v5516 = vsel %vm744, %v5463, 0
      %v5518 = vsel %vm744, %v5465, 0
      %v5520 = vsel %vm744, %v5467, 0
      %v5522 = vsel %vm744, %v5469, 0
      %v5524 = vsel %vm744, %v5471, 0
      %v5526 = vsel %vm744, %v5473, 0
      %v5528 = vsel %vm744, %v5475, 0
      %v5530 = vsel %vm744, %v5477, 0
      %v5532 = vsel %vm744, %v5479, 0
      %v5534 = vsel %vm744, %v5481, 0
      %v5536 = vsel %vm744, %v5483, 0
      %v5538 = vsel %vm744, %v5485, 0
      %v5540 = vsel %vm744, %v5487, 0
      %v5542 = vsel %vm744, %v5489, 0
      %v5544 = vsel %vm744, %v5491, 0
      %v5546 = vsel %vm744, %v5493, 0
      %v5548 = vsel %vm744, %v5495, 0
      %v5550 = vsel %vm744, %v5497, 0
      %5552 = vmatprep.subr.mxu0 0.0
      %5553 = vmatpush1.xpose.msra.mxu0 %v5548
      %5554 = vmatprep.subr.mxu0 0.0
      %5555 = vmatpush1.xpose.msra.mxu0 %v5546
      %5556 = vmatprep.subr.mxu0 0.0
      %5557 = vmatpush1.xpose.msra.mxu0 %v5544
      %5558 = vmatprep.subr.mxu0 0.0
      %5559 = vmatpush1.xpose.msra.mxu0 %v5542
      %5560 = vmatprep.subr.mxu0 0.0
      %5561 = vmatpush1.xpose.msra.mxu0 %v5540
      %5562 = vmatprep.subr.mxu0 0.0
      %5563 = vmatpush1.xpose.msra.mxu0 %v5538
      %5564 = vmatprep.subr.mxu0 0.0
      %5565 = vmatpush1.xpose.msra.mxu0 %v5536
      %5566 = vmatprep.subr.mxu0 0.0
      %5567 = vmatpush1.xpose.msra.mxu0 %v5534
      %5568 = vmatprep.subr.mxu0 0.0
      %5569 = vmatpush1.xpose.msra.mxu0 %v5532
      %5570 = vmatprep.subr.mxu0 0.0
      %5571 = vmatpush1.xpose.msra.mxu0 %v5530
      %5572 = vmatprep.subr.mxu0 0.0
      %5573 = vmatpush1.xpose.msra.mxu0 %v5528
      %5574 = vmatprep.subr.mxu0 0.0
      %5575 = vmatpush1.xpose.msra.mxu0 %v5526
      %5576 = vmatprep.subr.mxu0 0.0
      %5577 = vmatpush1.xpose.msra.mxu0 %v5524
      %5578 = vmatprep.subr.mxu0 0.0
      %5579 = vmatpush1.xpose.msra.mxu0 %v5522
      %5580 = vmatprep.subr.mxu0 0.0
      %5581 = vmatpush1.xpose.msra.mxu0 %v5520
      %5582 = vmatprep.subr.mxu0 0.0
      %5583 = vmatpush1.xpose.msra.mxu0 %v5518
      %5584 = vmatprep.subr.mxu0 0.0
      %5585 = vmatpush2.xpose.msra.mxu0 0.0
      %5586 = vmatprep.subr.mxu0 0.0
      %5587 = vmatpush2.xpose.msra.mxu0 0.0
      %5588 = vmatprep.subr.mxu0 0.0
      %5589 = vmatpush2.xpose.msra.mxu0 0.0
      %5590 = vmatprep.subr.mxu0 0.0
      %5591 = vmatpush2.xpose.msra.mxu0 0.0
      %5592 = vmatprep.subr.mxu0 0.0
      %5593 = vmatpush2.xpose.msra.mxu0 0.0
      %5594 = vmatprep.subr.mxu0 0.0
      %5595 = vmatpush2.xpose.msra.mxu0 0.0
      %5596 = vmatprep.subr.mxu0 0.0
      %5597 = vmatpush2.xpose.msra.mxu0 0.0
      %5598 = vmatprep.subr.mxu0 0.0
      %5599 = vmatpush2.xpose.msra.mxu0 0.0
      %5600 = vmatprep.subr.mxu0 0.0
      %5601 = vmatpush2.xpose.msra.mxu0 0.0
      %5602 = vmatprep.subr.mxu0 0.0
      %5603 = vmatpush2.xpose.msra.mxu0 0.0
      %5604 = vmatprep.subr.mxu0 0.0
      %5605 = vmatpush2.xpose.msra.mxu0 0.0
      %5606 = vmatprep.subr.mxu0 0.0
      %5607 = vmatpush2.xpose.msra.mxu0 0.0
      %5608 = vmatprep.subr.mxu0 0.0
      %5609 = vmatpush2.xpose.msra.mxu0 0.0
      %5610 = vmatprep.subr.mxu0 0.0
      %5611 = vmatpush2.xpose.msra.mxu0 0.0
      %5612 = vmatprep.subr.mxu0 0.0
      %5613 = vmatpush2.xpose.msra.mxu0 0.0
      %5614 = vmatprep.subr.mxu0 0.0
      %5615 = vmatpush2.xpose.msra.mxu0 %v5550
      %5616 = vmatprep.mubr.f32.mxu0 0.0
      %5617 = vmatmul.mubr.f32.gmra.mxu0 %v5498
      %v5618 = vpop.f32.mrf.mxu0
      %v5619 = vadd.f32 0.0, %v5618
      %v5620 = vpop.f32.mrf.mxu0
      %v5621 = vadd.f32 0.0, %v5620
      %5622 = vmatprep.mubr.f32.mxu0 0.0
      %5623 = vmatmul.mubr.f32.gmra.mxu0 %v5500
      %v5624 = vpop.f32.mrf.mxu0
      %v5625 = vadd.f32 0.0, %v5624
      %v5626 = vpop.f32.mrf.mxu0
      %v5627 = vadd.f32 0.0, %v5626
      %5628 = vmatprep.mubr.f32.mxu0 0.0
      %5629 = vmatmul.mubr.f32.gmra.mxu0 %v5502
      %v5630 = vpop.f32.mrf.mxu0
      %v5631 = vadd.f32 0.0, %v5630
      %v5632 = vpop.f32.mrf.mxu0
      %v5633 = vadd.f32 0.0, %v5632
      %5634 = vmatprep.mubr.f32.mxu0 0.0
      %5635 = vmatmul.mubr.f32.gmra.mxu0 %v5504
      %v5636 = vpop.f32.mrf.mxu0
      %v5637 = vadd.f32 0.0, %v5636
      %v5638 = vpop.f32.mrf.mxu0
      %v5639 = vadd.f32 0.0, %v5638
      %5640 = vmatprep.mubr.f32.mxu0 0.0
      %5641 = vmatmul.mubr.f32.gmra.mxu0 %v5506
      %v5642 = vpop.f32.mrf.mxu0
      %v5643 = vadd.f32 0.0, %v5642
      %v5644 = vpop.f32.mrf.mxu0
      %v5645 = vadd.f32 0.0, %v5644
      %5646 = vmatprep.mubr.f32.mxu0 0.0
      %5647 = vmatmul.mubr.f32.gmra.mxu0 %v5508
      %v5648 = vpop.f32.mrf.mxu0
      %v5649 = vadd.f32 0.0, %v5648
      %v5650 = vpop.f32.mrf.mxu0
      %v5651 = vadd.f32 0.0, %v5650
      %5652 = vmatprep.mubr.f32.mxu0 0.0
      %5653 = vmatmul.mubr.f32.gmra.mxu0 %v5510
      %v5654 = vpop.f32.mrf.mxu0
      %v5655 = vadd.f32 0.0, %v5654
      %v5656 = vpop.f32.mrf.mxu0
      %v5657 = vadd.f32 0.0, %v5656
      %5658 = vmatprep.mubr.f32.mxu0 0.0
      %5659 = vmatmul.mubr.f32.gmra.mxu0 %v5512
      %v5660 = vpop.f32.mrf.mxu0
      %v5661 = vadd.f32 0.0, %v5660
      %v5662 = vpop.f32.mrf.mxu0
      %v5663 = vadd.f32 0.0, %v5662
      %5664 = vmatprep.mubr.f32.mxu0 0.0
      %5665 = vmatmul.mubr.f32.gmra.mxu0 %v5514
      %v5666 = vpop.f32.mrf.mxu0
      %v5667 = vadd.f32 0.0, %v5666
      %v5668 = vpop.f32.mrf.mxu0
      %v5669 = vadd.f32 0.0, %v5668
      %5670 = vmatprep.mubr.f32.mxu0 0.0
      %5671 = vmatmul.mubr.f32.gmra.mxu0 %v5516
      %v5672 = vpop.f32.mrf.mxu0
      %v5673 = vadd.f32 0.0, %v5672
      %v5674 = vpop.f32.mrf.mxu0
      %v5675 = vadd.f32 0.0, %v5674
      %5676 = vdwg.mxu0
      %v5677 = vmul.f32 %v5619, 0.35355338
      %v5678 = vmul.f32 %v5621, 0.35355338
      %v5679 = vmul.f32 %v5625, 0.35355338
      %v5680 = vmul.f32 %v5627, 0.35355338
      %v5681 = vmul.f32 %v5631, 0.35355338
      %v5682 = vmul.f32 %v5633, 0.35355338
      %v5683 = vmul.f32 %v5637, 0.35355338
      %v5684 = vmul.f32 %v5639, 0.35355338
      %v5685 = vmul.f32 %v5643, 0.35355338
      %v5686 = vmul.f32 %v5645, 0.35355338
      %v5687 = vmul.f32 %v5649, 0.35355338
      %v5688 = vmul.f32 %v5651, 0.35355338
      %v5689 = vmul.f32 %v5655, 0.35355338
      %v5690 = vmul.f32 %v5657, 0.35355338
      %v5691 = vmul.f32 %v5661, 0.35355338
      %v5692 = vmul.f32 %v5663, 0.35355338
      %v5693 = vmul.f32 %v5667, 0.35355338
      %v5694 = vmul.f32 %v5669, 0.35355338
      %v5695 = vmul.f32 %v5673, 0.35355338
      %v5696 = vmul.f32 %v5675, 0.35355338
      %v5697 = vsel %vm980, -1e+09, %v5677
      %v5698 = vsel %vm981, -1e+09, %v5678
      %v5699 = vsel %vm980, -1e+09, %v5679
      %v5700 = vsel %vm981, -1e+09, %v5680
      %v5701 = vsel %vm980, -1e+09, %v5681
      %v5702 = vsel %vm981, -1e+09, %v5682
      %v5703 = vsel %vm980, -1e+09, %v5683
      %v5704 = vsel %vm981, -1e+09, %v5684
      %v5705 = vsel %vm980, -1e+09, %v5685
      %v5706 = vsel %vm981, -1e+09, %v5686
      %v5707 = vsel %vm980, -1e+09, %v5687
      %v5708 = vsel %vm981, -1e+09, %v5688
      %v5709 = vsel %vm980, -1e+09, %v5689
      %v5710 = vsel %vm981, -1e+09, %v5690
      %v5711 = vsel %vm980, -1e+09, %v5691
      %v5712 = vsel %vm981, -1e+09, %v5692
      %v5713 = vsel %vm980, -1e+09, %v5693
      %v5714 = vsel %vm981, -1e+09, %v5694
      %v5715 = vsel %vm980, -1e+09, %v5695
      %v5716 = vsel %vm981, -1e+09, %v5696
      %v5717 = vsel %vm744, %v5698, -inf
      %v5718 = vmax.f32 %v5697, %v5717
      %5719 = vmax.xlane.f32.xlu0 %v5718
      %v5720 = vpop.xlane.xlu0 %5719
      %v5721 = vsel %vm744, %v5700, -inf
      %v5722 = vmax.f32 %v5699, %v5721
      %5723 = vmax.xlane.f32.xlu0 %v5722
      %v5724 = vpop.xlane.xlu0 %5723
      %v5725 = vsel %vm744, %v5702, -inf
      %v5726 = vmax.f32 %v5701, %v5725
      %5727 = vmax.xlane.f32.xlu0 %v5726
      %v5728 = vpop.xlane.xlu0 %5727
      %v5729 = vsel %vm744, %v5704, -inf
      %v5730 = vmax.f32 %v5703, %v5729
      %5731 = vmax.xlane.f32.xlu0 %v5730
      %v5732 = vpop.xlane.xlu0 %5731
      %v5733 = vsel %vm744, %v5706, -inf
      %v5734 = vmax.f32 %v5705, %v5733
      %5735 = vmax.xlane.f32.xlu0 %v5734
      %v5736 = vpop.xlane.xlu0 %5735
      %v5737 = vsel %vm744, %v5708, -inf
      %v5738 = vmax.f32 %v5707, %v5737
      %5739 = vmax.xlane.f32.xlu0 %v5738
      %v5740 = vpop.xlane.xlu0 %5739
      %v5741 = vsel %vm744, %v5710, -inf
      %v5742 = vmax.f32 %v5709, %v5741
      %5743 = vmax.xlane.f32.xlu0 %v5742
      %v5744 = vpop.xlane.xlu0 %5743
      %v5745 = vsel %vm744, %v5712, -inf
      %v5746 = vmax.f32 %v5711, %v5745
      %5747 = vmax.xlane.f32.xlu0 %v5746
      %v5748 = vpop.xlane.xlu0 %5747
      %v5749 = vsel %vm744, %v5714, -inf
      %v5750 = vmax.f32 %v5713, %v5749
      %5751 = vmax.xlane.f32.xlu0 %v5750
      %v5752 = vpop.xlane.xlu0 %5751
      %v5753 = vsel %vm744, %v5716, -inf
      %v5754 = vmax.f32 %v5715, %v5753
      %5755 = vmax.xlane.f32.xlu0 %v5754
      %v5756 = vpop.xlane.xlu0 %5755
      %v5757 = vsub.f32 %v5697, %v5720
      %v5758 = vsub.f32 %v5698, %v5720
      %v5759 = vsub.f32 %v5699, %v5724
      %v5760 = vsub.f32 %v5700, %v5724
      %v5761 = vsub.f32 %v5701, %v5728
      %v5762 = vsub.f32 %v5702, %v5728
      %v5763 = vsub.f32 %v5703, %v5732
      %v5764 = vsub.f32 %v5704, %v5732
      %v5765 = vsub.f32 %v5705, %v5736
      %v5766 = vsub.f32 %v5706, %v5736
      %v5767 = vsub.f32 %v5707, %v5740
      %v5768 = vsub.f32 %v5708, %v5740
      %v5769 = vsub.f32 %v5709, %v5744
      %v5770 = vsub.f32 %v5710, %v5744
      %v5771 = vsub.f32 %v5711, %v5748
      %v5772 = vsub.f32 %v5712, %v5748
      %v5773 = vsub.f32 %v5713, %v5752
      %v5774 = vsub.f32 %v5714, %v5752
      %v5775 = vsub.f32 %v5715, %v5756
      %v5776 = vsub.f32 %v5716, %v5756
      %v5777 = vmul.f32 %v5757, 1.442695
      %v5778 = vpow.pop %v5777
      %v5779 = vmul.f32 %v5758, 1.442695
      %v5780 = vpow.pop %v5779
      %v5781 = vmul.f32 %v5759, 1.442695
      %v5782 = vpow.pop %v5781
      %v5783 = vmul.f32 %v5760, 1.442695
      %v5784 = vpow.pop %v5783
      %v5785 = vmul.f32 %v5761, 1.442695
      %v5786 = vpow.pop %v5785
      %v5787 = vmul.f32 %v5762, 1.442695
      %v5788 = vpow.pop %v5787
      %v5789 = vmul.f32 %v5763, 1.442695
      %v5790 = vpow.pop %v5789
      %v5791 = vmul.f32 %v5764, 1.442695
      %v5792 = vpow.pop %v5791
      %v5793 = vmul.f32 %v5765, 1.442695
      %v5794 = vpow.pop %v5793
      %v5795 = vmul.f32 %v5766, 1.442695
      %v5796 = vpow.pop %v5795
      %v5797 = vmul.f32 %v5767, 1.442695
      %v5798 = vpow.pop %v5797
      %v5799 = vmul.f32 %v5768, 1.442695
      %v5800 = vpow.pop %v5799
      %v5801 = vmul.f32 %v5769, 1.442695
      %v5802 = vpow.pop %v5801
      %v5803 = vmul.f32 %v5770, 1.442695
      %v5804 = vpow.pop %v5803
      %v5805 = vmul.f32 %v5771, 1.442695
      %v5806 = vpow.pop %v5805
      %v5807 = vmul.f32 %v5772, 1.442695
      %v5808 = vpow.pop %v5807
      %v5809 = vmul.f32 %v5773, 1.442695
      %v5810 = vpow.pop %v5809
      %v5811 = vmul.f32 %v5774, 1.442695
      %v5812 = vpow.pop %v5811
      %v5813 = vmul.f32 %v5775, 1.442695
      %v5814 = vpow.pop %v5813
      %v5815 = vmul.f32 %v5776, 1.442695
      %v5816 = vpow.pop %v5815
      %v5817 = vsel %vm744, %v5780, 0.0
      %v5818 = vadd.f32 %v5778, %v5817
      %5819 = vadd.xlane.f32.xlu0 %v5818
      %v5820 = vpop.xlane.xlu0 %5819
      %v5821 = vsel %vm744, %v5784, 0.0
      %v5822 = vadd.f32 %v5782, %v5821
      %5823 = vadd.xlane.f32.xlu0 %v5822
      %v5824 = vpop.xlane.xlu0 %5823
      %v5825 = vsel %vm744, %v5788, 0.0
      %v5826 = vadd.f32 %v5786, %v5825
      %5827 = vadd.xlane.f32.xlu0 %v5826
      %v5828 = vpop.xlane.xlu0 %5827
      %v5829 = vsel %vm744, %v5792, 0.0
      %v5830 = vadd.f32 %v5790, %v5829
      %5831 = vadd.xlane.f32.xlu0 %v5830
      %v5832 = vpop.xlane.xlu0 %5831
      %v5833 = vsel %vm744, %v5796, 0.0
      %v5834 = vadd.f32 %v5794, %v5833
      %5835 = vadd.xlane.f32.xlu0 %v5834
      %v5836 = vpop.xlane.xlu0 %5835
      %v5837 = vsel %vm744, %v5800, 0.0
      %v5838 = vadd.f32 %v5798, %v5837
      %5839 = vadd.xlane.f32.xlu0 %v5838
      %v5840 = vpop.xlane.xlu0 %5839
      %v5841 = vsel %vm744, %v5804, 0.0
      %v5842 = vadd.f32 %v5802, %v5841
      %5843 = vadd.xlane.f32.xlu0 %v5842
      %v5844 = vpop.xlane.xlu0 %5843
      %v5845 = vsel %vm744, %v5808, 0.0
      %v5846 = vadd.f32 %v5806, %v5845
      %5847 = vadd.xlane.f32.xlu0 %v5846
      %v5848 = vpop.xlane.xlu0 %5847
      %v5849 = vsel %vm744, %v5812, 0.0
      %v5850 = vadd.f32 %v5810, %v5849
      %5851 = vadd.xlane.f32.xlu0 %v5850
      %v5852 = vpop.xlane.xlu0 %5851
      %v5853 = vsel %vm744, %v5816, 0.0
      %v5854 = vadd.f32 %v5814, %v5853
      %5855 = vadd.xlane.f32.xlu0 %v5854
      %v5856 = vpop.xlane.xlu0 %5855
      %v5857 = vrcp.pop %v5820
      %v5858 = vmul.f32 %v5778, %v5857
      %v5859 = vmul.f32 %v5780, %v5857
      %v5860 = vrcp.pop %v5824
      %v5861 = vmul.f32 %v5782, %v5860
      %v5862 = vmul.f32 %v5784, %v5860
      %v5863 = vrcp.pop %v5828
      %v5864 = vmul.f32 %v5786, %v5863
      %v5865 = vmul.f32 %v5788, %v5863
      %v5866 = vrcp.pop %v5832
      %v5867 = vmul.f32 %v5790, %v5866
      %v5868 = vmul.f32 %v5792, %v5866
      %v5869 = vrcp.pop %v5836
      %v5870 = vmul.f32 %v5794, %v5869
      %v5871 = vmul.f32 %v5796, %v5869
      %v5872 = vrcp.pop %v5840
      %v5873 = vmul.f32 %v5798, %v5872
      %v5874 = vmul.f32 %v5800, %v5872
      %v5875 = vrcp.pop %v5844
      %v5876 = vmul.f32 %v5802, %v5875
      %v5877 = vmul.f32 %v5804, %v5875
      %v5878 = vrcp.pop %v5848
      %v5879 = vmul.f32 %v5806, %v5878
      %v5880 = vmul.f32 %v5808, %v5878
      %v5881 = vrcp.pop %v5852
      %v5882 = vmul.f32 %v5810, %v5881
      %v5883 = vmul.f32 %v5812, %v5881
      %v5884 = vrcp.pop %v5856
      %v5885 = vmul.f32 %v5814, %v5884
      %v5886 = vmul.f32 %v5816, %v5884
      %5887 = vrot.lane.b32.xlu0 %v661, 8
      %v5888 = vpop.permute.xlu0 %5887
      %5889 = vrot.lane.b32.xlu0 %v666, 8
      %v5890 = vpop.permute.xlu0 %5889
      %5891 = vrot.lane.b32.xlu0 %v671, 8
      %v5892 = vpop.permute.xlu0 %5891
      %5893 = vrot.lane.b32.xlu0 %v676, 8
      %v5894 = vpop.permute.xlu0 %5893
      %5895 = vrot.lane.b32.xlu0 %v681, 8
      %v5896 = vpop.permute.xlu0 %5895
      %5897 = vrot.lane.b32.xlu0 %v686, 8
      %v5898 = vpop.permute.xlu0 %5897
      %5899 = vrot.lane.b32.xlu0 %v691, 8
      %v5900 = vpop.permute.xlu0 %5899
      %5901 = vrot.lane.b32.xlu0 %v696, 8
      %v5902 = vpop.permute.xlu0 %5901
      %5903 = vrot.lane.b32.xlu0 %v701, 8
      %v5904 = vpop.permute.xlu0 %5903
      %5905 = vrot.lane.b32.xlu0 %v706, 8
      %v5906 = vpop.permute.xlu0 %5905
      %5907 = vrot.lane.b32.xlu0 %v711, 8
      %v5908 = vpop.permute.xlu0 %5907
      %5909 = vrot.lane.b32.xlu0 %v716, 8
      %v5910 = vpop.permute.xlu0 %5909
      %5911 = vrot.lane.b32.xlu0 %v721, 8
      %v5912 = vpop.permute.xlu0 %5911
      %5913 = vrot.lane.b32.xlu0 %v726, 8
      %v5914 = vpop.permute.xlu0 %5913
      %5915 = vrot.lane.b32.xlu0 %v731, 8
      %v5916 = vpop.permute.xlu0 %5915
      %5917 = vrot.lane.b32.xlu0 %v736, 8
      %v5918 = vpop.permute.xlu0 %5917
      %5919 = vrot.lane.b32.xlu0 %v741, 8
      %v5920 = vpop.permute.xlu0 %5919
      %v5939 = vsel %vm744, %v5859, 0
      %v5942 = vsel %vm744, %v5862, 0
      %v5945 = vsel %vm744, %v5865, 0
      %v5948 = vsel %vm744, %v5868, 0
      %v5951 = vsel %vm744, %v5871, 0
      %v5954 = vsel %vm744, %v5874, 0
      %v5957 = vsel %vm744, %v5877, 0
      %v5960 = vsel %vm744, %v5880, 0
      %v5963 = vsel %vm744, %v5883, 0
      %v5966 = vsel %vm744, %v5886, 0
      %5968 = vmatprep.subr.mxu0 0.0
      %5969 = vmatpush1.msra.mxu0 %v5918
      %5970 = vmatprep.subr.mxu0 0.0
      %5971 = vmatpush1.msra.mxu0 %v5916
      %5972 = vmatprep.subr.mxu0 0.0
      %5973 = vmatpush1.msra.mxu0 %v5914
      %5974 = vmatprep.subr.mxu0 0.0
      %5975 = vmatpush1.msra.mxu0 %v5912
      %5976 = vmatprep.subr.mxu0 0.0
      %5977 = vmatpush1.msra.mxu0 %v5910
      %5978 = vmatprep.subr.mxu0 0.0
      %5979 = vmatpush1.msra.mxu0 %v5908
      %5980 = vmatprep.subr.mxu0 0.0
      %5981 = vmatpush1.msra.mxu0 %v5906
      %5982 = vmatprep.subr.mxu0 0.0
      %5983 = vmatpush1.msra.mxu0 %v5904
      %5984 = vmatprep.subr.mxu0 0.0
      %5985 = vmatpush1.msra.mxu0 %v5902
      %5986 = vmatprep.subr.mxu0 0.0
      %5987 = vmatpush1.msra.mxu0 %v5900
      %5988 = vmatprep.subr.mxu0 0.0
      %5989 = vmatpush1.msra.mxu0 %v5898
      %5990 = vmatprep.subr.mxu0 0.0
      %5991 = vmatpush1.msra.mxu0 %v5896
      %5992 = vmatprep.subr.mxu0 0.0
      %5993 = vmatpush1.msra.mxu0 %v5894
      %5994 = vmatprep.subr.mxu0 0.0
      %5995 = vmatpush1.msra.mxu0 %v5892
      %5996 = vmatprep.subr.mxu0 0.0
      %5997 = vmatpush1.msra.mxu0 %v5890
      %5998 = vmatprep.subr.mxu0 0.0
      %5999 = vmatpush1.msra.mxu0 %v5888
      %6000 = vmatprep.subr.mxu0 0.0
      %6001 = vmatpush2.msra.mxu0 0.0
      %6002 = vmatprep.subr.mxu0 0.0
      %6003 = vmatpush2.msra.mxu0 0.0
      %6004 = vmatprep.subr.mxu0 0.0
      %6005 = vmatpush2.msra.mxu0 0.0
      %6006 = vmatprep.subr.mxu0 0.0
      %6007 = vmatpush2.msra.mxu0 0.0
      %6008 = vmatprep.subr.mxu0 0.0
      %6009 = vmatpush2.msra.mxu0 0.0
      %6010 = vmatprep.subr.mxu0 0.0
      %6011 = vmatpush2.msra.mxu0 0.0
      %6012 = vmatprep.subr.mxu0 0.0
      %6013 = vmatpush2.msra.mxu0 0.0
      %6014 = vmatprep.subr.mxu0 0.0
      %6015 = vmatpush2.msra.mxu0 0.0
      %6016 = vmatprep.subr.mxu0 0.0
      %6017 = vmatpush2.msra.mxu0 0.0
      %6018 = vmatprep.subr.mxu0 0.0
      %6019 = vmatpush2.msra.mxu0 0.0
      %6020 = vmatprep.subr.mxu0 0.0
      %6021 = vmatpush2.msra.mxu0 0.0
      %6022 = vmatprep.subr.mxu0 0.0
      %6023 = vmatpush2.msra.mxu0 0.0
      %6024 = vmatprep.subr.mxu0 0.0
      %6025 = vmatpush2.msra.mxu0 0.0
      %6026 = vmatprep.subr.mxu0 0.0
      %6027 = vmatpush2.msra.mxu0 0.0
      %6028 = vmatprep.subr.mxu0 0.0
      %6029 = vmatpush2.msra.mxu0 0.0
      %6030 = vmatprep.subr.mxu0 0.0
      %6031 = vmatpush2.msra.mxu0 %v5920
      %6032 = vmatprep.mubr.f32.mxu0 %v5939
      %6033 = vmatmul.mubr.f32.gmra.mxu0 %v5858
      %v6034 = vpop.f32.mrf.mxu0
      %v6035 = vadd.f32 0.0, %v6034
      %v6036 = vpop.f32.mrf.mxu0
      %6037 = vmatprep.mubr.f32.mxu0 %v5942
      %6038 = vmatmul.mubr.f32.gmra.mxu0 %v5861
      %v6039 = vpop.f32.mrf.mxu0
      %v6040 = vadd.f32 0.0, %v6039
      %v6041 = vpop.f32.mrf.mxu0
      %6042 = vmatprep.mubr.f32.mxu0 %v5945
      %6043 = vmatmul.mubr.f32.gmra.mxu0 %v5864
      %v6044 = vpop.f32.mrf.mxu0
      %v6045 = vadd.f32 0.0, %v6044
      %v6046 = vpop.f32.mrf.mxu0
      %6047 = vmatprep.mubr.f32.mxu0 %v5948
      %6048 = vmatmul.mubr.f32.gmra.mxu0 %v5867
      %v6049 = vpop.f32.mrf.mxu0
      %v6050 = vadd.f32 0.0, %v6049
      %v6051 = vpop.f32.mrf.mxu0
      %6052 = vmatprep.mubr.f32.mxu0 %v5951
      %6053 = vmatmul.mubr.f32.gmra.mxu0 %v5870
      %v6054 = vpop.f32.mrf.mxu0
      %v6055 = vadd.f32 0.0, %v6054
      %v6056 = vpop.f32.mrf.mxu0
      %6057 = vmatprep.mubr.f32.mxu0 %v5954
      %6058 = vmatmul.mubr.f32.gmra.mxu0 %v5873
      %v6059 = vpop.f32.mrf.mxu0
      %v6060 = vadd.f32 0.0, %v6059
      %v6061 = vpop.f32.mrf.mxu0
      %6062 = vmatprep.mubr.f32.mxu0 %v5957
      %6063 = vmatmul.mubr.f32.gmra.mxu0 %v5876
      %v6064 = vpop.f32.mrf.mxu0
      %v6065 = vadd.f32 0.0, %v6064
      %v6066 = vpop.f32.mrf.mxu0
      %6067 = vmatprep.mubr.f32.mxu0 %v5960
      %6068 = vmatmul.mubr.f32.gmra.mxu0 %v5879
      %v6069 = vpop.f32.mrf.mxu0
      %v6070 = vadd.f32 0.0, %v6069
      %v6071 = vpop.f32.mrf.mxu0
      %6072 = vmatprep.mubr.f32.mxu0 %v5963
      %6073 = vmatmul.mubr.f32.gmra.mxu0 %v5882
      %v6074 = vpop.f32.mrf.mxu0
      %v6075 = vadd.f32 0.0, %v6074
      %v6076 = vpop.f32.mrf.mxu0
      %6077 = vmatprep.mubr.f32.mxu0 %v5966
      %6078 = vmatmul.mubr.f32.gmra.mxu0 %v5885
      %v6079 = vpop.f32.mrf.mxu0
      %v6080 = vadd.f32 0.0, %v6079
      %v6081 = vpop.f32.mrf.mxu0
      %6082 = vdwg.mxu0
      %6093 = vrot.lane.b32.xlu0 %v4757, 8
      %v6094 = vpop.permute.xlu0 %6093
      %6095 = vrot.lane.b32.xlu0 %v4762, 8
      %v6096 = vpop.permute.xlu0 %6095
      %6097 = vrot.lane.b32.xlu0 %v4767, 8
      %v6098 = vpop.permute.xlu0 %6097
      %6099 = vrot.lane.b32.xlu0 %v4772, 8
      %v6100 = vpop.permute.xlu0 %6099
      %6101 = vrot.lane.b32.xlu0 %v4777, 8
      %v6102 = vpop.permute.xlu0 %6101
      %6103 = vrot.lane.b32.xlu0 %v4782, 8
      %v6104 = vpop.permute.xlu0 %6103
      %6105 = vrot.lane.b32.xlu0 %v4787, 8
      %v6106 = vpop.permute.xlu0 %6105
      %6107 = vrot.lane.b32.xlu0 %v4792, 8
      %v6108 = vpop.permute.xlu0 %6107
      %6109 = vrot.lane.b32.xlu0 %v4797, 8
      %v6110 = vpop.permute.xlu0 %6109
      %6111 = vrot.lane.b32.xlu0 %v4802, 8
      %v6112 = vpop.permute.xlu0 %6111
      %6133 = vrot.lane.b32.xlu0 %v5396, 16
      %v6134 = vpop.permute.xlu0 %6133
      %6135 = vrot.lane.b32.xlu0 %v5401, 16
      %v6136 = vpop.permute.xlu0 %6135
      %6137 = vrot.lane.b32.xlu0 %v5406, 16
      %v6138 = vpop.permute.xlu0 %6137
      %6139 = vrot.lane.b32.xlu0 %v5411, 16
      %v6140 = vpop.permute.xlu0 %6139
      %6141 = vrot.lane.b32.xlu0 %v5416, 16
      %v6142 = vpop.permute.xlu0 %6141
      %6143 = vrot.lane.b32.xlu0 %v5421, 16
      %v6144 = vpop.permute.xlu0 %6143
      %6145 = vrot.lane.b32.xlu0 %v5426, 16
      %v6146 = vpop.permute.xlu0 %6145
      %6147 = vrot.lane.b32.xlu0 %v5431, 16
      %v6148 = vpop.permute.xlu0 %6147
      %6149 = vrot.lane.b32.xlu0 %v5436, 16
      %v6150 = vpop.permute.xlu0 %6149
      %6151 = vrot.lane.b32.xlu0 %v5441, 16
      %v6152 = vpop.permute.xlu0 %6151
      %6173 = vrot.lane.b32.xlu0 %v6035, 24
      %v6174 = vpop.permute.xlu0 %6173
      %6175 = vrot.lane.b32.xlu0 %v6040, 24
      %v6176 = vpop.permute.xlu0 %6175
      %6177 = vrot.lane.b32.xlu0 %v6045, 24
      %v6178 = vpop.permute.xlu0 %6177
      %6179 = vrot.lane.b32.xlu0 %v6050, 24
      %v6180 = vpop.permute.xlu0 %6179
      %6181 = vrot.lane.b32.xlu0 %v6055, 24
      %v6182 = vpop.permute.xlu0 %6181
      %6183 = vrot.lane.b32.xlu0 %v6060, 24
      %v6184 = vpop.permute.xlu0 %6183
      %6185 = vrot.lane.b32.xlu0 %v6065, 24
      %v6186 = vpop.permute.xlu0 %6185
      %6187 = vrot.lane.b32.xlu0 %v6070, 24
      %v6188 = vpop.permute.xlu0 %6187
      %6189 = vrot.lane.b32.xlu0 %v6075, 24
      %v6190 = vpop.permute.xlu0 %6189
      %6191 = vrot.lane.b32.xlu0 %v6080, 24
      %v6192 = vpop.permute.xlu0 %6191
      %v6203 = vsel %vm744, %v4118, %v6094
      %v6204 = vsel %vm744, %v4123, %v6096
      %v6205 = vsel %vm744, %v4128, %v6098
      %v6206 = vsel %vm744, %v4133, %v6100
      %v6207 = vsel %vm744, %v4138, %v6102
      %v6208 = vsel %vm744, %v4143, %v6104
      %v6209 = vsel %vm744, %v4148, %v6106
      %v6210 = vsel %vm744, %v4153, %v6108
      %v6211 = vsel %vm744, %v4158, %v6110
      %v6212 = vsel %vm744, %v4163, %v6112
      %v6213 = vsel %vm3415, %v6203, %v6134
      %v6214 = vsel %vm3415, %v6204, %v6136
      %v6215 = vsel %vm3415, %v6205, %v6138
      %v6216 = vsel %vm3415, %v6206, %v6140
      %v6217 = vsel %vm3415, %v6207, %v6142
      %v6218 = vsel %vm3415, %v6208, %v6144
      %v6219 = vsel %vm3415, %v6209, %v6146
      %v6220 = vsel %vm3415, %v6210, %v6148
      %v6221 = vsel %vm3415, %v6211, %v6150
      %v6222 = vsel %vm3415, %v6212, %v6152
      %v6223 = vsel %vm3426, %v6213, %v6174
      %v6224 = vsel %vm3426, %v6214, %v6176
      %v6225 = vsel %vm3426, %v6215, %v6178
      %v6226 = vsel %vm3426, %v6216, %v6180
      %v6227 = vsel %vm3426, %v6217, %v6182
      %v6228 = vsel %vm3426, %v6218, %v6184
      %v6229 = vsel %vm3426, %v6219, %v6186
      %v6230 = vsel %vm3426, %v6220, %v6188
      %v6231 = vsel %vm3426, %v6221, %v6190
      %v6232 = vsel %vm3426, %v6222, %v6192
      %6233 = vmatprep.subr.mxu0 0.0
      %6234 = vmatpush1.msra.mxu0 0.0
      %6235 = vmatprep.subr.mxu0 0.0
      %6236 = vmatpush1.msra.mxu0 0.0
      %6237 = vmatprep.subr.mxu0 0.0
      %6238 = vmatpush1.msra.mxu0 0.0
      %6239 = vmatprep.subr.mxu0 0.0
      %6240 = vmatpush1.msra.mxu0 0.0
      %6241 = vmatprep.subr.mxu0 0.0
      %6242 = vmatpush1.msra.mxu0 0.0
      %6243 = vmatprep.subr.mxu0 0.0
      %6244 = vmatpush1.msra.mxu0 0.0
      %6245 = vmatprep.subr.mxu0 0.0
      %6246 = vmatpush1.msra.mxu0 %v6232
      %6247 = vmatprep.subr.mxu0 0.0
      %6248 = vmatpush1.msra.mxu0 %v6231
      %6249 = vmatprep.subr.mxu0 0.0
      %6250 = vmatpush1.msra.mxu0 %v6230
      %6251 = vmatprep.subr.mxu0 0.0
      %6252 = vmatpush1.msra.mxu0 %v6229
      %6253 = vmatprep.subr.mxu0 0.0
      %6254 = vmatpush1.msra.mxu0 %v6228
      %6255 = vmatprep.subr.mxu0 0.0
      %6256 = vmatpush1.msra.mxu0 %v6227
      %6257 = vmatprep.subr.mxu0 0.0
      %6258 = vmatpush1.msra.mxu0 %v6226
      %6259 = vmatprep.subr.mxu0 0.0
      %6260 = vmatpush1.msra.mxu0 %v6225
      %6261 = vmatprep.subr.mxu0 0.0
      %6262 = vmatpush1.msra.mxu0 %v6224
      %6263 = vmatprep.subr.mxu0 0.0
      %6264 = vmatpush1.msra.mxu0 %v6223
      %6265 = vmatprep.subr.mxu0 0.0
      %6266 = vmatpush2.msra.mxu0 0.0
      %6267 = vmatprep.subr.mxu0 0.0
      %6268 = vmatpush2.msra.mxu0 0.0
      %6269 = vmatprep.subr.mxu0 0.0
      %6270 = vmatpush2.msra.mxu0 0.0
      %6271 = vmatprep.subr.mxu0 0.0
      %6272 = vmatpush2.msra.mxu0 0.0
      %6273 = vmatprep.subr.mxu0 0.0
      %6274 = vmatpush2.msra.mxu0 0.0
      %6275 = vmatprep.subr.mxu0 0.0
      %6276 = vmatpush2.msra.mxu0 0.0
      %6277 = vmatprep.subr.mxu0 0.0
      %6278 = vmatpush2.msra.mxu0 0.0
      %6279 = vmatprep.subr.mxu0 0.0
      %6280 = vmatpush2.msra.mxu0 0.0
      %6281 = vmatprep.subr.mxu0 0.0
      %6282 = vmatpush2.msra.mxu0 0.0
      %6283 = vmatprep.subr.mxu0 0.0
      %6284 = vmatpush2.msra.mxu0 0.0
      %6285 = vmatprep.subr.mxu0 0.0
      %6286 = vmatpush2.msra.mxu0 0.0
      %6287 = vmatprep.subr.mxu0 0.0
      %6288 = vmatpush2.msra.mxu0 0.0
      %6289 = vmatprep.subr.mxu0 0.0
      %6290 = vmatpush2.msra.mxu0 0.0
      %6291 = vmatprep.subr.mxu0 0.0
      %6292 = vmatpush2.msra.mxu0 0.0
      %6293 = vmatprep.subr.mxu0 0.0
      %6294 = vmatpush2.msra.mxu0 0.0
      %6295 = vmatprep.subr.mxu0 0.0
      %6296 = vmatpush2.msra.mxu0 0.0
      %6297 = vmatprep.mubr.f32.mxu0 0.0
      %6298 = vmatmul.mubr.f32.gmra.mxu0 %v3439
      %v6299 = vpop.f32.mrf.mxu0
      %v6300 = vadd.f32 0.0, %v6299
      %v6301 = vpop.f32.mrf.mxu0
      %6302 = vmatprep.mubr.f32.mxu0 0.0
      %6303 = vmatmul.mubr.f32.gmra.mxu0 %v3442
      %v6304 = vpop.f32.mrf.mxu0
      %v6305 = vadd.f32 0.0, %v6304
      %v6306 = vpop.f32.mrf.mxu0
      %6307 = vmatprep.mubr.f32.mxu0 0.0
      %6308 = vmatmul.mubr.f32.gmra.mxu0 %v3445
      %v6309 = vpop.f32.mrf.mxu0
      %v6310 = vadd.f32 0.0, %v6309
      %v6311 = vpop.f32.mrf.mxu0
      %6312 = vdwg.mxu0
      %6316 = vrot.lane.b32.xlu0 %v6300, 32
      %v6317 = vpop.permute.xlu0 %6316
      %6318 = vrot.lane.b32.xlu0 %v6305, 32
      %v6319 = vpop.permute.xlu0 %6318
      %6320 = vrot.lane.b32.xlu0 %v6310, 32
      %v6321 = vpop.permute.xlu0 %6320
      %v6325 = vsel %vm386, %v3514, %v6317
      %v6326 = vsel %vm386, %v3519, %v6319
      %v6327 = vsel %vm386, %v3524, %v6321
      %vm6328 = vcmask 523264
      %6329 = vst.msk [vmem:[%s342] sm:$0xff] %vm6328, %v6325
      %6330 = vst.msk [vmem:[%s342 + $0x8] sm:$0xff] %vm6328, %v6326
      %vm6331 = vcmask 519168
      %6332 = vst.msk [vmem:[%s342 + $0x10] sm:$0xf] %vm6331, %v6327
      %p6333 = scmp.lt.s32.totalorder %s19, 1
      %s6334 = scalar_select %p6333, %s19, 1
      %s6335 = smul.addr %s6334, 3
      %s6336 = smul.addr %s6335, 8
      %s6337 = scalar_lea.vmem %s8, %s6336
      // Predicated region
      $region53: #{tpu_custom_call.1} parent=51 // pred_check
        %p6338 = pneg %p220
      $region54: #{tpu_custom_call.1} parent=51 // pred_check_branch
        %6340 = sbr.rel (%p6338) target = $region56
      $region55: #{tpu_custom_call.1} parent=51 // pred_region
        _
      $region56: #{tpu_custom_call.1} parent=51 // pred_fallthru
        _
    $region52: #{tpu_custom_call.1} parent=5 // pred_fallthru
      _
    %p6341 = scmp.le.s32.totalorder 2, %s14
    // Predicated region
    $region57: #{tpu_custom_call.1} parent=5 // pred_check
      %p6342 = pneg %p6341
    $region58: #{tpu_custom_call.1} parent=5 // pred_check_branch
      %6344 = sbr.rel (%p6342) target = $region60
    $region59: #{tpu_custom_call.1} parent=5 // pred_region
      %s6345 = ssub.s32 %s14, 2
      // Predicated region
      $region61: #{tpu_custom_call.1} parent=59 // pred_check
        %p6346 = pneg %p226
      $region62: #{tpu_custom_call.1} parent=59 // pred_check_branch
        %6348 = sbr.rel (%p6346) target = $region64
      $region63: #{tpu_custom_call.1} parent=59 // pred_region
        %p6349 = scmp.lt.s32.totalorder %s20, 1
        %s6350 = scalar_select %p6349, %s20, 1
        %s6351 = smul.addr %s6350, 3
        %s6352 = smul.addr %s6351, 8
        %s6353 = scalar_lea.vmem %s8, %s6352
      $region64: #{tpu_custom_call.1} parent=59 // pred_fallthru
        _
    $region60: #{tpu_custom_call.1} parent=5 // pred_fallthru
      _
  $region6: #{tpu_custom_call.1} parent=0 // loop_footer
    %s18 = sadd.s32 1, %s14
  $region7: #{tpu_custom_call.1} parent=0 // loop_footer_branch
    %13 = sbr.rel target = $region3
  $region8: #{tpu_custom_call.1} parent=0 // loop_exit
    _

</llo_original>
